<compile_context>
chip_gen: v7x
topology: tpu7x:2x2x1
jax: 0.10.0
libtpu: 0.0.40
codegen_flags: <defaults>
</compile_context>

<pallas_src>
import jax
import jax.numpy as jnp
from jax.experimental import pallas as pl
from jax.experimental.pallas import tpu as pltpu


# ----------------------------------------------------------------------------
# Pallas kernel: one batch block -> full LSTM recurrence + last-step FC.
# ----------------------------------------------------------------------------
def lstm_kernel(x_ref,       # (T*Bb, E)   bf16, time-major within batch block
                len_ref,     # (Bb, 1)     int32, last valid step per row
                wih_ref,     # (E, 4H)     bf16
                whh_ref,     # (H, 4H)     bf16
                b_ref,       # (1, 4H)     f32   (b_ih + b_hh)
                wfc_ref,     # (H, V)      bf16
                bfc_ref,     # (1, V)      f32
                pred_ref,    # (Bb, V)     f32 output
                xproj_sc):   # (T*Bb, 4H)  f32 scratch
    Bb = len_ref.shape[0]
    TB = x_ref.shape[0]
    T = TB // Bb
    H = whh_ref.shape[0]

    # Hoisted input projection + bias for ALL timesteps of this block:
    # one bf16 MXU call (M = T*Bb), f32 accumulation, parked in VMEM.
    # TODO(synk): for scaled T*B this f32 scratch should be chunked into a
    # double-buffered 32-64-step slab (bf16 storage) to stay inside v7x's
    # 64 MiB VMEM; at these shapes it is 256 KiB.
    xproj_sc[...] = (jnp.dot(x_ref[...], wih_ref[...],
                             preferred_element_type=jnp.float32)
                     + b_ref[...])

    lengths = len_ref[...]                      # (Bb, 1) int32, resident

    h0 = jnp.zeros((Bb, H), jnp.float32)
    c0 = jnp.zeros((Bb, H), jnp.float32)
    last0 = jnp.zeros((Bb, H), jnp.float32)

    def step(t, carry):
        h, c, last = carry
        # Aligned, unmasked slab load of this step's pre-projected inputs.
        row0 = pl.multiple_of(t * Bb, Bb)
        # Only the genuinely recurrent matmul stays on the serial path
        # (bf16 operands, f32 accumulate).
        gates = (xproj_sc[pl.ds(row0, Bb), :]
                 + jnp.dot(h.astype(jnp.bfloat16), whh_ref[...],
                           preferred_element_type=jnp.float32))
        # PyTorch LSTM gate order: i, f, g, o.  Elementwise math kept in f32.
        i_g = jax.nn.sigmoid(gates[:, 0 * H:1 * H])
        f_g = jax.nn.sigmoid(gates[:, 1 * H:2 * H])
        g_g = jnp.tanh(gates[:, 2 * H:3 * H])
        o_g = jax.nn.sigmoid(gates[:, 3 * H:4 * H])
        c_new = f_g * c + i_g * g_g
        h_new = o_g * jnp.tanh(c_new)
        # Keep h at each row's last valid timestep.
        last_new = jnp.where(lengths == t, h_new, last)
        return h_new, c_new, last_new

    # Bounded unroll: keeps the W_hh weight-push hoist / LLO visibility while
    # capping vreg pressure once T grows beyond a few dozen steps.
    _, _, last = jax.lax.fori_loop(0, T, step, (h0, c0, last0),
                                   unroll=min(T, 8))

    # TODO(synk): for a realistic vocab (V ~ 30k) split this FC into its own
    # V-tiled pallas_call with lane-dense (Bb, >=512) output tiles so w_fc
    # does not sit (double-buffered) in VMEM during the recurrence.
    pred_ref[...] = (jnp.dot(last.astype(jnp.bfloat16), wfc_ref[...],
                             preferred_element_type=jnp.float32)
                     + bfc_ref[...]).astype(pred_ref.dtype)


# ----------------------------------------------------------------------------
# Wrapper
# ----------------------------------------------------------------------------
def _choose_batch_block(B):
    # Split into batch halves for v7x's two TensorCores when each half stays
    # sublane-aligned (multiple of 8); otherwise keep a single block.
    if B % 16 == 0:
        return B // 2
    return B


@jax.jit
def lstm_predictor_forward(input_ids, attention_mask, params):
    emb_w = params["emb"]          # (V, E), row 0 zeroed (padding_idx=0)
    w_ih = params["w_ih"]          # (4H, E)
    w_hh = params["w_hh"]          # (4H, H)
    b_ih = params["b_ih"]          # (4H,)
    b_hh = params["b_hh"]          # (4H,)
    w_fc = params["w_fc"]          # (V, H)
    b_fc = params["b_fc"]          # (V,)

    B, T = input_ids.shape
    V, E = emb_w.shape
    H = w_hh.shape[1]
    Bb = _choose_batch_block(B)
    n_blk = B // Bb

    # Glue in XLA: embedding gather, mask multiply (dropout = identity, eval),
    # time-major layout, per-block pre-flattening, bf16 casts for MXU operands.
    embedded = jnp.take(emb_w, input_ids, axis=0).astype(jnp.float32)   # (B,T,E)
    masked = embedded * attention_mask[..., None].astype(jnp.float32)
    x_tm = jnp.transpose(masked, (1, 0, 2))                             # (T,B,E)
    x_blk = (x_tm.reshape(T, n_blk, Bb, E)
                 .transpose(1, 0, 2, 3)
                 .reshape(n_blk, T * Bb, E)
                 .astype(jnp.bfloat16))                                 # (n_blk,T*Bb,E)

    lengths = attention_mask.sum(axis=1).astype(jnp.int32) - 1          # (B,)
    # Empty sequences (mask sum == 0): PyTorch's output[:, -1] wraparound.
    lengths = jnp.where(lengths < 0, T - 1, lengths)
    len_blk = lengths.reshape(n_blk, Bb, 1)

    # Pre-transposed weights; bf16 for MXU operands, biases stay f32.
    w_ih_t = jnp.transpose(w_ih).astype(jnp.bfloat16)                   # (E,4H)
    w_hh_t = jnp.transpose(w_hh).astype(jnp.bfloat16)                   # (H,4H)
    b_all = (b_ih + b_hh).astype(jnp.float32)[None, :]                  # (1,4H)
    w_fc_t = jnp.transpose(w_fc).astype(jnp.bfloat16)                   # (H,V)
    b_fc_row = b_fc.astype(jnp.float32)[None, :]                        # (1,V)

    # NOTE: the grid-invariant weights still get a second (dead) pipeline
    # buffer; at these shapes that is <1.5 MiB so it is left alone.
    # TODO(synk): for scaled H/V reclaim it via pipeline_mode=pl.Buffered(1)
    # on the weight specs or an explicit vmem_limit_bytes.
    grid_spec = pltpu.PrefetchScalarGridSpec(
        num_scalar_prefetch=0,
        grid=(n_blk,),
        in_specs=[
            pl.BlockSpec((None, T * Bb, E), lambda g: (g, 0, 0)),   # x (block)
            pl.BlockSpec((None, Bb, 1), lambda g: (g, 0, 0)),       # lengths
            pl.BlockSpec((E, 4 * H), lambda g: (0, 0)),             # w_ih^T
            pl.BlockSpec((H, 4 * H), lambda g: (0, 0)),             # w_hh^T
            pl.BlockSpec((1, 4 * H), lambda g: (0, 0)),             # b_ih + b_hh
            pl.BlockSpec((H, V), lambda g: (0, 0)),                 # w_fc^T
            pl.BlockSpec((1, V), lambda g: (0, 0)),                 # b_fc
        ],
        out_specs=pl.BlockSpec((Bb, V), lambda g: (g, 0)),
        scratch_shapes=[
            pltpu.VMEM((T * Bb, 4 * H), jnp.float32),   # hoisted x-projection
        ],
    )

    pred = pl.pallas_call(
        lstm_kernel,
        out_shape=jax.ShapeDtypeStruct((B, V), jnp.float32),
        grid_spec=grid_spec,
        compiler_params=pltpu.CompilerParams(
            dimension_semantics=("parallel",)),   # batch blocks -> v7x megacore
    )(x_blk, len_blk, w_ih_t, w_hh_t, b_all, w_fc_t, b_fc_row)
    return pred


# ----------------------------------------------------------------------------
# Pure-JAX reference (mirrors the PyTorch forward, eval mode, f32)
# ----------------------------------------------------------------------------
def reference_forward(input_ids, attention_mask, params):
    emb = jnp.take(params["emb"], input_ids, axis=0)
    emb = emb * attention_mask[..., None].astype(emb.dtype)
    B, T, _ = emb.shape
    H = params["w_hh"].shape[1]

    def step(carry, x_t):
        h, c = carry
        gates = (x_t @ params["w_ih"].T + params["b_ih"]
                 + h @ params["w_hh"].T + params["b_hh"])
        i, f, g, o = jnp.split(gates, 4, axis=-1)
        i = jax.nn.sigmoid(i)
        f = jax.nn.sigmoid(f)
        g = jnp.tanh(g)
        o = jax.nn.sigmoid(o)
        c = f * c + i * g
        h = o * jnp.tanh(c)
        return (h, c), h

    init = (jnp.zeros((B, H), jnp.float32), jnp.zeros((B, H), jnp.float32))
    _, hs = jax.lax.scan(step, init, jnp.transpose(emb, (1, 0, 2)))  # (T,B,H)
    lengths = attention_mask.sum(axis=1).astype(jnp.int32) - 1
    lengths = jnp.where(lengths < 0, T - 1, lengths)
    last = hs[lengths, jnp.arange(B)]
    return last @ params["w_fc"].T + params["b_fc"]


# ----------------------------------------------------------------------------
if __name__ == "__main__":
    # Small shapes consistent with the module defaults (E=128, H=256).
    VOCAB = 256
    EMBED = 128
    HIDDEN = 256
    BATCH = 16      # splits into two sublane-aligned blocks of 8
    SEQ = 8

    key = jax.random.PRNGKey(0)
    k_emb, k_wih, k_whh, k_bih, k_bhh, k_wfc, k_bfc, k_ids, k_len = \
        jax.random.split(key, 9)

    scale = 0.1
    emb_w = scale * jax.random.normal(k_emb, (VOCAB, EMBED), jnp.float32)
    emb_w = emb_w.at[0].set(0.0)   # padding_idx=0 row zeroed (PyTorch init)

    params = {
        "emb": emb_w,
        "w_ih": scale * jax.random.normal(k_wih, (4 * HIDDEN, EMBED), jnp.float32),
        "w_hh": scale * jax.random.normal(k_whh, (4 * HIDDEN, HIDDEN), jnp.float32),
        "b_ih": scale * jax.random.normal(k_bih, (4 * HIDDEN,), jnp.float32),
        "b_hh": scale * jax.random.normal(k_bhh, (4 * HIDDEN,), jnp.float32),
        "w_fc": scale * jax.random.normal(k_wfc, (VOCAB, HIDDEN), jnp.float32),
        "b_fc": scale * jax.random.normal(k_bfc, (VOCAB,), jnp.float32),
    }

    input_ids = jax.random.randint(k_ids, (BATCH, SEQ), 1, VOCAB, jnp.int32)
    lengths = jax.random.randint(k_len, (BATCH,), 3, SEQ + 1, jnp.int32)
    attention_mask = (jnp.arange(SEQ)[None, :] < lengths[:, None]).astype(jnp.int32)
    # zero out padded ids (as a tokenizer would)
    input_ids = jnp.where(attention_mask > 0, input_ids, 0)

    pred = lstm_predictor_forward(input_ids, attention_mask, params)
    pred = jax.block_until_ready(pred)

    ref = reference_forward(input_ids, attention_mask, params)
    assert pred.shape == (BATCH, VOCAB)
    # bf16 MXU operands (f32 accumulation) -> relaxed tolerance vs f32 reference.
    assert jnp.allclose(pred, ref, atol=2e-2, rtol=2e-2), \
        f"max abs err {jnp.max(jnp.abs(pred - ref))}"

    print("KERNEL_OK")
</pallas_src>

<mosaic_0001>
module attributes {stable_mosaic.version = 11 : i64} {
  func.func @lstm_kernel(%arg0: i32, %arg1: memref<1x64x128xbf16, #tpu.memory_space<vmem>>, %arg2: memref<1x8x1xi32, #tpu.memory_space<vmem>>, %arg3: memref<128x1024xbf16, #tpu.memory_space<vmem>>, %arg4: memref<256x1024xbf16, #tpu.memory_space<vmem>>, %arg5: memref<1x1024xf32, #tpu.memory_space<vmem>>, %arg6: memref<256x256xbf16, #tpu.memory_space<vmem>>, %arg7: memref<1x256xf32, #tpu.memory_space<vmem>>, %arg8: memref<8x256xf32, #tpu.memory_space<vmem>>, %arg9: memref<64x1024xf32, #tpu.memory_space<vmem>>) attributes {dimension_semantics = [#tpu.dimension_semantics<parallel>], iteration_bounds = array<i64: 2>, scalar_prefetch = 0 : i64, scratch_operands = 1 : i64, tpu.core_type = #tpu.core_type<tc>, window_params = [{transform_indices = @transform_0, window_bounds = array<i64: 1, 64, 128>}, {transform_indices = @transform_1, window_bounds = array<i64: 1, 8, 1>}, {pipeline_mode = #tpu.pipeline_mode<synchronous>, transform_indices = @transform_2, window_bounds = array<i64: 128, 1024>}, {pipeline_mode = #tpu.pipeline_mode<synchronous>, transform_indices = @transform_3, window_bounds = array<i64: 256, 1024>}, {pipeline_mode = #tpu.pipeline_mode<synchronous>, transform_indices = @transform_4, window_bounds = array<i64: 1, 1024>}, {pipeline_mode = #tpu.pipeline_mode<synchronous>, transform_indices = @transform_5, window_bounds = array<i64: 256, 256>}, {pipeline_mode = #tpu.pipeline_mode<synchronous>, transform_indices = @transform_6, window_bounds = array<i64: 1, 256>}, {transform_indices = @transform_7, window_bounds = array<i64: 8, 256>}]} {
    %c0 = arith.constant 0 : index
    %c0_0 = arith.constant 0 : index
    %c0_1 = arith.constant 0 : index
    %0 = vector.load %arg1[%c0, %c0_0, %c0_1] : memref<1x64x128xbf16, #tpu.memory_space<vmem>>, vector<1x64x128xbf16>
    %1 = vector.shape_cast %0 : vector<1x64x128xbf16> to vector<64x128xbf16>
    %c0_2 = arith.constant 0 : index
    %c0_3 = arith.constant 0 : index
    %2 = vector.load %arg3[%c0_2, %c0_3] : memref<128x1024xbf16, #tpu.memory_space<vmem>>, vector<128x1024xbf16>
    %cst = arith.constant dense<0.000000e+00> : vector<64x1024xf32>
    %3 = tpu.matmul %1, %2, %cst {dimension_numbers = #tpu.dot_dimension_numbers<[1], [0], [0], [1], [0, 0, 1, 1], [], []>} : vector<64x128xbf16>, vector<128x1024xbf16>, vector<64x1024xf32> -> vector<64x1024xf32>
    %c0_4 = arith.constant 0 : index
    %c0_5 = arith.constant 0 : index
    %4 = vector.load %arg5[%c0_4, %c0_5] : memref<1x1024xf32, #tpu.memory_space<vmem>>, vector<1x1024xf32>
    %5 = vector.broadcast %4 : vector<1x1024xf32> to vector<64x1024xf32>
    %6 = arith.addf %3, %5 : vector<64x1024xf32>
    %c0_6 = arith.constant 0 : index
    %c0_7 = arith.constant 0 : index
    %7 = vector.load %arg9[%c0_6, %c0_7] : memref<64x1024xf32, #tpu.memory_space<vmem>>, vector<64x1024xf32>
    tpu.vector_store %arg9[%c0_6, %c0_7], %6 {strides = array<i32>} : memref<64x1024xf32, #tpu.memory_space<vmem>>, vector<64x1024xf32>,
    %c0_8 = arith.constant 0 : index
    %c0_9 = arith.constant 0 : index
    %c0_10 = arith.constant 0 : index
    %8 = vector.load %arg2[%c0_8, %c0_9, %c0_10] : memref<1x8x1xi32, #tpu.memory_space<vmem>>, vector<1x8x1xi32>
    %9 = vector.shape_cast %8 : vector<1x8x1xi32> to vector<8x1xi32>
    %cst_11 = arith.constant 0.000000e+00 : f32
    %10 = vector.broadcast %cst_11 : f32 to vector<8x256xf32>
    %cst_12 = arith.constant 0.000000e+00 : f32
    %11 = vector.broadcast %cst_12 : f32 to vector<8x256xf32>
    %cst_13 = arith.constant 0.000000e+00 : f32
    %12 = vector.broadcast %cst_13 : f32 to vector<8x256xf32>
    %c0_i32 = arith.constant 0 : i32
    %c8_i32 = arith.constant 8 : i32
    %13 = arith.muli %c0_i32, %c8_i32 : i32
    %14 = tpu.assume_multiple %13, 8 : i32
    %15 = arith.index_cast %14 : i32 to index
    %c0_14 = arith.constant 0 : index
    %16 = vector.load %arg9[%15, %c0_14] : memref<64x1024xf32, #tpu.memory_space<vmem>>, vector<8x1024xf32>
    %17 = arith.truncf %10 : vector<8x256xf32> to vector<8x256xbf16>
    %c0_15 = arith.constant 0 : index
    %c0_16 = arith.constant 0 : index
    %18 = vector.load %arg4[%c0_15, %c0_16] : memref<256x1024xbf16, #tpu.memory_space<vmem>>, vector<256x1024xbf16>
    %cst_17 = arith.constant dense<0.000000e+00> : vector<8x1024xf32>
    %19 = tpu.matmul %17, %18, %cst_17 {dimension_numbers = #tpu.dot_dimension_numbers<[1], [0], [0], [1], [0, 0, 1, 1], [], []>} : vector<8x256xbf16>, vector<256x1024xbf16>, vector<8x1024xf32> -> vector<8x1024xf32>
    %20 = arith.addf %16, %19 : vector<8x1024xf32>
    %21 = vector.extract_strided_slice %20 {offsets = [0, 0], sizes = [8, 256], strides = [1, 1]} : vector<8x1024xf32> to vector<8x256xf32>
    %22 = arith.negf %21 : vector<8x256xf32>
    %23 = math.exp %22 : vector<8x256xf32>
    %cst_18 = arith.constant 1.000000e+00 : f32
    %24 = vector.broadcast %cst_18 : f32 to vector<8x256xf32>
    %25 = arith.addf %24, %23 : vector<8x256xf32>
    %26 = arith.divf %24, %25 : vector<8x256xf32>
    %27 = vector.extract_strided_slice %20 {offsets = [0, 256], sizes = [8, 256], strides = [1, 1]} : vector<8x1024xf32> to vector<8x256xf32>
    %28 = arith.negf %27 : vector<8x256xf32>
    %29 = math.exp %28 : vector<8x256xf32>
    %cst_19 = arith.constant 1.000000e+00 : f32
    %30 = vector.broadcast %cst_19 : f32 to vector<8x256xf32>
    %31 = arith.addf %30, %29 : vector<8x256xf32>
    %32 = arith.divf %30, %31 : vector<8x256xf32>
    %33 = vector.extract_strided_slice %20 {offsets = [0, 512], sizes = [8, 256], strides = [1, 1]} : vector<8x1024xf32> to vector<8x256xf32>
    %34 = math.tanh %33 : vector<8x256xf32>
    %35 = vector.extract_strided_slice %20 {offsets = [0, 768], sizes = [8, 256], strides = [1, 1]} : vector<8x1024xf32> to vector<8x256xf32>
    %36 = arith.negf %35 : vector<8x256xf32>
    %37 = math.exp %36 : vector<8x256xf32>
    %cst_20 = arith.constant 1.000000e+00 : f32
    %38 = vector.broadcast %cst_20 : f32 to vector<8x256xf32>
    %39 = arith.addf %38, %37 : vector<8x256xf32>
    %40 = arith.divf %38, %39 : vector<8x256xf32>
    %41 = arith.mulf %32, %11 : vector<8x256xf32>
    %42 = arith.mulf %26, %34 : vector<8x256xf32>
    %43 = arith.addf %41, %42 : vector<8x256xf32>
    %44 = math.tanh %43 : vector<8x256xf32>
    %45 = arith.mulf %40, %44 : vector<8x256xf32>
    %46 = vector.broadcast %c0_i32 : i32 to vector<8x1xi32>
    %47 = arith.cmpi eq, %9, %46 : vector<8x1xi32>
    %48 = vector.shape_cast %47 : vector<8x1xi1> to vector<8x1xi1>
    %49 = vector.broadcast %48 : vector<8x1xi1> to vector<8x256xi1>
    %50 = arith.select %49, %45, %12 : vector<8x256xi1>, vector<8x256xf32>
    %c1_i32 = arith.constant 1 : i32
    %c8_i32_21 = arith.constant 8 : i32
    %51 = arith.muli %c1_i32, %c8_i32_21 : i32
    %52 = tpu.assume_multiple %51, 8 : i32
    %53 = arith.index_cast %52 : i32 to index
    %c0_22 = arith.constant 0 : index
    %54 = vector.load %arg9[%53, %c0_22] : memref<64x1024xf32, #tpu.memory_space<vmem>>, vector<8x1024xf32>
    %55 = arith.truncf %45 : vector<8x256xf32> to vector<8x256xbf16>
    %c0_23 = arith.constant 0 : index
    %c0_24 = arith.constant 0 : index
    %56 = vector.load %arg4[%c0_23, %c0_24] : memref<256x1024xbf16, #tpu.memory_space<vmem>>, vector<256x1024xbf16>
    %cst_25 = arith.constant dense<0.000000e+00> : vector<8x1024xf32>
    %57 = tpu.matmul %55, %56, %cst_25 {dimension_numbers = #tpu.dot_dimension_numbers<[1], [0], [0], [1], [0, 0, 1, 1], [], []>} : vector<8x256xbf16>, vector<256x1024xbf16>, vector<8x1024xf32> -> vector<8x1024xf32>
    %58 = arith.addf %54, %57 : vector<8x1024xf32>
    %59 = vector.extract_strided_slice %58 {offsets = [0, 0], sizes = [8, 256], strides = [1, 1]} : vector<8x1024xf32> to vector<8x256xf32>
    %60 = arith.negf %59 : vector<8x256xf32>
    %61 = math.exp %60 : vector<8x256xf32>
    %cst_26 = arith.constant 1.000000e+00 : f32
    %62 = vector.broadcast %cst_26 : f32 to vector<8x256xf32>
    %63 = arith.addf %62, %61 : vector<8x256xf32>
    %64 = arith.divf %62, %63 : vector<8x256xf32>
    %65 = vector.extract_strided_slice %58 {offsets = [0, 256], sizes = [8, 256], strides = [1, 1]} : vector<8x1024xf32> to vector<8x256xf32>
    %66 = arith.negf %65 : vector<8x256xf32>
    %67 = math.exp %66 : vector<8x256xf32>
    %cst_27 = arith.constant 1.000000e+00 : f32
    %68 = vector.broadcast %cst_27 : f32 to vector<8x256xf32>
    %69 = arith.addf %68, %67 : vector<8x256xf32>
    %70 = arith.divf %68, %69 : vector<8x256xf32>
    %71 = vector.extract_strided_slice %58 {offsets = [0, 512], sizes = [8, 256], strides = [1, 1]} : vector<8x1024xf32> to vector<8x256xf32>
    %72 = math.tanh %71 : vector<8x256xf32>
    %73 = vector.extract_strided_slice %58 {offsets = [0, 768], sizes = [8, 256], strides = [1, 1]} : vector<8x1024xf32> to vector<8x256xf32>
    %74 = arith.negf %73 : vector<8x256xf32>
    %75 = math.exp %74 : vector<8x256xf32>
    %cst_28 = arith.constant 1.000000e+00 : f32
    %76 = vector.broadcast %cst_28 : f32 to vector<8x256xf32>
    %77 = arith.addf %76, %75 : vector<8x256xf32>
    %78 = arith.divf %76, %77 : vector<8x256xf32>
    %79 = arith.mulf %70, %43 : vector<8x256xf32>
    %80 = arith.mulf %64, %72 : vector<8x256xf32>
    %81 = arith.addf %79, %80 : vector<8x256xf32>
    %82 = math.tanh %81 : vector<8x256xf32>
    %83 = arith.mulf %78, %82 : vector<8x256xf32>
    %84 = vector.broadcast %c1_i32 : i32 to vector<8x1xi32>
    %85 = arith.cmpi eq, %9, %84 : vector<8x1xi32>
    %86 = vector.shape_cast %85 : vector<8x1xi1> to vector<8x1xi1>
    %87 = vector.broadcast %86 : vector<8x1xi1> to vector<8x256xi1>
    %88 = arith.select %87, %83, %50 : vector<8x256xi1>, vector<8x256xf32>
    %c2_i32 = arith.constant 2 : i32
    %c8_i32_29 = arith.constant 8 : i32
    %89 = arith.muli %c2_i32, %c8_i32_29 : i32
    %90 = tpu.assume_multiple %89, 8 : i32
    %91 = arith.index_cast %90 : i32 to index
    %c0_30 = arith.constant 0 : index
    %92 = vector.load %arg9[%91, %c0_30] : memref<64x1024xf32, #tpu.memory_space<vmem>>, vector<8x1024xf32>
    %93 = arith.truncf %83 : vector<8x256xf32> to vector<8x256xbf16>
    %c0_31 = arith.constant 0 : index
    %c0_32 = arith.constant 0 : index
    %94 = vector.load %arg4[%c0_31, %c0_32] : memref<256x1024xbf16, #tpu.memory_space<vmem>>, vector<256x1024xbf16>
    %cst_33 = arith.constant dense<0.000000e+00> : vector<8x1024xf32>
    %95 = tpu.matmul %93, %94, %cst_33 {dimension_numbers = #tpu.dot_dimension_numbers<[1], [0], [0], [1], [0, 0, 1, 1], [], []>} : vector<8x256xbf16>, vector<256x1024xbf16>, vector<8x1024xf32> -> vector<8x1024xf32>
    %96 = arith.addf %92, %95 : vector<8x1024xf32>
    %97 = vector.extract_strided_slice %96 {offsets = [0, 0], sizes = [8, 256], strides = [1, 1]} : vector<8x1024xf32> to vector<8x256xf32>
    %98 = arith.negf %97 : vector<8x256xf32>
    %99 = math.exp %98 : vector<8x256xf32>
    %cst_34 = arith.constant 1.000000e+00 : f32
    %100 = vector.broadcast %cst_34 : f32 to vector<8x256xf32>
    %101 = arith.addf %100, %99 : vector<8x256xf32>
    %102 = arith.divf %100, %101 : vector<8x256xf32>
    %103 = vector.extract_strided_slice %96 {offsets = [0, 256], sizes = [8, 256], strides = [1, 1]} : vector<8x1024xf32> to vector<8x256xf32>
    %104 = arith.negf %103 : vector<8x256xf32>
    %105 = math.exp %104 : vector<8x256xf32>
    %cst_35 = arith.constant 1.000000e+00 : f32
    %106 = vector.broadcast %cst_35 : f32 to vector<8x256xf32>
    %107 = arith.addf %106, %105 : vector<8x256xf32>
    %108 = arith.divf %106, %107 : vector<8x256xf32>
    %109 = vector.extract_strided_slice %96 {offsets = [0, 512], sizes = [8, 256], strides = [1, 1]} : vector<8x1024xf32> to vector<8x256xf32>
    %110 = math.tanh %109 : vector<8x256xf32>
    %111 = vector.extract_strided_slice %96 {offsets = [0, 768], sizes = [8, 256], strides = [1, 1]} : vector<8x1024xf32> to vector<8x256xf32>
    %112 = arith.negf %111 : vector<8x256xf32>
    %113 = math.exp %112 : vector<8x256xf32>
    %cst_36 = arith.constant 1.000000e+00 : f32
    %114 = vector.broadcast %cst_36 : f32 to vector<8x256xf32>
    %115 = arith.addf %114, %113 : vector<8x256xf32>
    %116 = arith.divf %114, %115 : vector<8x256xf32>
    %117 = arith.mulf %108, %81 : vector<8x256xf32>
    %118 = arith.mulf %102, %110 : vector<8x256xf32>
    %119 = arith.addf %117, %118 : vector<8x256xf32>
    %120 = math.tanh %119 : vector<8x256xf32>
    %121 = arith.mulf %116, %120 : vector<8x256xf32>
    %122 = vector.broadcast %c2_i32 : i32 to vector<8x1xi32>
    %123 = arith.cmpi eq, %9, %122 : vector<8x1xi32>
    %124 = vector.shape_cast %123 : vector<8x1xi1> to vector<8x1xi1>
    %125 = vector.broadcast %124 : vector<8x1xi1> to vector<8x256xi1>
    %126 = arith.select %125, %121, %88 : vector<8x256xi1>, vector<8x256xf32>
    %c3_i32 = arith.constant 3 : i32
    %c8_i32_37 = arith.constant 8 : i32
    %127 = arith.muli %c3_i32, %c8_i32_37 : i32
    %128 = tpu.assume_multiple %127, 8 : i32
    %129 = arith.index_cast %128 : i32 to index
    %c0_38 = arith.constant 0 : index
    %130 = vector.load %arg9[%129, %c0_38] : memref<64x1024xf32, #tpu.memory_space<vmem>>, vector<8x1024xf32>
    %131 = arith.truncf %121 : vector<8x256xf32> to vector<8x256xbf16>
    %c0_39 = arith.constant 0 : index
    %c0_40 = arith.constant 0 : index
    %132 = vector.load %arg4[%c0_39, %c0_40] : memref<256x1024xbf16, #tpu.memory_space<vmem>>, vector<256x1024xbf16>
    %cst_41 = arith.constant dense<0.000000e+00> : vector<8x1024xf32>
    %133 = tpu.matmul %131, %132, %cst_41 {dimension_numbers = #tpu.dot_dimension_numbers<[1], [0], [0], [1], [0, 0, 1, 1], [], []>} : vector<8x256xbf16>, vector<256x1024xbf16>, vector<8x1024xf32> -> vector<8x1024xf32>
    %134 = arith.addf %130, %133 : vector<8x1024xf32>
    %135 = vector.extract_strided_slice %134 {offsets = [0, 0], sizes = [8, 256], strides = [1, 1]} : vector<8x1024xf32> to vector<8x256xf32>
    %136 = arith.negf %135 : vector<8x256xf32>
    %137 = math.exp %136 : vector<8x256xf32>
    %cst_42 = arith.constant 1.000000e+00 : f32
    %138 = vector.broadcast %cst_42 : f32 to vector<8x256xf32>
    %139 = arith.addf %138, %137 : vector<8x256xf32>
    %140 = arith.divf %138, %139 : vector<8x256xf32>
    %141 = vector.extract_strided_slice %134 {offsets = [0, 256], sizes = [8, 256], strides = [1, 1]} : vector<8x1024xf32> to vector<8x256xf32>
    %142 = arith.negf %141 : vector<8x256xf32>
    %143 = math.exp %142 : vector<8x256xf32>
    %cst_43 = arith.constant 1.000000e+00 : f32
    %144 = vector.broadcast %cst_43 : f32 to vector<8x256xf32>
    %145 = arith.addf %144, %143 : vector<8x256xf32>
    %146 = arith.divf %144, %145 : vector<8x256xf32>
    %147 = vector.extract_strided_slice %134 {offsets = [0, 512], sizes = [8, 256], strides = [1, 1]} : vector<8x1024xf32> to vector<8x256xf32>
    %148 = math.tanh %147 : vector<8x256xf32>
    %149 = vector.extract_strided_slice %134 {offsets = [0, 768], sizes = [8, 256], strides = [1, 1]} : vector<8x1024xf32> to vector<8x256xf32>
    %150 = arith.negf %149 : vector<8x256xf32>
    %151 = math.exp %150 : vector<8x256xf32>
    %cst_44 = arith.constant 1.000000e+00 : f32
    %152 = vector.broadcast %cst_44 : f32 to vector<8x256xf32>
    %153 = arith.addf %152, %151 : vector<8x256xf32>
    %154 = arith.divf %152, %153 : vector<8x256xf32>
    %155 = arith.mulf %146, %119 : vector<8x256xf32>
    %156 = arith.mulf %140, %148 : vector<8x256xf32>
    %157 = arith.addf %155, %156 : vector<8x256xf32>
    %158 = math.tanh %157 : vector<8x256xf32>
    %159 = arith.mulf %154, %158 : vector<8x256xf32>
    %160 = vector.broadcast %c3_i32 : i32 to vector<8x1xi32>
    %161 = arith.cmpi eq, %9, %160 : vector<8x1xi32>
    %162 = vector.shape_cast %161 : vector<8x1xi1> to vector<8x1xi1>
    %163 = vector.broadcast %162 : vector<8x1xi1> to vector<8x256xi1>
    %164 = arith.select %163, %159, %126 : vector<8x256xi1>, vector<8x256xf32>
    %c4_i32 = arith.constant 4 : i32
    %c8_i32_45 = arith.constant 8 : i32
    %165 = arith.muli %c4_i32, %c8_i32_45 : i32
    %166 = tpu.assume_multiple %165, 8 : i32
    %167 = arith.index_cast %166 : i32 to index
    %c0_46 = arith.constant 0 : index
    %168 = vector.load %arg9[%167, %c0_46] : memref<64x1024xf32, #tpu.memory_space<vmem>>, vector<8x1024xf32>
    %169 = arith.truncf %159 : vector<8x256xf32> to vector<8x256xbf16>
    %c0_47 = arith.constant 0 : index
    %c0_48 = arith.constant 0 : index
    %170 = vector.load %arg4[%c0_47, %c0_48] : memref<256x1024xbf16, #tpu.memory_space<vmem>>, vector<256x1024xbf16>
    %cst_49 = arith.constant dense<0.000000e+00> : vector<8x1024xf32>
    %171 = tpu.matmul %169, %170, %cst_49 {dimension_numbers = #tpu.dot_dimension_numbers<[1], [0], [0], [1], [0, 0, 1, 1], [], []>} : vector<8x256xbf16>, vector<256x1024xbf16>, vector<8x1024xf32> -> vector<8x1024xf32>
    %172 = arith.addf %168, %171 : vector<8x1024xf32>
    %173 = vector.extract_strided_slice %172 {offsets = [0, 0], sizes = [8, 256], strides = [1, 1]} : vector<8x1024xf32> to vector<8x256xf32>
    %174 = arith.negf %173 : vector<8x256xf32>
    %175 = math.exp %174 : vector<8x256xf32>
    %cst_50 = arith.constant 1.000000e+00 : f32
    %176 = vector.broadcast %cst_50 : f32 to vector<8x256xf32>
    %177 = arith.addf %176, %175 : vector<8x256xf32>
    %178 = arith.divf %176, %177 : vector<8x256xf32>
    %179 = vector.extract_strided_slice %172 {offsets = [0, 256], sizes = [8, 256], strides = [1, 1]} : vector<8x1024xf32> to vector<8x256xf32>
    %180 = arith.negf %179 : vector<8x256xf32>
    %181 = math.exp %180 : vector<8x256xf32>
    %cst_51 = arith.constant 1.000000e+00 : f32
    %182 = vector.broadcast %cst_51 : f32 to vector<8x256xf32>
    %183 = arith.addf %182, %181 : vector<8x256xf32>
    %184 = arith.divf %182, %183 : vector<8x256xf32>
    %185 = vector.extract_strided_slice %172 {offsets = [0, 512], sizes = [8, 256], strides = [1, 1]} : vector<8x1024xf32> to vector<8x256xf32>
    %186 = math.tanh %185 : vector<8x256xf32>
    %187 = vector.extract_strided_slice %172 {offsets = [0, 768], sizes = [8, 256], strides = [1, 1]} : vector<8x1024xf32> to vector<8x256xf32>
    %188 = arith.negf %187 : vector<8x256xf32>
    %189 = math.exp %188 : vector<8x256xf32>
    %cst_52 = arith.constant 1.000000e+00 : f32
    %190 = vector.broadcast %cst_52 : f32 to vector<8x256xf32>
    %191 = arith.addf %190, %189 : vector<8x256xf32>
    %192 = arith.divf %190, %191 : vector<8x256xf32>
    %193 = arith.mulf %184, %157 : vector<8x256xf32>
    %194 = arith.mulf %178, %186 : vector<8x256xf32>
    %195 = arith.addf %193, %194 : vector<8x256xf32>
    %196 = math.tanh %195 : vector<8x256xf32>
    %197 = arith.mulf %192, %196 : vector<8x256xf32>
    %198 = vector.broadcast %c4_i32 : i32 to vector<8x1xi32>
    %199 = arith.cmpi eq, %9, %198 : vector<8x1xi32>
    %200 = vector.shape_cast %199 : vector<8x1xi1> to vector<8x1xi1>
    %201 = vector.broadcast %200 : vector<8x1xi1> to vector<8x256xi1>
    %202 = arith.select %201, %197, %164 : vector<8x256xi1>, vector<8x256xf32>
    %c5_i32 = arith.constant 5 : i32
    %c8_i32_53 = arith.constant 8 : i32
    %203 = arith.muli %c5_i32, %c8_i32_53 : i32
    %204 = tpu.assume_multiple %203, 8 : i32
    %205 = arith.index_cast %204 : i32 to index
    %c0_54 = arith.constant 0 : index
    %206 = vector.load %arg9[%205, %c0_54] : memref<64x1024xf32, #tpu.memory_space<vmem>>, vector<8x1024xf32>
    %207 = arith.truncf %197 : vector<8x256xf32> to vector<8x256xbf16>
    %c0_55 = arith.constant 0 : index
    %c0_56 = arith.constant 0 : index
    %208 = vector.load %arg4[%c0_55, %c0_56] : memref<256x1024xbf16, #tpu.memory_space<vmem>>, vector<256x1024xbf16>
    %cst_57 = arith.constant dense<0.000000e+00> : vector<8x1024xf32>
    %209 = tpu.matmul %207, %208, %cst_57 {dimension_numbers = #tpu.dot_dimension_numbers<[1], [0], [0], [1], [0, 0, 1, 1], [], []>} : vector<8x256xbf16>, vector<256x1024xbf16>, vector<8x1024xf32> -> vector<8x1024xf32>
    %210 = arith.addf %206, %209 : vector<8x1024xf32>
    %211 = vector.extract_strided_slice %210 {offsets = [0, 0], sizes = [8, 256], strides = [1, 1]} : vector<8x1024xf32> to vector<8x256xf32>
    %212 = arith.negf %211 : vector<8x256xf32>
    %213 = math.exp %212 : vector<8x256xf32>
    %cst_58 = arith.constant 1.000000e+00 : f32
    %214 = vector.broadcast %cst_58 : f32 to vector<8x256xf32>
    %215 = arith.addf %214, %213 : vector<8x256xf32>
    %216 = arith.divf %214, %215 : vector<8x256xf32>
    %217 = vector.extract_strided_slice %210 {offsets = [0, 256], sizes = [8, 256], strides = [1, 1]} : vector<8x1024xf32> to vector<8x256xf32>
    %218 = arith.negf %217 : vector<8x256xf32>
    %219 = math.exp %218 : vector<8x256xf32>
    %cst_59 = arith.constant 1.000000e+00 : f32
    %220 = vector.broadcast %cst_59 : f32 to vector<8x256xf32>
    %221 = arith.addf %220, %219 : vector<8x256xf32>
    %222 = arith.divf %220, %221 : vector<8x256xf32>
    %223 = vector.extract_strided_slice %210 {offsets = [0, 512], sizes = [8, 256], strides = [1, 1]} : vector<8x1024xf32> to vector<8x256xf32>
    %224 = math.tanh %223 : vector<8x256xf32>
    %225 = vector.extract_strided_slice %210 {offsets = [0, 768], sizes = [8, 256], strides = [1, 1]} : vector<8x1024xf32> to vector<8x256xf32>
    %226 = arith.negf %225 : vector<8x256xf32>
    %227 = math.exp %226 : vector<8x256xf32>
    %cst_60 = arith.constant 1.000000e+00 : f32
    %228 = vector.broadcast %cst_60 : f32 to vector<8x256xf32>
    %229 = arith.addf %228, %227 : vector<8x256xf32>
    %230 = arith.divf %228, %229 : vector<8x256xf32>
    %231 = arith.mulf %222, %195 : vector<8x256xf32>
    %232 = arith.mulf %216, %224 : vector<8x256xf32>
    %233 = arith.addf %231, %232 : vector<8x256xf32>
    %234 = math.tanh %233 : vector<8x256xf32>
    %235 = arith.mulf %230, %234 : vector<8x256xf32>
    %236 = vector.broadcast %c5_i32 : i32 to vector<8x1xi32>
    %237 = arith.cmpi eq, %9, %236 : vector<8x1xi32>
    %238 = vector.shape_cast %237 : vector<8x1xi1> to vector<8x1xi1>
    %239 = vector.broadcast %238 : vector<8x1xi1> to vector<8x256xi1>
    %240 = arith.select %239, %235, %202 : vector<8x256xi1>, vector<8x256xf32>
    %c6_i32 = arith.constant 6 : i32
    %c8_i32_61 = arith.constant 8 : i32
    %241 = arith.muli %c6_i32, %c8_i32_61 : i32
    %242 = tpu.assume_multiple %241, 8 : i32
    %243 = arith.index_cast %242 : i32 to index
    %c0_62 = arith.constant 0 : index
    %244 = vector.load %arg9[%243, %c0_62] : memref<64x1024xf32, #tpu.memory_space<vmem>>, vector<8x1024xf32>
    %245 = arith.truncf %235 : vector<8x256xf32> to vector<8x256xbf16>
    %c0_63 = arith.constant 0 : index
    %c0_64 = arith.constant 0 : index
    %246 = vector.load %arg4[%c0_63, %c0_64] : memref<256x1024xbf16, #tpu.memory_space<vmem>>, vector<256x1024xbf16>
    %cst_65 = arith.constant dense<0.000000e+00> : vector<8x1024xf32>
    %247 = tpu.matmul %245, %246, %cst_65 {dimension_numbers = #tpu.dot_dimension_numbers<[1], [0], [0], [1], [0, 0, 1, 1], [], []>} : vector<8x256xbf16>, vector<256x1024xbf16>, vector<8x1024xf32> -> vector<8x1024xf32>
    %248 = arith.addf %244, %247 : vector<8x1024xf32>
    %249 = vector.extract_strided_slice %248 {offsets = [0, 0], sizes = [8, 256], strides = [1, 1]} : vector<8x1024xf32> to vector<8x256xf32>
    %250 = arith.negf %249 : vector<8x256xf32>
    %251 = math.exp %250 : vector<8x256xf32>
    %cst_66 = arith.constant 1.000000e+00 : f32
    %252 = vector.broadcast %cst_66 : f32 to vector<8x256xf32>
    %253 = arith.addf %252, %251 : vector<8x256xf32>
    %254 = arith.divf %252, %253 : vector<8x256xf32>
    %255 = vector.extract_strided_slice %248 {offsets = [0, 256], sizes = [8, 256], strides = [1, 1]} : vector<8x1024xf32> to vector<8x256xf32>
    %256 = arith.negf %255 : vector<8x256xf32>
    %257 = math.exp %256 : vector<8x256xf32>
    %cst_67 = arith.constant 1.000000e+00 : f32
    %258 = vector.broadcast %cst_67 : f32 to vector<8x256xf32>
    %259 = arith.addf %258, %257 : vector<8x256xf32>
    %260 = arith.divf %258, %259 : vector<8x256xf32>
    %261 = vector.extract_strided_slice %248 {offsets = [0, 512], sizes = [8, 256], strides = [1, 1]} : vector<8x1024xf32> to vector<8x256xf32>
    %262 = math.tanh %261 : vector<8x256xf32>
    %263 = vector.extract_strided_slice %248 {offsets = [0, 768], sizes = [8, 256], strides = [1, 1]} : vector<8x1024xf32> to vector<8x256xf32>
    %264 = arith.negf %263 : vector<8x256xf32>
    %265 = math.exp %264 : vector<8x256xf32>
    %cst_68 = arith.constant 1.000000e+00 : f32
    %266 = vector.broadcast %cst_68 : f32 to vector<8x256xf32>
    %267 = arith.addf %266, %265 : vector<8x256xf32>
    %268 = arith.divf %266, %267 : vector<8x256xf32>
    %269 = arith.mulf %260, %233 : vector<8x256xf32>
    %270 = arith.mulf %254, %262 : vector<8x256xf32>
    %271 = arith.addf %269, %270 : vector<8x256xf32>
    %272 = math.tanh %271 : vector<8x256xf32>
    %273 = arith.mulf %268, %272 : vector<8x256xf32>
    %274 = vector.broadcast %c6_i32 : i32 to vector<8x1xi32>
    %275 = arith.cmpi eq, %9, %274 : vector<8x1xi32>
    %276 = vector.shape_cast %275 : vector<8x1xi1> to vector<8x1xi1>
    %277 = vector.broadcast %276 : vector<8x1xi1> to vector<8x256xi1>
    %278 = arith.select %277, %273, %240 : vector<8x256xi1>, vector<8x256xf32>
    %c7_i32 = arith.constant 7 : i32
    %c8_i32_69 = arith.constant 8 : i32
    %279 = arith.muli %c7_i32, %c8_i32_69 : i32
    %280 = tpu.assume_multiple %279, 8 : i32
    %281 = arith.index_cast %280 : i32 to index
    %c0_70 = arith.constant 0 : index
    %282 = vector.load %arg9[%281, %c0_70] : memref<64x1024xf32, #tpu.memory_space<vmem>>, vector<8x1024xf32>
    %283 = arith.truncf %273 : vector<8x256xf32> to vector<8x256xbf16>
    %c0_71 = arith.constant 0 : index
    %c0_72 = arith.constant 0 : index
    %284 = vector.load %arg4[%c0_71, %c0_72] : memref<256x1024xbf16, #tpu.memory_space<vmem>>, vector<256x1024xbf16>
    %cst_73 = arith.constant dense<0.000000e+00> : vector<8x1024xf32>
    %285 = tpu.matmul %283, %284, %cst_73 {dimension_numbers = #tpu.dot_dimension_numbers<[1], [0], [0], [1], [0, 0, 1, 1], [], []>} : vector<8x256xbf16>, vector<256x1024xbf16>, vector<8x1024xf32> -> vector<8x1024xf32>
    %286 = arith.addf %282, %285 : vector<8x1024xf32>
    %287 = vector.extract_strided_slice %286 {offsets = [0, 0], sizes = [8, 256], strides = [1, 1]} : vector<8x1024xf32> to vector<8x256xf32>
    %288 = arith.negf %287 : vector<8x256xf32>
    %289 = math.exp %288 : vector<8x256xf32>
    %cst_74 = arith.constant 1.000000e+00 : f32
    %290 = vector.broadcast %cst_74 : f32 to vector<8x256xf32>
    %291 = arith.addf %290, %289 : vector<8x256xf32>
    %292 = arith.divf %290, %291 : vector<8x256xf32>
    %293 = vector.extract_strided_slice %286 {offsets = [0, 256], sizes = [8, 256], strides = [1, 1]} : vector<8x1024xf32> to vector<8x256xf32>
    %294 = arith.negf %293 : vector<8x256xf32>
    %295 = math.exp %294 : vector<8x256xf32>
    %cst_75 = arith.constant 1.000000e+00 : f32
    %296 = vector.broadcast %cst_75 : f32 to vector<8x256xf32>
    %297 = arith.addf %296, %295 : vector<8x256xf32>
    %298 = arith.divf %296, %297 : vector<8x256xf32>
    %299 = vector.extract_strided_slice %286 {offsets = [0, 512], sizes = [8, 256], strides = [1, 1]} : vector<8x1024xf32> to vector<8x256xf32>
    %300 = math.tanh %299 : vector<8x256xf32>
    %301 = vector.extract_strided_slice %286 {offsets = [0, 768], sizes = [8, 256], strides = [1, 1]} : vector<8x1024xf32> to vector<8x256xf32>
    %302 = arith.negf %301 : vector<8x256xf32>
    %303 = math.exp %302 : vector<8x256xf32>
    %cst_76 = arith.constant 1.000000e+00 : f32
    %304 = vector.broadcast %cst_76 : f32 to vector<8x256xf32>
    %305 = arith.addf %304, %303 : vector<8x256xf32>
    %306 = arith.divf %304, %305 : vector<8x256xf32>
    %307 = arith.mulf %298, %271 : vector<8x256xf32>
    %308 = arith.mulf %292, %300 : vector<8x256xf32>
    %309 = arith.addf %307, %308 : vector<8x256xf32>
    %310 = math.tanh %309 : vector<8x256xf32>
    %311 = arith.mulf %306, %310 : vector<8x256xf32>
    %312 = vector.broadcast %c7_i32 : i32 to vector<8x1xi32>
    %313 = arith.cmpi eq, %9, %312 : vector<8x1xi32>
    %314 = vector.shape_cast %313 : vector<8x1xi1> to vector<8x1xi1>
    %315 = vector.broadcast %314 : vector<8x1xi1> to vector<8x256xi1>
    %316 = arith.select %315, %311, %278 : vector<8x256xi1>, vector<8x256xf32>
    %c8_i32_77 = arith.constant 8 : i32
    %317 = arith.truncf %316 : vector<8x256xf32> to vector<8x256xbf16>
    %c0_78 = arith.constant 0 : index
    %c0_79 = arith.constant 0 : index
    %318 = vector.load %arg6[%c0_78, %c0_79] : memref<256x256xbf16, #tpu.memory_space<vmem>>, vector<256x256xbf16>
    %cst_80 = arith.constant dense<0.000000e+00> : vector<8x256xf32>
    %319 = tpu.matmul %317, %318, %cst_80 {dimension_numbers = #tpu.dot_dimension_numbers<[1], [0], [0], [1], [0, 0, 1, 1], [], []>} : vector<8x256xbf16>, vector<256x256xbf16>, vector<8x256xf32> -> vector<8x256xf32>
    %c0_81 = arith.constant 0 : index
    %c0_82 = arith.constant 0 : index
    %320 = vector.load %arg7[%c0_81, %c0_82] : memref<1x256xf32, #tpu.memory_space<vmem>>, vector<1x256xf32>
    %321 = vector.broadcast %320 : vector<1x256xf32> to vector<8x256xf32>
    %322 = arith.addf %319, %321 : vector<8x256xf32>
    %c0_83 = arith.constant 0 : index
    %c0_84 = arith.constant 0 : index
    %323 = vector.load %arg8[%c0_83, %c0_84] : memref<8x256xf32, #tpu.memory_space<vmem>>, vector<8x256xf32>
    tpu.vector_store %arg8[%c0_83, %c0_84], %322 {strides = array<i32>} : memref<8x256xf32, #tpu.memory_space<vmem>>, vector<8x256xf32>,
    return
  }
  func.func @transform_0(%arg0: i32) -> (i32, i32, i32) {
    %c0_i32 = arith.constant 0 : i32
    %c0_i32_0 = arith.constant 0 : i32
    %c0_i32_1 = arith.constant 0 : i32
    return %arg0, %c0_i32, %c0_i32_0 : i32, i32, i32
  }
  func.func @transform_1(%arg0: i32) -> (i32, i32, i32) {
    %c0_i32 = arith.constant 0 : i32
    %c0_i32_0 = arith.constant 0 : i32
    %c0_i32_1 = arith.constant 0 : i32
    return %arg0, %c0_i32, %c0_i32_0 : i32, i32, i32
  }
  func.func @transform_2(%arg0: i32) -> (i32, i32) {
    %c0_i32 = arith.constant 0 : i32
    %c0_i32_0 = arith.constant 0 : i32
    %c0_i32_1 = arith.constant 0 : i32
    return %c0_i32, %c0_i32_0 : i32, i32
  }
  func.func @transform_3(%arg0: i32) -> (i32, i32) {
    %c0_i32 = arith.constant 0 : i32
    %c0_i32_0 = arith.constant 0 : i32
    %c0_i32_1 = arith.constant 0 : i32
    return %c0_i32, %c0_i32_0 : i32, i32
  }
  func.func @transform_4(%arg0: i32) -> (i32, i32) {
    %c0_i32 = arith.constant 0 : i32
    %c0_i32_0 = arith.constant 0 : i32
    %c0_i32_1 = arith.constant 0 : i32
    return %c0_i32, %c0_i32_0 : i32, i32
  }
  func.func @transform_5(%arg0: i32) -> (i32, i32) {
    %c0_i32 = arith.constant 0 : i32
    %c0_i32_0 = arith.constant 0 : i32
    %c0_i32_1 = arith.constant 0 : i32
    return %c0_i32, %c0_i32_0 : i32, i32
  }
  func.func @transform_6(%arg0: i32) -> (i32, i32) {
    %c0_i32 = arith.constant 0 : i32
    %c0_i32_0 = arith.constant 0 : i32
    %c0_i32_1 = arith.constant 0 : i32
    return %c0_i32, %c0_i32_0 : i32, i32
  }
  func.func @transform_7(%arg0: i32) -> (i32, i32) {
    %c0_i32 = arith.constant 0 : i32
    %c0_i32_0 = arith.constant 0 : i32
    return %arg0, %c0_i32 : i32, i32
  }
}

</mosaic_0001>

<llo_original>
// kernel: lstm_predictor_forward.1
$region0: #{lstm_predictor_forward.1}
  #allocation0 [shape = 'u32[]', space=smem, size = 0x4, offset = 0x4, fixed_abs, tag = 'smem constant byte address 0x4 - core index']
  #allocation1 [shape = 'u32[144,128]{1,0:T(1,128)}', space=vmem, size = 0x12000, scoped, tag = 'internal scratch']
  #allocation2 [shape = 'f32[64,1024]{1,0:T(8,128)}', space=vmem, size = 0x40000, scoped, tag = 'scratch operand']
  %s0 = inlined_call_operand.vmem [shape: bf16[2,64,128], index: 0, kind: input, shape index: {}]
  %s1 = inlined_call_operand.vmem [shape: s32[2,8,1], index: 1, kind: input, shape index: {}]
  %s2 = inlined_call_operand.vmem [shape: bf16[128,1024], index: 2, kind: input, shape index: {}]
  %s3 = inlined_call_operand.vmem [shape: bf16[256,1024], index: 3, kind: input, shape index: {}]
  %s4 = inlined_call_operand.vmem [shape: f32[1,1024], index: 4, kind: input, shape index: {}]
  %s5 = inlined_call_operand.vmem [shape: bf16[256,256], index: 5, kind: input, shape index: {}]
  %s6 = inlined_call_operand.vmem [shape: f32[1,256], index: 6, kind: input, shape index: {}]
  %s7 = inlined_call_operand.hbm [shape: f32[16,256], index: 7, kind: output, shape index: {}]
  %s8 = sld [smem:[#allocation0]]
  $region61: #{lstm_predictor_forward.1} parent=0
    _
  %s10 = ssub.s32 1, %s8
  %s11 = scalar_select 0, %s10, %s8
  $region1: #{lstm_predictor_forward.1} parent=0
    #allocation3 [shape = 'u8[16384]{0}', space=vmem, size = 0x4000, scoped, tag = 'output window, operand 0']
    #allocation4 [shape = 's32[2]{0}', space=sflag, size = 0x8, scoped, tag = 'scoped memory for lstm_predictor_forward.1']
    %12 = vsyncpa [#allocation4], 0
    %s13 = scalar_lea.sflag [#allocation4], 1
    %14 = vsyncpa %s13, 0
    loop: start=0, step=1, limit=4
    $region2: #{lstm_predictor_forward.1} parent=1 // loop_pre_header
      _
    $region3: #{lstm_predictor_forward.1} parent=1 // loop_header
      %s16 = sphi 0, %s20
      %p17 = scmp.ge.s32.totalorder %s16, 4
      %s26 = sphi 0, %s28
      %s29 = sphi 0, %s26
      %s30 = sphi 0, %s29
      %s46 = sphi 0, %s30
      %s52 = sphi 0, %s54
      %s55 = sphi 0, %s52
      %s56 = sphi 0, %s55
      %s72 = sphi 0, %s56
      %s76 = sphi 0, %s76
      %s78 = sphi 0, %s76
      %s79 = sphi 0, %s78
      %s93 = sphi 0, %s79
      %s97 = sphi 0, %s97
      %s99 = sphi 0, %s97
      %s100 = sphi 0, %s99
      %s114 = sphi 0, %s100
      %s118 = sphi 0, %s118
      %s120 = sphi 0, %s118
      %s121 = sphi 0, %s120
      %s135 = sphi 0, %s121
      %s139 = sphi 0, %s139
      %s141 = sphi 0, %s139
      %s142 = sphi 0, %s141
      %s156 = sphi 0, %s142
      %s160 = sphi 0, %s160
      %s162 = sphi 0, %s160
      %s163 = sphi 0, %s162
      %s177 = sphi 0, %s163
      %s183 = sphi 0, %s185
      %s186 = sphi 0, %s183
      %s187 = sphi 0, %s186
      %s203 = sphi 0, %s187
    $region4: #{lstm_predictor_forward.1} parent=1 // loop_header_branch
      %19 = sbr.rel (%p17) target = $region8
    $region5: #{lstm_predictor_forward.1} parent=1 // loop_body
      %s21 = ssub.s32 %s16, 1
      %s22 = ssub.s32 %s16, 2
      %s23 = sadd.s32 %s16, 1
      %s24 = ssub.s32 %s16, %s23
      %p25 = scmp.eq.s32.totalorder %s24, 0
      %s27 = sadd.s32 %s26, 1
      %s28 = scalar_select %p25, %s26, %s27
      %p31 = pneg %p25
      %p32 = scmp.eq.s32.totalorder %s16, 1
      %p33 = por %p31, %p32
      %p34 = scmp.ne.s32.totalorder %s26, %s29
      %p35 = scmp.eq.s32.totalorder %s16, 0
      %p36 = por %p34, %p35
      %p37 = scmp.ne.s32.totalorder %s26, %s29
      %p38 = scmp.eq.s32.totalorder %s21, 1
      %p39 = por %p37, %p38
      %p40 = scmp.ne.s32.totalorder %s29, %s30
      %p41 = scmp.eq.s32.totalorder %s21, 0
      %p42 = por %p40, %p41
      %p43 = scmp.ne.s32.totalorder %s29, %s30
      %p44 = scmp.eq.s32.totalorder %s22, 1
      %p45 = por %p43, %p44
      %p47 = scmp.ne.s32.totalorder %s30, %s46
      %p48 = scmp.eq.s32.totalorder %s22, 0
      %p49 = por %p47, %p48
      %s50 = ssub.s32 %s16, %s23
      %p51 = scmp.eq.s32.totalorder %s50, 0
      %s53 = sadd.s32 %s52, 1
      %s54 = scalar_select %p51, %s52, %s53
      %p57 = pneg %p51
      %p58 = scmp.eq.s32.totalorder %s16, 1
      %p59 = por %p57, %p58
      %p60 = scmp.ne.s32.totalorder %s52, %s55
      %p61 = scmp.eq.s32.totalorder %s16, 0
      %p62 = por %p60, %p61
      %p63 = scmp.ne.s32.totalorder %s52, %s55
      %p64 = scmp.eq.s32.totalorder %s21, 1
      %p65 = por %p63, %p64
      %p66 = scmp.ne.s32.totalorder %s55, %s56
      %p67 = scmp.eq.s32.totalorder %s21, 0
      %p68 = por %p66, %p67
      %p69 = scmp.ne.s32.totalorder %s55, %s56
      %p70 = scmp.eq.s32.totalorder %s22, 1
      %p71 = por %p69, %p70
      %p73 = scmp.ne.s32.totalorder %s56, %s72
      %p74 = scmp.eq.s32.totalorder %s22, 0
      %p75 = por %p73, %p74
      %s77 = sadd.s32 %s76, 1
      %p80 = scmp.eq.s32.totalorder %s16, 1
      %p81 = scmp.ne.s32.totalorder %s76, %s78
      %p82 = scmp.eq.s32.totalorder %s16, 0
      %p83 = por %p81, %p82
      %p84 = scmp.ne.s32.totalorder %s76, %s78
      %p85 = scmp.eq.s32.totalorder %s21, 1
      %p86 = por %p84, %p85
      %p87 = scmp.ne.s32.totalorder %s78, %s79
      %p88 = scmp.eq.s32.totalorder %s21, 0
      %p89 = por %p87, %p88
      %p90 = scmp.ne.s32.totalorder %s78, %s79
      %p91 = scmp.eq.s32.totalorder %s22, 1
      %p92 = por %p90, %p91
      %p94 = scmp.ne.s32.totalorder %s79, %s93
      %p95 = scmp.eq.s32.totalorder %s22, 0
      %p96 = por %p94, %p95
      %s98 = sadd.s32 %s97, 1
      %p101 = scmp.eq.s32.totalorder %s16, 1
      %p102 = scmp.ne.s32.totalorder %s97, %s99
      %p103 = scmp.eq.s32.totalorder %s16, 0
      %p104 = por %p102, %p103
      %p105 = scmp.ne.s32.totalorder %s97, %s99
      %p106 = scmp.eq.s32.totalorder %s21, 1
      %p107 = por %p105, %p106
      %p108 = scmp.ne.s32.totalorder %s99, %s100
      %p109 = scmp.eq.s32.totalorder %s21, 0
      %p110 = por %p108, %p109
      %p111 = scmp.ne.s32.totalorder %s99, %s100
      %p112 = scmp.eq.s32.totalorder %s22, 1
      %p113 = por %p111, %p112
      %p115 = scmp.ne.s32.totalorder %s100, %s114
      %p116 = scmp.eq.s32.totalorder %s22, 0
      %p117 = por %p115, %p116
      %s119 = sadd.s32 %s118, 1
      %p122 = scmp.eq.s32.totalorder %s16, 1
      %p123 = scmp.ne.s32.totalorder %s118, %s120
      %p124 = scmp.eq.s32.totalorder %s16, 0
      %p125 = por %p123, %p124
      %p126 = scmp.ne.s32.totalorder %s118, %s120
      %p127 = scmp.eq.s32.totalorder %s21, 1
      %p128 = por %p126, %p127
      %p129 = scmp.ne.s32.totalorder %s120, %s121
      %p130 = scmp.eq.s32.totalorder %s21, 0
      %p131 = por %p129, %p130
      %p132 = scmp.ne.s32.totalorder %s120, %s121
      %p133 = scmp.eq.s32.totalorder %s22, 1
      %p134 = por %p132, %p133
      %p136 = scmp.ne.s32.totalorder %s121, %s135
      %p137 = scmp.eq.s32.totalorder %s22, 0
      %p138 = por %p136, %p137
      %s140 = sadd.s32 %s139, 1
      %p143 = scmp.eq.s32.totalorder %s16, 1
      %p144 = scmp.ne.s32.totalorder %s139, %s141
      %p145 = scmp.eq.s32.totalorder %s16, 0
      %p146 = por %p144, %p145
      %p147 = scmp.ne.s32.totalorder %s139, %s141
      %p148 = scmp.eq.s32.totalorder %s21, 1
      %p149 = por %p147, %p148
      %p150 = scmp.ne.s32.totalorder %s141, %s142
      %p151 = scmp.eq.s32.totalorder %s21, 0
      %p152 = por %p150, %p151
      %p153 = scmp.ne.s32.totalorder %s141, %s142
      %p154 = scmp.eq.s32.totalorder %s22, 1
      %p155 = por %p153, %p154
      %p157 = scmp.ne.s32.totalorder %s142, %s156
      %p158 = scmp.eq.s32.totalorder %s22, 0
      %p159 = por %p157, %p158
      %s161 = sadd.s32 %s160, 1
      %p164 = scmp.eq.s32.totalorder %s16, 1
      %p165 = scmp.ne.s32.totalorder %s160, %s162
      %p166 = scmp.eq.s32.totalorder %s16, 0
      %p167 = por %p165, %p166
      %p168 = scmp.ne.s32.totalorder %s160, %s162
      %p169 = scmp.eq.s32.totalorder %s21, 1
      %p170 = por %p168, %p169
      %p171 = scmp.ne.s32.totalorder %s162, %s163
      %p172 = scmp.eq.s32.totalorder %s21, 0
      %p173 = por %p171, %p172
      %p174 = scmp.ne.s32.totalorder %s162, %s163
      %p175 = scmp.eq.s32.totalorder %s22, 1
      %p176 = por %p174, %p175
      %p178 = scmp.ne.s32.totalorder %s163, %s177
      %p179 = scmp.eq.s32.totalorder %s22, 0
      %p180 = por %p178, %p179
      %s181 = ssub.s32 %s16, %s23
      %p182 = scmp.eq.s32.totalorder %s181, 0
      %s184 = sadd.s32 %s183, 1
      %s185 = scalar_select %p182, %s183, %s184
      %p188 = pneg %p182
      %p189 = scmp.eq.s32.totalorder %s16, 1
      %p190 = por %p188, %p189
      %p191 = scmp.ne.s32.totalorder %s183, %s186
      %p192 = scmp.eq.s32.totalorder %s16, 0
      %p193 = por %p191, %p192
      %p194 = scmp.ne.s32.totalorder %s183, %s186
      %p195 = scmp.eq.s32.totalorder %s21, 1
      %p196 = por %p194, %p195
      %p197 = scmp.ne.s32.totalorder %s186, %s187
      %p198 = scmp.eq.s32.totalorder %s21, 0
      %p199 = por %p197, %p198
      %p200 = scmp.ne.s32.totalorder %s186, %s187
      %p201 = scmp.eq.s32.totalorder %s22, 1
      %p202 = por %p200, %p201
      %p204 = scmp.ne.s32.totalorder %s187, %s203
      %p205 = scmp.eq.s32.totalorder %s22, 0
      %p206 = por %p204, %p205
      %p207 = scmp.le.s32.totalorder 1, %s16
      %p208 = scmp.lt.s32.totalorder %s16, 3
      %p209 = pnand %p207, %p208
      %p210 = pneg %p209
      // Predicated region
      $region9: #{lstm_predictor_forward.1} parent=5 // pred_check
        _
      $region10: #{lstm_predictor_forward.1} parent=5 // pred_check_branch
        %212 = sbr.rel (%p209) target = $region12
      $region11: #{lstm_predictor_forward.1} parent=5 // pred_region
        %s213 = ssub.s32 %s16, 1
        // Predicated region
        $region13: #{lstm_predictor_forward.1} parent=11 // pred_check
          %p214 = pneg %p89
        $region14: #{lstm_predictor_forward.1} parent=11 // pred_check_branch
          %216 = sbr.rel (%p214) target = $region16
        $region15: #{lstm_predictor_forward.1} parent=11 // pred_region
          _
        $region16: #{lstm_predictor_forward.1} parent=11 // pred_fallthru
          _
        // Predicated region
        $region17: #{lstm_predictor_forward.1} parent=11 // pred_check
          %p217 = pneg %p110
        $region18: #{lstm_predictor_forward.1} parent=11 // pred_check_branch
          %219 = sbr.rel (%p217) target = $region20
        $region19: #{lstm_predictor_forward.1} parent=11 // pred_region
          _
        $region20: #{lstm_predictor_forward.1} parent=11 // pred_fallthru
          _
        // Predicated region
        $region21: #{lstm_predictor_forward.1} parent=11 // pred_check
          %p220 = pneg %p131
        $region22: #{lstm_predictor_forward.1} parent=11 // pred_check_branch
          %222 = sbr.rel (%p220) target = $region24
        $region23: #{lstm_predictor_forward.1} parent=11 // pred_region
          _
        $region24: #{lstm_predictor_forward.1} parent=11 // pred_fallthru
          _
        // Predicated region
        $region25: #{lstm_predictor_forward.1} parent=11 // pred_check
          %p223 = pneg %p152
        $region26: #{lstm_predictor_forward.1} parent=11 // pred_check_branch
          %225 = sbr.rel (%p223) target = $region28
        $region27: #{lstm_predictor_forward.1} parent=11 // pred_region
          _
        $region28: #{lstm_predictor_forward.1} parent=11 // pred_fallthru
          _
        // Predicated region
        $region29: #{lstm_predictor_forward.1} parent=11 // pred_check
          %p226 = pneg %p173
        $region30: #{lstm_predictor_forward.1} parent=11 // pred_check_branch
          %228 = sbr.rel (%p226) target = $region32
        $region31: #{lstm_predictor_forward.1} parent=11 // pred_region
          _
        $region32: #{lstm_predictor_forward.1} parent=11 // pred_fallthru
          _
      $region12: #{lstm_predictor_forward.1} parent=5 // pred_fallthru
        _
      %p229 = scmp.lt.s32.totalorder %s16, 2
      // Predicated region
      $region33: #{lstm_predictor_forward.1} parent=5 // pred_check
        %p230 = pneg %p229
      $region34: #{lstm_predictor_forward.1} parent=5 // pred_check_branch
        %232 = sbr.rel (%p230) target = $region36
      $region35: #{lstm_predictor_forward.1} parent=5 // pred_region
        // Predicated region
        $region37: #{lstm_predictor_forward.1} parent=35 // pred_check
          %p233 = pneg %p36
        $region38: #{lstm_predictor_forward.1} parent=35 // pred_check_branch
          %235 = sbr.rel (%p233) target = $region40
        $region39: #{lstm_predictor_forward.1} parent=35 // pred_region
          %p236 = scmp.lt.s32.totalorder %s16, 1
          %s237 = scalar_select %p236, %s16, 1
          %s238 = smul.addr %s237, 8
          %s239 = smul.addr %s238, 4
          %s240 = scalar_lea.vmem %s0, %s239
        $region40: #{lstm_predictor_forward.1} parent=35 // pred_fallthru
          _
        // Predicated region
        $region41: #{lstm_predictor_forward.1} parent=35 // pred_check
          %p241 = pneg %p62
        $region42: #{lstm_predictor_forward.1} parent=35 // pred_check_branch
          %243 = sbr.rel (%p241) target = $region44
        $region43: #{lstm_predictor_forward.1} parent=35 // pred_region
          %p244 = scmp.lt.s32.totalorder %s16, 1
          %s245 = scalar_select %p244, %s16, 1
          %s246 = smul.addr %s245, 8
          %s247 = scalar_lea.vmem %s1, %s246
        $region44: #{lstm_predictor_forward.1} parent=35 // pred_fallthru
          _
      $region36: #{lstm_predictor_forward.1} parent=5 // pred_fallthru
        _
      %p248 = scmp.le.s32.totalorder 1, %s16
      %p249 = scmp.lt.s32.totalorder %s16, 3
      %p250 = pnand %p248, %p249
      %p251 = pneg %p250
      // Predicated region
      $region45: #{lstm_predictor_forward.1} parent=5 // pred_check
        _
      $region46: #{lstm_predictor_forward.1} parent=5 // pred_check_branch
        %253 = sbr.rel (%p250) target = $region48
      $region47: #{lstm_predictor_forward.1} parent=5 // pred_region
        %s254 = ssub.s32 %s16, 1
        %p255 = scmp.lt.s32.totalorder %s21, 1
        %s256 = scalar_select %p255, %s21, 1
        %s257 = smul.addr %s256, 8
        %s258 = smul.addr %s257, 4
        %s259 = scalar_lea.vmem %s0, %s258
        %p260 = pneg %p42
        %p261 = pneg %p39
        %p262 = scmp.lt.s32.totalorder %s21, 1
        %s263 = scalar_select %p262, %s21, 1
        %s264 = smul.addr %s263, 8
        %s265 = scalar_lea.vmem %s1, %s264
        %p266 = pneg %p68
        %p267 = pneg %p65
        %p268 = pneg %p89
        %p269 = pneg %p86
        %p270 = pneg %p110
        %p271 = pneg %p107
        %p272 = pneg %p131
        %p273 = pneg %p128
        %p274 = pneg %p152
        %p275 = pneg %p149
        %p276 = pneg %p173
        %p277 = pneg %p170
        %p278 = pneg %p199
        %p279 = pneg %p196
        %s280 = sand.u32 %s186, 1
        %s281 = scalar_lea.sflag [#allocation4], %s280
        %s282 = sand.u32 %s186, 1
        %s283 = smul.addr %s282, 16
        %s284 = scalar_lea.vmem [#allocation3], %s283
        %p285 = scmp.lt.s32.totalorder %s21, 1
        %s286 = scalar_select %p285, %s21, 1
        %s287 = smul.addr %s286, 8
        %s288 = smul.addr %s287, 4
        %s289 = scalar_lea.vmem %s0, %s288
        %p290 = scmp.lt.s32.totalorder %s21, 1
        %s291 = scalar_select %p290, %s21, 1
        %s292 = smul.addr %s291, 8
        %s293 = scalar_lea.vmem %s1, %s292
        %v295 = vld [vmem:[%s289] sm:$0xf]
        %v296 = vld [vmem:[%s289 + $0x4] sm:$0xf]
        %v297 = vld [vmem:[%s289 + $0x8] sm:$0xf]
        %v298 = vld [vmem:[%s289 + $0xc] sm:$0xf]
        %v299 = vld [vmem:[%s289 + $0x10] sm:$0xf]
        %v300 = vld [vmem:[%s289 + $0x14] sm:$0xf]
        %v301 = vld [vmem:[%s289 + $0x18] sm:$0xf]
        %v302 = vld [vmem:[%s289 + $0x1c] sm:$0xf]
        %v303 = vld [vmem:[%s2] sm:$0xff]
        %v304 = vld [vmem:[%s2 + $0x8] sm:$0xff]
        %v305 = vld [vmem:[%s2 + $0x10] sm:$0xff]
        %v306 = vld [vmem:[%s2 + $0x18] sm:$0xff]
        %v307 = vld [vmem:[%s2 + $0x20] sm:$0xff]
        %v308 = vld [vmem:[%s2 + $0x28] sm:$0xff]
        %v309 = vld [vmem:[%s2 + $0x30] sm:$0xff]
        %v310 = vld [vmem:[%s2 + $0x38] sm:$0xff]
        %v311 = vld [vmem:[%s2 + $0x40] sm:$0xff]
        %v312 = vld [vmem:[%s2 + $0x48] sm:$0xff]
        %v313 = vld [vmem:[%s2 + $0x50] sm:$0xff]
        %v314 = vld [vmem:[%s2 + $0x58] sm:$0xff]
        %v315 = vld [vmem:[%s2 + $0x60] sm:$0xff]
        %v316 = vld [vmem:[%s2 + $0x68] sm:$0xff]
        %v317 = vld [vmem:[%s2 + $0x70] sm:$0xff]
        %v318 = vld [vmem:[%s2 + $0x78] sm:$0xff]
        %v319 = vld [vmem:[%s2 + $0x80] sm:$0xff]
        %v320 = vld [vmem:[%s2 + $0x88] sm:$0xff]
        %v321 = vld [vmem:[%s2 + $0x90] sm:$0xff]
        %v322 = vld [vmem:[%s2 + $0x98] sm:$0xff]
        %v323 = vld [vmem:[%s2 + $0xa0] sm:$0xff]
        %v324 = vld [vmem:[%s2 + $0xa8] sm:$0xff]
        %v325 = vld [vmem:[%s2 + $0xb0] sm:$0xff]
        %v326 = vld [vmem:[%s2 + $0xb8] sm:$0xff]
        %v327 = vld [vmem:[%s2 + $0xc0] sm:$0xff]
        %v328 = vld [vmem:[%s2 + $0xc8] sm:$0xff]
        %v329 = vld [vmem:[%s2 + $0xd0] sm:$0xff]
        %v330 = vld [vmem:[%s2 + $0xd8] sm:$0xff]
        %v331 = vld [vmem:[%s2 + $0xe0] sm:$0xff]
        %v332 = vld [vmem:[%s2 + $0xe8] sm:$0xff]
        %v333 = vld [vmem:[%s2 + $0xf0] sm:$0xff]
        %v334 = vld [vmem:[%s2 + $0xf8] sm:$0xff]
        %v335 = vld [vmem:[%s2 + $0x100] sm:$0xff]
        %v336 = vld [vmem:[%s2 + $0x108] sm:$0xff]
        %v337 = vld [vmem:[%s2 + $0x110] sm:$0xff]
        %v338 = vld [vmem:[%s2 + $0x118] sm:$0xff]
        %v339 = vld [vmem:[%s2 + $0x120] sm:$0xff]
        %v340 = vld [vmem:[%s2 + $0x128] sm:$0xff]
        %v341 = vld [vmem:[%s2 + $0x130] sm:$0xff]
        %v342 = vld [vmem:[%s2 + $0x138] sm:$0xff]
        %v343 = vld [vmem:[%s2 + $0x140] sm:$0xff]
        %v344 = vld [vmem:[%s2 + $0x148] sm:$0xff]
        %v345 = vld [vmem:[%s2 + $0x150] sm:$0xff]
        %v346 = vld [vmem:[%s2 + $0x158] sm:$0xff]
        %v347 = vld [vmem:[%s2 + $0x160] sm:$0xff]
        %v348 = vld [vmem:[%s2 + $0x168] sm:$0xff]
        %v349 = vld [vmem:[%s2 + $0x170] sm:$0xff]
        %v350 = vld [vmem:[%s2 + $0x178] sm:$0xff]
        %v351 = vld [vmem:[%s2 + $0x180] sm:$0xff]
        %v352 = vld [vmem:[%s2 + $0x188] sm:$0xff]
        %v353 = vld [vmem:[%s2 + $0x190] sm:$0xff]
        %v354 = vld [vmem:[%s2 + $0x198] sm:$0xff]
        %v355 = vld [vmem:[%s2 + $0x1a0] sm:$0xff]
        %v356 = vld [vmem:[%s2 + $0x1a8] sm:$0xff]
        %v357 = vld [vmem:[%s2 + $0x1b0] sm:$0xff]
        %v358 = vld [vmem:[%s2 + $0x1b8] sm:$0xff]
        %v359 = vld [vmem:[%s2 + $0x1c0] sm:$0xff]
        %v360 = vld [vmem:[%s2 + $0x1c8] sm:$0xff]
        %v361 = vld [vmem:[%s2 + $0x1d0] sm:$0xff]
        %v362 = vld [vmem:[%s2 + $0x1d8] sm:$0xff]
        %v363 = vld [vmem:[%s2 + $0x1e0] sm:$0xff]
        %v364 = vld [vmem:[%s2 + $0x1e8] sm:$0xff]
        %v365 = vld [vmem:[%s2 + $0x1f0] sm:$0xff]
        %v366 = vld [vmem:[%s2 + $0x1f8] sm:$0xff]
        %v367 = vld [vmem:[%s4] sm:$0xff]
        %v369 = vlaneseq
        %v370 = vshrl.u32 %v369, 7
        %v371 = vsub.s32 0, %v370
        %v372 = vrot.slane %v367, %v371
        %v373 = vlaneseq
        %v374 = vshrl.u32 %v373, 7
        %v375 = vsub.s32 1, %v374
        %v376 = vrot.slane %v367, %v375
        %v377 = vlaneseq
        %v378 = vshrl.u32 %v377, 7
        %v379 = vsub.s32 2, %v378
        %v380 = vrot.slane %v367, %v379
        %v381 = vlaneseq
        %v382 = vshrl.u32 %v381, 7
        %v383 = vsub.s32 3, %v382
        %v384 = vrot.slane %v367, %v383
        %v385 = vlaneseq
        %v386 = vshrl.u32 %v385, 7
        %v387 = vsub.s32 4, %v386
        %v388 = vrot.slane %v367, %v387
        %v389 = vlaneseq
        %v390 = vshrl.u32 %v389, 7
        %v391 = vsub.s32 5, %v390
        %v392 = vrot.slane %v367, %v391
        %v393 = vlaneseq
        %v394 = vshrl.u32 %v393, 7
        %v395 = vsub.s32 6, %v394
        %v396 = vrot.slane %v367, %v395
        %v397 = vlaneseq
        %v398 = vshrl.u32 %v397, 7
        %v399 = vsub.s32 7, %v398
        %v400 = vrot.slane %v367, %v399
        %v417 = vunpack.c.l.b16 %v295
        %v418 = vunpack.c.l.b16 %v296
        %v419 = vunpack.c.l.b16 %v297
        %v420 = vunpack.c.l.b16 %v298
        %v421 = vunpack.c.l.b16 %v299
        %v422 = vunpack.c.l.b16 %v300
        %v423 = vunpack.c.l.b16 %v301
        %v424 = vunpack.c.l.b16 %v302
        %v425 = vpack.c.b16 %v418, %v417
        %v426 = vpack.c.b16 %v420, %v419
        %v427 = vpack.c.b16 %v422, %v421
        %v428 = vpack.c.b16 %v424, %v423
        %v497 = vunpack.c.l.b16 %v303
        %v498 = vunpack.c.h.b16 %v303
        %v499 = vunpack.c.l.b16 %v304
        %v500 = vunpack.c.h.b16 %v304
        %v501 = vunpack.c.l.b16 %v305
        %v502 = vunpack.c.h.b16 %v305
        %v503 = vunpack.c.l.b16 %v306
        %v504 = vunpack.c.h.b16 %v306
        %v505 = vunpack.c.l.b16 %v307
        %v506 = vunpack.c.h.b16 %v307
        %v507 = vunpack.c.l.b16 %v308
        %v508 = vunpack.c.h.b16 %v308
        %v509 = vunpack.c.l.b16 %v309
        %v510 = vunpack.c.h.b16 %v309
        %v511 = vunpack.c.l.b16 %v310
        %v512 = vunpack.c.h.b16 %v310
        %v513 = vunpack.c.l.b16 %v311
        %v514 = vunpack.c.h.b16 %v311
        %v515 = vunpack.c.l.b16 %v312
        %v516 = vunpack.c.h.b16 %v312
        %v517 = vunpack.c.l.b16 %v313
        %v518 = vunpack.c.h.b16 %v313
        %v519 = vunpack.c.l.b16 %v314
        %v520 = vunpack.c.h.b16 %v314
        %v521 = vunpack.c.l.b16 %v315
        %v522 = vunpack.c.h.b16 %v315
        %v523 = vunpack.c.l.b16 %v316
        %v524 = vunpack.c.h.b16 %v316
        %v525 = vunpack.c.l.b16 %v317
        %v526 = vunpack.c.h.b16 %v317
        %v527 = vunpack.c.l.b16 %v318
        %v528 = vunpack.c.h.b16 %v318
        %v529 = vunpack.c.l.b16 %v319
        %v530 = vunpack.c.h.b16 %v319
        %v531 = vunpack.c.l.b16 %v320
        %v532 = vunpack.c.h.b16 %v320
        %v533 = vunpack.c.l.b16 %v321
        %v534 = vunpack.c.h.b16 %v321
        %v535 = vunpack.c.l.b16 %v322
        %v536 = vunpack.c.h.b16 %v322
        %v537 = vunpack.c.l.b16 %v323
        %v538 = vunpack.c.h.b16 %v323
        %v539 = vunpack.c.l.b16 %v324
        %v540 = vunpack.c.h.b16 %v324
        %v541 = vunpack.c.l.b16 %v325
        %v542 = vunpack.c.h.b16 %v325
        %v543 = vunpack.c.l.b16 %v326
        %v544 = vunpack.c.h.b16 %v326
        %v545 = vunpack.c.l.b16 %v327
        %v546 = vunpack.c.h.b16 %v327
        %v547 = vunpack.c.l.b16 %v328
        %v548 = vunpack.c.h.b16 %v328
        %v549 = vunpack.c.l.b16 %v329
        %v550 = vunpack.c.h.b16 %v329
        %v551 = vunpack.c.l.b16 %v330
        %v552 = vunpack.c.h.b16 %v330
        %v553 = vunpack.c.l.b16 %v331
        %v554 = vunpack.c.h.b16 %v331
        %v555 = vunpack.c.l.b16 %v332
        %v556 = vunpack.c.h.b16 %v332
        %v557 = vunpack.c.l.b16 %v333
        %v558 = vunpack.c.h.b16 %v333
        %v559 = vunpack.c.l.b16 %v334
        %v560 = vunpack.c.h.b16 %v334
        %v561 = vunpack.c.l.b16 %v335
        %v562 = vunpack.c.h.b16 %v335
        %v563 = vunpack.c.l.b16 %v336
        %v564 = vunpack.c.h.b16 %v336
        %v565 = vunpack.c.l.b16 %v337
        %v566 = vunpack.c.h.b16 %v337
        %v567 = vunpack.c.l.b16 %v338
        %v568 = vunpack.c.h.b16 %v338
        %v569 = vunpack.c.l.b16 %v339
        %v570 = vunpack.c.h.b16 %v339
        %v571 = vunpack.c.l.b16 %v340
        %v572 = vunpack.c.h.b16 %v340
        %v573 = vunpack.c.l.b16 %v341
        %v574 = vunpack.c.h.b16 %v341
        %v575 = vunpack.c.l.b16 %v342
        %v576 = vunpack.c.h.b16 %v342
        %v577 = vunpack.c.l.b16 %v343
        %v578 = vunpack.c.h.b16 %v343
        %v579 = vunpack.c.l.b16 %v344
        %v580 = vunpack.c.h.b16 %v344
        %v581 = vunpack.c.l.b16 %v345
        %v582 = vunpack.c.h.b16 %v345
        %v583 = vunpack.c.l.b16 %v346
        %v584 = vunpack.c.h.b16 %v346
        %v585 = vunpack.c.l.b16 %v347
        %v586 = vunpack.c.h.b16 %v347
        %v587 = vunpack.c.l.b16 %v348
        %v588 = vunpack.c.h.b16 %v348
        %v589 = vunpack.c.l.b16 %v349
        %v590 = vunpack.c.h.b16 %v349
        %v591 = vunpack.c.l.b16 %v350
        %v592 = vunpack.c.h.b16 %v350
        %v593 = vunpack.c.l.b16 %v351
        %v594 = vunpack.c.h.b16 %v351
        %v595 = vunpack.c.l.b16 %v352
        %v596 = vunpack.c.h.b16 %v352
        %v597 = vunpack.c.l.b16 %v353
        %v598 = vunpack.c.h.b16 %v353
        %v599 = vunpack.c.l.b16 %v354
        %v600 = vunpack.c.h.b16 %v354
        %v601 = vunpack.c.l.b16 %v355
        %v602 = vunpack.c.h.b16 %v355
        %v603 = vunpack.c.l.b16 %v356
        %v604 = vunpack.c.h.b16 %v356
        %v605 = vunpack.c.l.b16 %v357
        %v606 = vunpack.c.h.b16 %v357
        %v607 = vunpack.c.l.b16 %v358
        %v608 = vunpack.c.h.b16 %v358
        %v609 = vunpack.c.l.b16 %v359
        %v610 = vunpack.c.h.b16 %v359
        %v611 = vunpack.c.l.b16 %v360
        %v612 = vunpack.c.h.b16 %v360
        %v613 = vunpack.c.l.b16 %v361
        %v614 = vunpack.c.h.b16 %v361
        %v615 = vunpack.c.l.b16 %v362
        %v616 = vunpack.c.h.b16 %v362
        %v617 = vunpack.c.l.b16 %v363
        %v618 = vunpack.c.h.b16 %v363
        %v619 = vunpack.c.l.b16 %v364
        %v620 = vunpack.c.h.b16 %v364
        %v621 = vunpack.c.l.b16 %v365
        %v622 = vunpack.c.h.b16 %v365
        %v623 = vunpack.c.l.b16 %v366
        %v624 = vunpack.c.h.b16 %v366
        %v625 = vpack.c.b16 %v505, %v497
        %v626 = vpack.c.b16 %v506, %v498
        %v627 = vpack.c.b16 %v507, %v499
        %v628 = vpack.c.b16 %v508, %v500
        %v629 = vpack.c.b16 %v509, %v501
        %v630 = vpack.c.b16 %v510, %v502
        %v631 = vpack.c.b16 %v511, %v503
        %v632 = vpack.c.b16 %v512, %v504
        %v633 = vpack.c.b16 %v521, %v513
        %v634 = vpack.c.b16 %v522, %v514
        %v635 = vpack.c.b16 %v523, %v515
        %v636 = vpack.c.b16 %v524, %v516
        %v637 = vpack.c.b16 %v525, %v517
        %v638 = vpack.c.b16 %v526, %v518
        %v639 = vpack.c.b16 %v527, %v519
        %v640 = vpack.c.b16 %v528, %v520
        %v641 = vpack.c.b16 %v537, %v529
        %v642 = vpack.c.b16 %v538, %v530
        %v643 = vpack.c.b16 %v539, %v531
        %v644 = vpack.c.b16 %v540, %v532
        %v645 = vpack.c.b16 %v541, %v533
        %v646 = vpack.c.b16 %v542, %v534
        %v647 = vpack.c.b16 %v543, %v535
        %v648 = vpack.c.b16 %v544, %v536
        %v649 = vpack.c.b16 %v553, %v545
        %v650 = vpack.c.b16 %v554, %v546
        %v651 = vpack.c.b16 %v555, %v547
        %v652 = vpack.c.b16 %v556, %v548
        %v653 = vpack.c.b16 %v557, %v549
        %v654 = vpack.c.b16 %v558, %v550
        %v655 = vpack.c.b16 %v559, %v551
        %v656 = vpack.c.b16 %v560, %v552
        %v657 = vpack.c.b16 %v569, %v561
        %v658 = vpack.c.b16 %v570, %v562
        %v659 = vpack.c.b16 %v571, %v563
        %v660 = vpack.c.b16 %v572, %v564
        %v661 = vpack.c.b16 %v573, %v565
        %v662 = vpack.c.b16 %v574, %v566
        %v663 = vpack.c.b16 %v575, %v567
        %v664 = vpack.c.b16 %v576, %v568
        %v665 = vpack.c.b16 %v585, %v577
        %v666 = vpack.c.b16 %v586, %v578
        %v667 = vpack.c.b16 %v587, %v579
        %v668 = vpack.c.b16 %v588, %v580
        %v669 = vpack.c.b16 %v589, %v581
        %v670 = vpack.c.b16 %v590, %v582
        %v671 = vpack.c.b16 %v591, %v583
        %v672 = vpack.c.b16 %v592, %v584
        %v673 = vpack.c.b16 %v601, %v593
        %v674 = vpack.c.b16 %v602, %v594
        %v675 = vpack.c.b16 %v603, %v595
        %v676 = vpack.c.b16 %v604, %v596
        %v677 = vpack.c.b16 %v605, %v597
        %v678 = vpack.c.b16 %v606, %v598
        %v679 = vpack.c.b16 %v607, %v599
        %v680 = vpack.c.b16 %v608, %v600
        %v681 = vpack.c.b16 %v617, %v609
        %v682 = vpack.c.b16 %v618, %v610
        %v683 = vpack.c.b16 %v619, %v611
        %v684 = vpack.c.b16 %v620, %v612
        %v685 = vpack.c.b16 %v621, %v613
        %v686 = vpack.c.b16 %v622, %v614
        %v687 = vpack.c.b16 %v623, %v615
        %v688 = vpack.c.b16 %v624, %v616
        %753 = vmatprep.subr.bf16.mxu0 %v626
        %754 = vmatpush1.bf16.msra.mxu0 %v625
        %755 = vmatprep.subr.bf16.mxu0 %v634
        %756 = vmatpush1.bf16.msra.mxu0 %v633
        %757 = vmatprep.subr.bf16.mxu0 %v642
        %758 = vmatpush1.bf16.msra.mxu0 %v641
        %759 = vmatprep.subr.bf16.mxu0 %v650
        %760 = vmatpush1.bf16.msra.mxu0 %v649
        %761 = vmatprep.subr.bf16.mxu0 %v658
        %762 = vmatpush1.bf16.msra.mxu0 %v657
        %763 = vmatprep.subr.bf16.mxu0 %v666
        %764 = vmatpush1.bf16.msra.mxu0 %v665
        %765 = vmatprep.subr.bf16.mxu0 %v674
        %766 = vmatpush1.bf16.msra.mxu0 %v673
        %767 = vmatprep.subr.bf16.mxu0 %v682
        %768 = vmatpush1.bf16.msra.mxu0 %v681
        %769 = vmatprep.subr.bf16.mxu0 0
        %770 = vmatpush1.bf16.msra.mxu0 0
        %771 = vmatprep.subr.bf16.mxu0 0
        %772 = vmatpush1.bf16.msra.mxu0 0
        %773 = vmatprep.subr.bf16.mxu0 0
        %774 = vmatpush1.bf16.msra.mxu0 0
        %775 = vmatprep.subr.bf16.mxu0 0
        %776 = vmatpush1.bf16.msra.mxu0 0
        %777 = vmatprep.subr.bf16.mxu0 0
        %778 = vmatpush1.bf16.msra.mxu0 0
        %779 = vmatprep.subr.bf16.mxu0 0
        %780 = vmatpush1.bf16.msra.mxu0 0
        %781 = vmatprep.subr.bf16.mxu0 0
        %782 = vmatpush1.bf16.msra.mxu0 0
        %783 = vmatprep.subr.bf16.mxu0 0
        %784 = vmatpush1.bf16.msra.mxu0 0
        %785 = vmatprep.mubr.bf16.mxu0 0
        %786 = vmatmul.mubr.bf16.gmra.mrb[0].mxu0 %v425
        %v787 = vpop.f32.mrb[0].mxu0
        %v788 = vadd.f32 %v372, %v787
        %v789 = vpop.f32.mrb[0].mxu0
        %v790 = vadd.f32 %v376, %v789
        %v791 = vpop.f32.mrb[0].mxu0
        %v792 = vadd.f32 %v372, %v791
        %v793 = vpop.f32.mrb[0].mxu0
        %v794 = vadd.f32 %v376, %v793
        %795 = vmatprep.mubr.bf16.mxu0 0
        %796 = vmatmul.mubr.bf16.gmra.mrb[0].mxu0 %v426
        %v797 = vpop.f32.mrb[0].mxu0
        %v798 = vadd.f32 %v372, %v797
        %v799 = vpop.f32.mrb[0].mxu0
        %v800 = vadd.f32 %v376, %v799
        %v801 = vpop.f32.mrb[0].mxu0
        %v802 = vadd.f32 %v372, %v801
        %v803 = vpop.f32.mrb[0].mxu0
        %v804 = vadd.f32 %v376, %v803
        %805 = vmatprep.mubr.bf16.mxu0 0
        %806 = vmatmul.mubr.bf16.gmra.mrb[0].mxu0 %v427
        %v807 = vpop.f32.mrb[0].mxu0
        %v808 = vadd.f32 %v372, %v807
        %v809 = vpop.f32.mrb[0].mxu0
        %v810 = vadd.f32 %v376, %v809
        %v811 = vpop.f32.mrb[0].mxu0
        %v812 = vadd.f32 %v372, %v811
        %v813 = vpop.f32.mrb[0].mxu0
        %v814 = vadd.f32 %v376, %v813
        %815 = vmatprep.mubr.bf16.mxu0 0
        %816 = vmatmul.mubr.bf16.gmra.mrb[0].mxu0 %v428
        %v817 = vpop.f32.mrb[0].mxu0
        %v818 = vadd.f32 %v372, %v817
        %v819 = vpop.f32.mrb[0].mxu0
        %v820 = vadd.f32 %v376, %v819
        %v821 = vpop.f32.mrb[0].mxu0
        %v822 = vadd.f32 %v372, %v821
        %v823 = vpop.f32.mrb[0].mxu0
        %v824 = vadd.f32 %v376, %v823
        %825 = vdwg.mxu0
        %826 = vmatprep.subr.bf16.mxu0 %v628
        %827 = vmatpush1.bf16.msra.mxu0 %v627
        %828 = vmatprep.subr.bf16.mxu0 %v636
        %829 = vmatpush1.bf16.msra.mxu0 %v635
        %830 = vmatprep.subr.bf16.mxu0 %v644
        %831 = vmatpush1.bf16.msra.mxu0 %v643
        %832 = vmatprep.subr.bf16.mxu0 %v652
        %833 = vmatpush1.bf16.msra.mxu0 %v651
        %834 = vmatprep.subr.bf16.mxu0 %v660
        %835 = vmatpush1.bf16.msra.mxu0 %v659
        %836 = vmatprep.subr.bf16.mxu0 %v668
        %837 = vmatpush1.bf16.msra.mxu0 %v667
        %838 = vmatprep.subr.bf16.mxu0 %v676
        %839 = vmatpush1.bf16.msra.mxu0 %v675
        %840 = vmatprep.subr.bf16.mxu0 %v684
        %841 = vmatpush1.bf16.msra.mxu0 %v683
        %842 = vmatprep.subr.bf16.mxu0 0
        %843 = vmatpush1.bf16.msra.mxu0 0
        %844 = vmatprep.subr.bf16.mxu0 0
        %845 = vmatpush1.bf16.msra.mxu0 0
        %846 = vmatprep.subr.bf16.mxu0 0
        %847 = vmatpush1.bf16.msra.mxu0 0
        %848 = vmatprep.subr.bf16.mxu0 0
        %849 = vmatpush1.bf16.msra.mxu0 0
        %850 = vmatprep.subr.bf16.mxu0 0
        %851 = vmatpush1.bf16.msra.mxu0 0
        %852 = vmatprep.subr.bf16.mxu0 0
        %853 = vmatpush1.bf16.msra.mxu0 0
        %854 = vmatprep.subr.bf16.mxu0 0
        %855 = vmatpush1.bf16.msra.mxu0 0
        %856 = vmatprep.subr.bf16.mxu0 0
        %857 = vmatpush1.bf16.msra.mxu0 0
        %858 = vmatprep.mubr.bf16.mxu0 0
        %859 = vmatmul.mubr.bf16.gmra.mrb[0].mxu0 %v425
        %v860 = vpop.f32.mrb[0].mxu0
        %v861 = vadd.f32 %v380, %v860
        %v862 = vpop.f32.mrb[0].mxu0
        %v863 = vadd.f32 %v384, %v862
        %v864 = vpop.f32.mrb[0].mxu0
        %v865 = vadd.f32 %v380, %v864
        %v866 = vpop.f32.mrb[0].mxu0
        %v867 = vadd.f32 %v384, %v866
        %868 = vmatprep.mubr.bf16.mxu0 0
        %869 = vmatmul.mubr.bf16.gmra.mrb[0].mxu0 %v426
        %v870 = vpop.f32.mrb[0].mxu0
        %v871 = vadd.f32 %v380, %v870
        %v872 = vpop.f32.mrb[0].mxu0
        %v873 = vadd.f32 %v384, %v872
        %v874 = vpop.f32.mrb[0].mxu0
        %v875 = vadd.f32 %v380, %v874
        %v876 = vpop.f32.mrb[0].mxu0
        %v877 = vadd.f32 %v384, %v876
        %878 = vmatprep.mubr.bf16.mxu0 0
        %879 = vmatmul.mubr.bf16.gmra.mrb[0].mxu0 %v427
        %v880 = vpop.f32.mrb[0].mxu0
        %v881 = vadd.f32 %v380, %v880
        %v882 = vpop.f32.mrb[0].mxu0
        %v883 = vadd.f32 %v384, %v882
        %v884 = vpop.f32.mrb[0].mxu0
        %v885 = vadd.f32 %v380, %v884
        %v886 = vpop.f32.mrb[0].mxu0
        %v887 = vadd.f32 %v384, %v886
        %888 = vmatprep.mubr.bf16.mxu0 0
        %889 = vmatmul.mubr.bf16.gmra.mrb[0].mxu0 %v428
        %v890 = vpop.f32.mrb[0].mxu0
        %v891 = vadd.f32 %v380, %v890
        %v892 = vpop.f32.mrb[0].mxu0
        %v893 = vadd.f32 %v384, %v892
        %v894 = vpop.f32.mrb[0].mxu0
        %v895 = vadd.f32 %v380, %v894
        %v896 = vpop.f32.mrb[0].mxu0
        %v897 = vadd.f32 %v384, %v896
        %898 = vdwg.mxu0
        %899 = vmatprep.subr.bf16.mxu0 %v630
        %900 = vmatpush1.bf16.msra.mxu0 %v629
        %901 = vmatprep.subr.bf16.mxu0 %v638
        %902 = vmatpush1.bf16.msra.mxu0 %v637
        %903 = vmatprep.subr.bf16.mxu0 %v646
        %904 = vmatpush1.bf16.msra.mxu0 %v645
        %905 = vmatprep.subr.bf16.mxu0 %v654
        %906 = vmatpush1.bf16.msra.mxu0 %v653
        %907 = vmatprep.subr.bf16.mxu0 %v662
        %908 = vmatpush1.bf16.msra.mxu0 %v661
        %909 = vmatprep.subr.bf16.mxu0 %v670
        %910 = vmatpush1.bf16.msra.mxu0 %v669
        %911 = vmatprep.subr.bf16.mxu0 %v678
        %912 = vmatpush1.bf16.msra.mxu0 %v677
        %913 = vmatprep.subr.bf16.mxu0 %v686
        %914 = vmatpush1.bf16.msra.mxu0 %v685
        %915 = vmatprep.subr.bf16.mxu0 0
        %916 = vmatpush1.bf16.msra.mxu0 0
        %917 = vmatprep.subr.bf16.mxu0 0
        %918 = vmatpush1.bf16.msra.mxu0 0
        %919 = vmatprep.subr.bf16.mxu0 0
        %920 = vmatpush1.bf16.msra.mxu0 0
        %921 = vmatprep.subr.bf16.mxu0 0
        %922 = vmatpush1.bf16.msra.mxu0 0
        %923 = vmatprep.subr.bf16.mxu0 0
        %924 = vmatpush1.bf16.msra.mxu0 0
        %925 = vmatprep.subr.bf16.mxu0 0
        %926 = vmatpush1.bf16.msra.mxu0 0
        %927 = vmatprep.subr.bf16.mxu0 0
        %928 = vmatpush1.bf16.msra.mxu0 0
        %929 = vmatprep.subr.bf16.mxu0 0
        %930 = vmatpush1.bf16.msra.mxu0 0
        %931 = vmatprep.mubr.bf16.mxu0 0
        %932 = vmatmul.mubr.bf16.gmra.mrb[0].mxu0 %v425
        %v933 = vpop.f32.mrb[0].mxu0
        %v934 = vadd.f32 %v388, %v933
        %v935 = vpop.f32.mrb[0].mxu0
        %v936 = vadd.f32 %v392, %v935
        %v937 = vpop.f32.mrb[0].mxu0
        %v938 = vadd.f32 %v388, %v937
        %v939 = vpop.f32.mrb[0].mxu0
        %v940 = vadd.f32 %v392, %v939
        %941 = vmatprep.mubr.bf16.mxu0 0
        %942 = vmatmul.mubr.bf16.gmra.mrb[0].mxu0 %v426
        %v943 = vpop.f32.mrb[0].mxu0
        %v944 = vadd.f32 %v388, %v943
        %v945 = vpop.f32.mrb[0].mxu0
        %v946 = vadd.f32 %v392, %v945
        %v947 = vpop.f32.mrb[0].mxu0
        %v948 = vadd.f32 %v388, %v947
        %v949 = vpop.f32.mrb[0].mxu0
        %v950 = vadd.f32 %v392, %v949
        %951 = vmatprep.mubr.bf16.mxu0 0
        %952 = vmatmul.mubr.bf16.gmra.mrb[0].mxu0 %v427
        %v953 = vpop.f32.mrb[0].mxu0
        %v954 = vadd.f32 %v388, %v953
        %v955 = vpop.f32.mrb[0].mxu0
        %v956 = vadd.f32 %v392, %v955
        %v957 = vpop.f32.mrb[0].mxu0
        %v958 = vadd.f32 %v388, %v957
        %v959 = vpop.f32.mrb[0].mxu0
        %v960 = vadd.f32 %v392, %v959
        %961 = vmatprep.mubr.bf16.mxu0 0
        %962 = vmatmul.mubr.bf16.gmra.mrb[0].mxu0 %v428
        %v963 = vpop.f32.mrb[0].mxu0
        %v964 = vadd.f32 %v388, %v963
        %v965 = vpop.f32.mrb[0].mxu0
        %v966 = vadd.f32 %v392, %v965
        %v967 = vpop.f32.mrb[0].mxu0
        %v968 = vadd.f32 %v388, %v967
        %v969 = vpop.f32.mrb[0].mxu0
        %v970 = vadd.f32 %v392, %v969
        %971 = vdwg.mxu0
        %972 = vmatprep.subr.bf16.mxu0 %v632
        %973 = vmatpush1.bf16.msra.mxu0 %v631
        %974 = vmatprep.subr.bf16.mxu0 %v640
        %975 = vmatpush1.bf16.msra.mxu0 %v639
        %976 = vmatprep.subr.bf16.mxu0 %v648
        %977 = vmatpush1.bf16.msra.mxu0 %v647
        %978 = vmatprep.subr.bf16.mxu0 %v656
        %979 = vmatpush1.bf16.msra.mxu0 %v655
        %980 = vmatprep.subr.bf16.mxu0 %v664
        %981 = vmatpush1.bf16.msra.mxu0 %v663
        %982 = vmatprep.subr.bf16.mxu0 %v672
        %983 = vmatpush1.bf16.msra.mxu0 %v671
        %984 = vmatprep.subr.bf16.mxu0 %v680
        %985 = vmatpush1.bf16.msra.mxu0 %v679
        %986 = vmatprep.subr.bf16.mxu0 %v688
        %987 = vmatpush1.bf16.msra.mxu0 %v687
        %988 = vmatprep.subr.bf16.mxu0 0
        %989 = vmatpush1.bf16.msra.mxu0 0
        %990 = vmatprep.subr.bf16.mxu0 0
        %991 = vmatpush1.bf16.msra.mxu0 0
        %992 = vmatprep.subr.bf16.mxu0 0
        %993 = vmatpush1.bf16.msra.mxu0 0
        %994 = vmatprep.subr.bf16.mxu0 0
        %995 = vmatpush1.bf16.msra.mxu0 0
        %996 = vmatprep.subr.bf16.mxu0 0
        %997 = vmatpush1.bf16.msra.mxu0 0
        %998 = vmatprep.subr.bf16.mxu0 0
        %999 = vmatpush1.bf16.msra.mxu0 0
        %1000 = vmatprep.subr.bf16.mxu0 0
        %1001 = vmatpush1.bf16.msra.mxu0 0
        %1002 = vmatprep.subr.bf16.mxu0 0
        %1003 = vmatpush1.bf16.msra.mxu0 0
        %1004 = vmatprep.mubr.bf16.mxu0 0
        %1005 = vmatmul.mubr.bf16.gmra.mrb[0].mxu0 %v425
        %v1006 = vpop.f32.mrb[0].mxu0
        %v1007 = vadd.f32 %v396, %v1006
        %v1008 = vpop.f32.mrb[0].mxu0
        %v1009 = vadd.f32 %v400, %v1008
        %v1010 = vpop.f32.mrb[0].mxu0
        %v1011 = vadd.f32 %v396, %v1010
        %v1012 = vpop.f32.mrb[0].mxu0
        %v1013 = vadd.f32 %v400, %v1012
        %1014 = vmatprep.mubr.bf16.mxu0 0
        %1015 = vmatmul.mubr.bf16.gmra.mrb[0].mxu0 %v426
        %v1016 = vpop.f32.mrb[0].mxu0
        %v1017 = vadd.f32 %v396, %v1016
        %v1018 = vpop.f32.mrb[0].mxu0
        %v1019 = vadd.f32 %v400, %v1018
        %v1020 = vpop.f32.mrb[0].mxu0
        %v1021 = vadd.f32 %v396, %v1020
        %v1022 = vpop.f32.mrb[0].mxu0
        %v1023 = vadd.f32 %v400, %v1022
        %1024 = vmatprep.mubr.bf16.mxu0 0
        %1025 = vmatmul.mubr.bf16.gmra.mrb[0].mxu0 %v427
        %v1026 = vpop.f32.mrb[0].mxu0
        %v1027 = vadd.f32 %v396, %v1026
        %v1028 = vpop.f32.mrb[0].mxu0
        %v1029 = vadd.f32 %v400, %v1028
        %v1030 = vpop.f32.mrb[0].mxu0
        %v1031 = vadd.f32 %v396, %v1030
        %v1032 = vpop.f32.mrb[0].mxu0
        %v1033 = vadd.f32 %v400, %v1032
        %1034 = vmatprep.mubr.bf16.mxu0 0
        %1035 = vmatmul.mubr.bf16.gmra.mrb[0].mxu0 %v428
        %v1036 = vpop.f32.mrb[0].mxu0
        %v1037 = vadd.f32 %v396, %v1036
        %v1038 = vpop.f32.mrb[0].mxu0
        %v1039 = vadd.f32 %v400, %v1038
        %v1040 = vpop.f32.mrb[0].mxu0
        %v1041 = vadd.f32 %v396, %v1040
        %v1042 = vpop.f32.mrb[0].mxu0
        %v1043 = vadd.f32 %v400, %v1042
        %1044 = vdwg.mxu0
        %1045 = vst [vmem:[#allocation2] sm:$0xff] %v788
        %1046 = vst [vmem:[#allocation2 + $0x8] sm:$0xff] %v790
        %1047 = vst [vmem:[#allocation2 + $0x10] sm:$0xff] %v861
        %1048 = vst [vmem:[#allocation2 + $0x18] sm:$0xff] %v863
        %1049 = vst [vmem:[#allocation2 + $0x20] sm:$0xff] %v934
        %1050 = vst [vmem:[#allocation2 + $0x28] sm:$0xff] %v936
        %1051 = vst [vmem:[#allocation2 + $0x30] sm:$0xff] %v1007
        %1052 = vst [vmem:[#allocation2 + $0x38] sm:$0xff] %v1009
        %1053 = vst [vmem:[#allocation2 + $0x40] sm:$0xff] %v792
        %1054 = vst [vmem:[#allocation2 + $0x48] sm:$0xff] %v794
        %1055 = vst [vmem:[#allocation2 + $0x50] sm:$0xff] %v865
        %1056 = vst [vmem:[#allocation2 + $0x58] sm:$0xff] %v867
        %1057 = vst [vmem:[#allocation2 + $0x60] sm:$0xff] %v938
        %1058 = vst [vmem:[#allocation2 + $0x68] sm:$0xff] %v940
        %1059 = vst [vmem:[#allocation2 + $0x70] sm:$0xff] %v1011
        %1060 = vst [vmem:[#allocation2 + $0x78] sm:$0xff] %v1013
        %1061 = vst [vmem:[#allocation2 + $0x80] sm:$0xff] %v798
        %1062 = vst [vmem:[#allocation2 + $0x88] sm:$0xff] %v800
        %1063 = vst [vmem:[#allocation2 + $0x90] sm:$0xff] %v871
        %1064 = vst [vmem:[#allocation2 + $0x98] sm:$0xff] %v873
        %1065 = vst [vmem:[#allocation2 + $0xa0] sm:$0xff] %v944
        %1066 = vst [vmem:[#allocation2 + $0xa8] sm:$0xff] %v946
        %1067 = vst [vmem:[#allocation2 + $0xb0] sm:$0xff] %v1017
        %1068 = vst [vmem:[#allocation2 + $0xb8] sm:$0xff] %v1019
        %1069 = vst [vmem:[#allocation2 + $0xc0] sm:$0xff] %v802
        %1070 = vst [vmem:[#allocation2 + $0xc8] sm:$0xff] %v804
        %1071 = vst [vmem:[#allocation2 + $0xd0] sm:$0xff] %v875
        %1072 = vst [vmem:[#allocation2 + $0xd8] sm:$0xff] %v877
        %1073 = vst [vmem:[#allocation2 + $0xe0] sm:$0xff] %v948
        %1074 = vst [vmem:[#allocation2 + $0xe8] sm:$0xff] %v950
        %1075 = vst [vmem:[#allocation2 + $0xf0] sm:$0xff] %v1021
        %1076 = vst [vmem:[#allocation2 + $0xf8] sm:$0xff] %v1023
        %1077 = vst [vmem:[#allocation2 + $0x100] sm:$0xff] %v808
        %1078 = vst [vmem:[#allocation2 + $0x108] sm:$0xff] %v810
        %1079 = vst [vmem:[#allocation2 + $0x110] sm:$0xff] %v881
        %1080 = vst [vmem:[#allocation2 + $0x118] sm:$0xff] %v883
        %1081 = vst [vmem:[#allocation2 + $0x120] sm:$0xff] %v954
        %1082 = vst [vmem:[#allocation2 + $0x128] sm:$0xff] %v956
        %1083 = vst [vmem:[#allocation2 + $0x130] sm:$0xff] %v1027
        %1084 = vst [vmem:[#allocation2 + $0x138] sm:$0xff] %v1029
        %1085 = vst [vmem:[#allocation2 + $0x140] sm:$0xff] %v812
        %1086 = vst [vmem:[#allocation2 + $0x148] sm:$0xff] %v814
        %1087 = vst [vmem:[#allocation2 + $0x150] sm:$0xff] %v885
        %1088 = vst [vmem:[#allocation2 + $0x158] sm:$0xff] %v887
        %1089 = vst [vmem:[#allocation2 + $0x160] sm:$0xff] %v958
        %1090 = vst [vmem:[#allocation2 + $0x168] sm:$0xff] %v960
        %1091 = vst [vmem:[#allocation2 + $0x170] sm:$0xff] %v1031
        %1092 = vst [vmem:[#allocation2 + $0x178] sm:$0xff] %v1033
        %1093 = vst [vmem:[#allocation2 + $0x180] sm:$0xff] %v818
        %1094 = vst [vmem:[#allocation2 + $0x188] sm:$0xff] %v820
        %1095 = vst [vmem:[#allocation2 + $0x190] sm:$0xff] %v891
        %1096 = vst [vmem:[#allocation2 + $0x198] sm:$0xff] %v893
        %1097 = vst [vmem:[#allocation2 + $0x1a0] sm:$0xff] %v964
        %1098 = vst [vmem:[#allocation2 + $0x1a8] sm:$0xff] %v966
        %1099 = vst [vmem:[#allocation2 + $0x1b0] sm:$0xff] %v1037
        %1100 = vst [vmem:[#allocation2 + $0x1b8] sm:$0xff] %v1039
        %1101 = vst [vmem:[#allocation2 + $0x1c0] sm:$0xff] %v822
        %1102 = vst [vmem:[#allocation2 + $0x1c8] sm:$0xff] %v824
        %1103 = vst [vmem:[#allocation2 + $0x1d0] sm:$0xff] %v895
        %1104 = vst [vmem:[#allocation2 + $0x1d8] sm:$0xff] %v897
        %1105 = vst [vmem:[#allocation2 + $0x1e0] sm:$0xff] %v968
        %1106 = vst [vmem:[#allocation2 + $0x1e8] sm:$0xff] %v970
        %1107 = vst [vmem:[#allocation2 + $0x1f0] sm:$0xff] %v1041
        %1108 = vst [vmem:[#allocation2 + $0x1f8] sm:$0xff] %v1043
        %v1109 = vld [vmem:[%s293] sm:$0xff]
        %s1110 = smul.u32 0, 8
        %s1111 = smul.addr %s1110, 8
        %s1112 = scalar_lea.vmem [#allocation2], %s1111
        %v1113 = vld [vmem:[%s1112] sm:$0xff]
        %v1114 = vld [vmem:[%s1112 + $0x8] sm:$0xff]
        %v1115 = vld [vmem:[%s1112 + $0x10] sm:$0xff]
        %v1116 = vld [vmem:[%s1112 + $0x18] sm:$0xff]
        %v1117 = vld [vmem:[%s1112 + $0x20] sm:$0xff]
        %v1118 = vld [vmem:[%s1112 + $0x28] sm:$0xff]
        %v1119 = vld [vmem:[%s1112 + $0x30] sm:$0xff]
        %v1120 = vld [vmem:[%s1112 + $0x38] sm:$0xff]
        %v1121 = vld [vmem:[%s3] sm:$0xff]
        %v1122 = vld [vmem:[%s3 + $0x8] sm:$0xff]
        %v1123 = vld [vmem:[%s3 + $0x10] sm:$0xff]
        %v1124 = vld [vmem:[%s3 + $0x18] sm:$0xff]
        %v1125 = vld [vmem:[%s3 + $0x20] sm:$0xff]
        %v1126 = vld [vmem:[%s3 + $0x28] sm:$0xff]
        %v1127 = vld [vmem:[%s3 + $0x30] sm:$0xff]
        %v1128 = vld [vmem:[%s3 + $0x38] sm:$0xff]
        %v1129 = vld [vmem:[%s3 + $0x40] sm:$0xff]
        %v1130 = vld [vmem:[%s3 + $0x48] sm:$0xff]
        %v1131 = vld [vmem:[%s3 + $0x50] sm:$0xff]
        %v1132 = vld [vmem:[%s3 + $0x58] sm:$0xff]
        %v1133 = vld [vmem:[%s3 + $0x60] sm:$0xff]
        %v1134 = vld [vmem:[%s3 + $0x68] sm:$0xff]
        %v1135 = vld [vmem:[%s3 + $0x70] sm:$0xff]
        %v1136 = vld [vmem:[%s3 + $0x78] sm:$0xff]
        %v1137 = vld [vmem:[%s3 + $0x80] sm:$0xff]
        %v1138 = vld [vmem:[%s3 + $0x88] sm:$0xff]
        %v1139 = vld [vmem:[%s3 + $0x90] sm:$0xff]
        %v1140 = vld [vmem:[%s3 + $0x98] sm:$0xff]
        %v1141 = vld [vmem:[%s3 + $0xa0] sm:$0xff]
        %v1142 = vld [vmem:[%s3 + $0xa8] sm:$0xff]
        %v1143 = vld [vmem:[%s3 + $0xb0] sm:$0xff]
        %v1144 = vld [vmem:[%s3 + $0xb8] sm:$0xff]
        %v1145 = vld [vmem:[%s3 + $0xc0] sm:$0xff]
        %v1146 = vld [vmem:[%s3 + $0xc8] sm:$0xff]
        %v1147 = vld [vmem:[%s3 + $0xd0] sm:$0xff]
        %v1148 = vld [vmem:[%s3 + $0xd8] sm:$0xff]
        %v1149 = vld [vmem:[%s3 + $0xe0] sm:$0xff]
        %v1150 = vld [vmem:[%s3 + $0xe8] sm:$0xff]
        %v1151 = vld [vmem:[%s3 + $0xf0] sm:$0xff]
        %v1152 = vld [vmem:[%s3 + $0xf8] sm:$0xff]
        %v1153 = vld [vmem:[%s3 + $0x100] sm:$0xff]
        %v1154 = vld [vmem:[%s3 + $0x108] sm:$0xff]
        %v1155 = vld [vmem:[%s3 + $0x110] sm:$0xff]
        %v1156 = vld [vmem:[%s3 + $0x118] sm:$0xff]
        %v1157 = vld [vmem:[%s3 + $0x120] sm:$0xff]
        %v1158 = vld [vmem:[%s3 + $0x128] sm:$0xff]
        %v1159 = vld [vmem:[%s3 + $0x130] sm:$0xff]
        %v1160 = vld [vmem:[%s3 + $0x138] sm:$0xff]
        %v1161 = vld [vmem:[%s3 + $0x140] sm:$0xff]
        %v1162 = vld [vmem:[%s3 + $0x148] sm:$0xff]
        %v1163 = vld [vmem:[%s3 + $0x150] sm:$0xff]
        %v1164 = vld [vmem:[%s3 + $0x158] sm:$0xff]
        %v1165 = vld [vmem:[%s3 + $0x160] sm:$0xff]
        %v1166 = vld [vmem:[%s3 + $0x168] sm:$0xff]
        %v1167 = vld [vmem:[%s3 + $0x170] sm:$0xff]
        %v1168 = vld [vmem:[%s3 + $0x178] sm:$0xff]
        %v1169 = vld [vmem:[%s3 + $0x180] sm:$0xff]
        %v1170 = vld [vmem:[%s3 + $0x188] sm:$0xff]
        %v1171 = vld [vmem:[%s3 + $0x190] sm:$0xff]
        %v1172 = vld [vmem:[%s3 + $0x198] sm:$0xff]
        %v1173 = vld [vmem:[%s3 + $0x1a0] sm:$0xff]
        %v1174 = vld [vmem:[%s3 + $0x1a8] sm:$0xff]
        %v1175 = vld [vmem:[%s3 + $0x1b0] sm:$0xff]
        %v1176 = vld [vmem:[%s3 + $0x1b8] sm:$0xff]
        %v1177 = vld [vmem:[%s3 + $0x1c0] sm:$0xff]
        %v1178 = vld [vmem:[%s3 + $0x1c8] sm:$0xff]
        %v1179 = vld [vmem:[%s3 + $0x1d0] sm:$0xff]
        %v1180 = vld [vmem:[%s3 + $0x1d8] sm:$0xff]
        %v1181 = vld [vmem:[%s3 + $0x1e0] sm:$0xff]
        %v1182 = vld [vmem:[%s3 + $0x1e8] sm:$0xff]
        %v1183 = vld [vmem:[%s3 + $0x1f0] sm:$0xff]
        %v1184 = vld [vmem:[%s3 + $0x1f8] sm:$0xff]
        %v1185 = vld [vmem:[%s3 + $0x200] sm:$0xff]
        %v1186 = vld [vmem:[%s3 + $0x208] sm:$0xff]
        %v1187 = vld [vmem:[%s3 + $0x210] sm:$0xff]
        %v1188 = vld [vmem:[%s3 + $0x218] sm:$0xff]
        %v1189 = vld [vmem:[%s3 + $0x220] sm:$0xff]
        %v1190 = vld [vmem:[%s3 + $0x228] sm:$0xff]
        %v1191 = vld [vmem:[%s3 + $0x230] sm:$0xff]
        %v1192 = vld [vmem:[%s3 + $0x238] sm:$0xff]
        %v1193 = vld [vmem:[%s3 + $0x240] sm:$0xff]
        %v1194 = vld [vmem:[%s3 + $0x248] sm:$0xff]
        %v1195 = vld [vmem:[%s3 + $0x250] sm:$0xff]
        %v1196 = vld [vmem:[%s3 + $0x258] sm:$0xff]
        %v1197 = vld [vmem:[%s3 + $0x260] sm:$0xff]
        %v1198 = vld [vmem:[%s3 + $0x268] sm:$0xff]
        %v1199 = vld [vmem:[%s3 + $0x270] sm:$0xff]
        %v1200 = vld [vmem:[%s3 + $0x278] sm:$0xff]
        %v1201 = vld [vmem:[%s3 + $0x280] sm:$0xff]
        %v1202 = vld [vmem:[%s3 + $0x288] sm:$0xff]
        %v1203 = vld [vmem:[%s3 + $0x290] sm:$0xff]
        %v1204 = vld [vmem:[%s3 + $0x298] sm:$0xff]
        %v1205 = vld [vmem:[%s3 + $0x2a0] sm:$0xff]
        %v1206 = vld [vmem:[%s3 + $0x2a8] sm:$0xff]
        %v1207 = vld [vmem:[%s3 + $0x2b0] sm:$0xff]
        %v1208 = vld [vmem:[%s3 + $0x2b8] sm:$0xff]
        %v1209 = vld [vmem:[%s3 + $0x2c0] sm:$0xff]
        %v1210 = vld [vmem:[%s3 + $0x2c8] sm:$0xff]
        %v1211 = vld [vmem:[%s3 + $0x2d0] sm:$0xff]
        %v1212 = vld [vmem:[%s3 + $0x2d8] sm:$0xff]
        %v1213 = vld [vmem:[%s3 + $0x2e0] sm:$0xff]
        %v1214 = vld [vmem:[%s3 + $0x2e8] sm:$0xff]
        %v1215 = vld [vmem:[%s3 + $0x2f0] sm:$0xff]
        %v1216 = vld [vmem:[%s3 + $0x2f8] sm:$0xff]
        %v1217 = vld [vmem:[%s3 + $0x300] sm:$0xff]
        %v1218 = vld [vmem:[%s3 + $0x308] sm:$0xff]
        %v1219 = vld [vmem:[%s3 + $0x310] sm:$0xff]
        %v1220 = vld [vmem:[%s3 + $0x318] sm:$0xff]
        %v1221 = vld [vmem:[%s3 + $0x320] sm:$0xff]
        %v1222 = vld [vmem:[%s3 + $0x328] sm:$0xff]
        %v1223 = vld [vmem:[%s3 + $0x330] sm:$0xff]
        %v1224 = vld [vmem:[%s3 + $0x338] sm:$0xff]
        %v1225 = vld [vmem:[%s3 + $0x340] sm:$0xff]
        %v1226 = vld [vmem:[%s3 + $0x348] sm:$0xff]
        %v1227 = vld [vmem:[%s3 + $0x350] sm:$0xff]
        %v1228 = vld [vmem:[%s3 + $0x358] sm:$0xff]
        %v1229 = vld [vmem:[%s3 + $0x360] sm:$0xff]
        %v1230 = vld [vmem:[%s3 + $0x368] sm:$0xff]
        %v1231 = vld [vmem:[%s3 + $0x370] sm:$0xff]
        %v1232 = vld [vmem:[%s3 + $0x378] sm:$0xff]
        %v1233 = vld [vmem:[%s3 + $0x380] sm:$0xff]
        %v1234 = vld [vmem:[%s3 + $0x388] sm:$0xff]
        %v1235 = vld [vmem:[%s3 + $0x390] sm:$0xff]
        %v1236 = vld [vmem:[%s3 + $0x398] sm:$0xff]
        %v1237 = vld [vmem:[%s3 + $0x3a0] sm:$0xff]
        %v1238 = vld [vmem:[%s3 + $0x3a8] sm:$0xff]
        %v1239 = vld [vmem:[%s3 + $0x3b0] sm:$0xff]
        %v1240 = vld [vmem:[%s3 + $0x3b8] sm:$0xff]
        %v1241 = vld [vmem:[%s3 + $0x3c0] sm:$0xff]
        %v1242 = vld [vmem:[%s3 + $0x3c8] sm:$0xff]
        %v1243 = vld [vmem:[%s3 + $0x3d0] sm:$0xff]
        %v1244 = vld [vmem:[%s3 + $0x3d8] sm:$0xff]
        %v1245 = vld [vmem:[%s3 + $0x3e0] sm:$0xff]
        %v1246 = vld [vmem:[%s3 + $0x3e8] sm:$0xff]
        %v1247 = vld [vmem:[%s3 + $0x3f0] sm:$0xff]
        %v1248 = vld [vmem:[%s3 + $0x3f8] sm:$0xff]
        %v1377 = vunpack.c.l.b16 %v1121
        %v1378 = vunpack.c.h.b16 %v1121
        %v1379 = vunpack.c.l.b16 %v1122
        %v1380 = vunpack.c.h.b16 %v1122
        %v1381 = vunpack.c.l.b16 %v1123
        %v1382 = vunpack.c.h.b16 %v1123
        %v1383 = vunpack.c.l.b16 %v1124
        %v1384 = vunpack.c.h.b16 %v1124
        %v1385 = vunpack.c.l.b16 %v1125
        %v1386 = vunpack.c.h.b16 %v1125
        %v1387 = vunpack.c.l.b16 %v1126
        %v1388 = vunpack.c.h.b16 %v1126
        %v1389 = vunpack.c.l.b16 %v1127
        %v1390 = vunpack.c.h.b16 %v1127
        %v1391 = vunpack.c.l.b16 %v1128
        %v1392 = vunpack.c.h.b16 %v1128
        %v1393 = vunpack.c.l.b16 %v1129
        %v1394 = vunpack.c.h.b16 %v1129
        %v1395 = vunpack.c.l.b16 %v1130
        %v1396 = vunpack.c.h.b16 %v1130
        %v1397 = vunpack.c.l.b16 %v1131
        %v1398 = vunpack.c.h.b16 %v1131
        %v1399 = vunpack.c.l.b16 %v1132
        %v1400 = vunpack.c.h.b16 %v1132
        %v1401 = vunpack.c.l.b16 %v1133
        %v1402 = vunpack.c.h.b16 %v1133
        %v1403 = vunpack.c.l.b16 %v1134
        %v1404 = vunpack.c.h.b16 %v1134
        %v1405 = vunpack.c.l.b16 %v1135
        %v1406 = vunpack.c.h.b16 %v1135
        %v1407 = vunpack.c.l.b16 %v1136
        %v1408 = vunpack.c.h.b16 %v1136
        %v1409 = vunpack.c.l.b16 %v1137
        %v1410 = vunpack.c.h.b16 %v1137
        %v1411 = vunpack.c.l.b16 %v1138
        %v1412 = vunpack.c.h.b16 %v1138
        %v1413 = vunpack.c.l.b16 %v1139
        %v1414 = vunpack.c.h.b16 %v1139
        %v1415 = vunpack.c.l.b16 %v1140
        %v1416 = vunpack.c.h.b16 %v1140
        %v1417 = vunpack.c.l.b16 %v1141
        %v1418 = vunpack.c.h.b16 %v1141
        %v1419 = vunpack.c.l.b16 %v1142
        %v1420 = vunpack.c.h.b16 %v1142
        %v1421 = vunpack.c.l.b16 %v1143
        %v1422 = vunpack.c.h.b16 %v1143
        %v1423 = vunpack.c.l.b16 %v1144
        %v1424 = vunpack.c.h.b16 %v1144
        %v1425 = vunpack.c.l.b16 %v1145
        %v1426 = vunpack.c.h.b16 %v1145
        %v1427 = vunpack.c.l.b16 %v1146
        %v1428 = vunpack.c.h.b16 %v1146
        %v1429 = vunpack.c.l.b16 %v1147
        %v1430 = vunpack.c.h.b16 %v1147
        %v1431 = vunpack.c.l.b16 %v1148
        %v1432 = vunpack.c.h.b16 %v1148
        %v1433 = vunpack.c.l.b16 %v1149
        %v1434 = vunpack.c.h.b16 %v1149
        %v1435 = vunpack.c.l.b16 %v1150
        %v1436 = vunpack.c.h.b16 %v1150
        %v1437 = vunpack.c.l.b16 %v1151
        %v1438 = vunpack.c.h.b16 %v1151
        %v1439 = vunpack.c.l.b16 %v1152
        %v1440 = vunpack.c.h.b16 %v1152
        %v1441 = vunpack.c.l.b16 %v1153
        %v1442 = vunpack.c.h.b16 %v1153
        %v1443 = vunpack.c.l.b16 %v1154
        %v1444 = vunpack.c.h.b16 %v1154
        %v1445 = vunpack.c.l.b16 %v1155
        %v1446 = vunpack.c.h.b16 %v1155
        %v1447 = vunpack.c.l.b16 %v1156
        %v1448 = vunpack.c.h.b16 %v1156
        %v1449 = vunpack.c.l.b16 %v1157
        %v1450 = vunpack.c.h.b16 %v1157
        %v1451 = vunpack.c.l.b16 %v1158
        %v1452 = vunpack.c.h.b16 %v1158
        %v1453 = vunpack.c.l.b16 %v1159
        %v1454 = vunpack.c.h.b16 %v1159
        %v1455 = vunpack.c.l.b16 %v1160
        %v1456 = vunpack.c.h.b16 %v1160
        %v1457 = vunpack.c.l.b16 %v1161
        %v1458 = vunpack.c.h.b16 %v1161
        %v1459 = vunpack.c.l.b16 %v1162
        %v1460 = vunpack.c.h.b16 %v1162
        %v1461 = vunpack.c.l.b16 %v1163
        %v1462 = vunpack.c.h.b16 %v1163
        %v1463 = vunpack.c.l.b16 %v1164
        %v1464 = vunpack.c.h.b16 %v1164
        %v1465 = vunpack.c.l.b16 %v1165
        %v1466 = vunpack.c.h.b16 %v1165
        %v1467 = vunpack.c.l.b16 %v1166
        %v1468 = vunpack.c.h.b16 %v1166
        %v1469 = vunpack.c.l.b16 %v1167
        %v1470 = vunpack.c.h.b16 %v1167
        %v1471 = vunpack.c.l.b16 %v1168
        %v1472 = vunpack.c.h.b16 %v1168
        %v1473 = vunpack.c.l.b16 %v1169
        %v1474 = vunpack.c.h.b16 %v1169
        %v1475 = vunpack.c.l.b16 %v1170
        %v1476 = vunpack.c.h.b16 %v1170
        %v1477 = vunpack.c.l.b16 %v1171
        %v1478 = vunpack.c.h.b16 %v1171
        %v1479 = vunpack.c.l.b16 %v1172
        %v1480 = vunpack.c.h.b16 %v1172
        %v1481 = vunpack.c.l.b16 %v1173
        %v1482 = vunpack.c.h.b16 %v1173
        %v1483 = vunpack.c.l.b16 %v1174
        %v1484 = vunpack.c.h.b16 %v1174
        %v1485 = vunpack.c.l.b16 %v1175
        %v1486 = vunpack.c.h.b16 %v1175
        %v1487 = vunpack.c.l.b16 %v1176
        %v1488 = vunpack.c.h.b16 %v1176
        %v1489 = vunpack.c.l.b16 %v1177
        %v1490 = vunpack.c.h.b16 %v1177
        %v1491 = vunpack.c.l.b16 %v1178
        %v1492 = vunpack.c.h.b16 %v1178
        %v1493 = vunpack.c.l.b16 %v1179
        %v1494 = vunpack.c.h.b16 %v1179
        %v1495 = vunpack.c.l.b16 %v1180
        %v1496 = vunpack.c.h.b16 %v1180
        %v1497 = vunpack.c.l.b16 %v1181
        %v1498 = vunpack.c.h.b16 %v1181
        %v1499 = vunpack.c.l.b16 %v1182
        %v1500 = vunpack.c.h.b16 %v1182
        %v1501 = vunpack.c.l.b16 %v1183
        %v1502 = vunpack.c.h.b16 %v1183
        %v1503 = vunpack.c.l.b16 %v1184
        %v1504 = vunpack.c.h.b16 %v1184
        %v1505 = vunpack.c.l.b16 %v1185
        %v1506 = vunpack.c.h.b16 %v1185
        %v1507 = vunpack.c.l.b16 %v1186
        %v1508 = vunpack.c.h.b16 %v1186
        %v1509 = vunpack.c.l.b16 %v1187
        %v1510 = vunpack.c.h.b16 %v1187
        %v1511 = vunpack.c.l.b16 %v1188
        %v1512 = vunpack.c.h.b16 %v1188
        %v1513 = vunpack.c.l.b16 %v1189
        %v1514 = vunpack.c.h.b16 %v1189
        %v1515 = vunpack.c.l.b16 %v1190
        %v1516 = vunpack.c.h.b16 %v1190
        %v1517 = vunpack.c.l.b16 %v1191
        %v1518 = vunpack.c.h.b16 %v1191
        %v1519 = vunpack.c.l.b16 %v1192
        %v1520 = vunpack.c.h.b16 %v1192
        %v1521 = vunpack.c.l.b16 %v1193
        %v1522 = vunpack.c.h.b16 %v1193
        %v1523 = vunpack.c.l.b16 %v1194
        %v1524 = vunpack.c.h.b16 %v1194
        %v1525 = vunpack.c.l.b16 %v1195
        %v1526 = vunpack.c.h.b16 %v1195
        %v1527 = vunpack.c.l.b16 %v1196
        %v1528 = vunpack.c.h.b16 %v1196
        %v1529 = vunpack.c.l.b16 %v1197
        %v1530 = vunpack.c.h.b16 %v1197
        %v1531 = vunpack.c.l.b16 %v1198
        %v1532 = vunpack.c.h.b16 %v1198
        %v1533 = vunpack.c.l.b16 %v1199
        %v1534 = vunpack.c.h.b16 %v1199
        %v1535 = vunpack.c.l.b16 %v1200
        %v1536 = vunpack.c.h.b16 %v1200
        %v1537 = vunpack.c.l.b16 %v1201
        %v1538 = vunpack.c.h.b16 %v1201
        %v1539 = vunpack.c.l.b16 %v1202
        %v1540 = vunpack.c.h.b16 %v1202
        %v1541 = vunpack.c.l.b16 %v1203
        %v1542 = vunpack.c.h.b16 %v1203
        %v1543 = vunpack.c.l.b16 %v1204
        %v1544 = vunpack.c.h.b16 %v1204
        %v1545 = vunpack.c.l.b16 %v1205
        %v1546 = vunpack.c.h.b16 %v1205
        %v1547 = vunpack.c.l.b16 %v1206
        %v1548 = vunpack.c.h.b16 %v1206
        %v1549 = vunpack.c.l.b16 %v1207
        %v1550 = vunpack.c.h.b16 %v1207
        %v1551 = vunpack.c.l.b16 %v1208
        %v1552 = vunpack.c.h.b16 %v1208
        %v1553 = vunpack.c.l.b16 %v1209
        %v1554 = vunpack.c.h.b16 %v1209
        %v1555 = vunpack.c.l.b16 %v1210
        %v1556 = vunpack.c.h.b16 %v1210
        %v1557 = vunpack.c.l.b16 %v1211
        %v1558 = vunpack.c.h.b16 %v1211
        %v1559 = vunpack.c.l.b16 %v1212
        %v1560 = vunpack.c.h.b16 %v1212
        %v1561 = vunpack.c.l.b16 %v1213
        %v1562 = vunpack.c.h.b16 %v1213
        %v1563 = vunpack.c.l.b16 %v1214
        %v1564 = vunpack.c.h.b16 %v1214
        %v1565 = vunpack.c.l.b16 %v1215
        %v1566 = vunpack.c.h.b16 %v1215
        %v1567 = vunpack.c.l.b16 %v1216
        %v1568 = vunpack.c.h.b16 %v1216
        %v1569 = vunpack.c.l.b16 %v1217
        %v1570 = vunpack.c.h.b16 %v1217
        %v1571 = vunpack.c.l.b16 %v1218
        %v1572 = vunpack.c.h.b16 %v1218
        %v1573 = vunpack.c.l.b16 %v1219
        %v1574 = vunpack.c.h.b16 %v1219
        %v1575 = vunpack.c.l.b16 %v1220
        %v1576 = vunpack.c.h.b16 %v1220
        %v1577 = vunpack.c.l.b16 %v1221
        %v1578 = vunpack.c.h.b16 %v1221
        %v1579 = vunpack.c.l.b16 %v1222
        %v1580 = vunpack.c.h.b16 %v1222
        %v1581 = vunpack.c.l.b16 %v1223
        %v1582 = vunpack.c.h.b16 %v1223
        %v1583 = vunpack.c.l.b16 %v1224
        %v1584 = vunpack.c.h.b16 %v1224
        %v1585 = vunpack.c.l.b16 %v1225
        %v1586 = vunpack.c.h.b16 %v1225
        %v1587 = vunpack.c.l.b16 %v1226
        %v1588 = vunpack.c.h.b16 %v1226
        %v1589 = vunpack.c.l.b16 %v1227
        %v1590 = vunpack.c.h.b16 %v1227
        %v1591 = vunpack.c.l.b16 %v1228
        %v1592 = vunpack.c.h.b16 %v1228
        %v1593 = vunpack.c.l.b16 %v1229
        %v1594 = vunpack.c.h.b16 %v1229
        %v1595 = vunpack.c.l.b16 %v1230
        %v1596 = vunpack.c.h.b16 %v1230
        %v1597 = vunpack.c.l.b16 %v1231
        %v1598 = vunpack.c.h.b16 %v1231
        %v1599 = vunpack.c.l.b16 %v1232
        %v1600 = vunpack.c.h.b16 %v1232
        %v1601 = vunpack.c.l.b16 %v1233
        %v1602 = vunpack.c.h.b16 %v1233
        %v1603 = vunpack.c.l.b16 %v1234
        %v1604 = vunpack.c.h.b16 %v1234
        %v1605 = vunpack.c.l.b16 %v1235
        %v1606 = vunpack.c.h.b16 %v1235
        %v1607 = vunpack.c.l.b16 %v1236
        %v1608 = vunpack.c.h.b16 %v1236
        %v1609 = vunpack.c.l.b16 %v1237
        %v1610 = vunpack.c.h.b16 %v1237
        %v1611 = vunpack.c.l.b16 %v1238
        %v1612 = vunpack.c.h.b16 %v1238
        %v1613 = vunpack.c.l.b16 %v1239
        %v1614 = vunpack.c.h.b16 %v1239
        %v1615 = vunpack.c.l.b16 %v1240
        %v1616 = vunpack.c.h.b16 %v1240
        %v1617 = vunpack.c.l.b16 %v1241
        %v1618 = vunpack.c.h.b16 %v1241
        %v1619 = vunpack.c.l.b16 %v1242
        %v1620 = vunpack.c.h.b16 %v1242
        %v1621 = vunpack.c.l.b16 %v1243
        %v1622 = vunpack.c.h.b16 %v1243
        %v1623 = vunpack.c.l.b16 %v1244
        %v1624 = vunpack.c.h.b16 %v1244
        %v1625 = vunpack.c.l.b16 %v1245
        %v1626 = vunpack.c.h.b16 %v1245
        %v1627 = vunpack.c.l.b16 %v1246
        %v1628 = vunpack.c.h.b16 %v1246
        %v1629 = vunpack.c.l.b16 %v1247
        %v1630 = vunpack.c.h.b16 %v1247
        %v1631 = vunpack.c.l.b16 %v1248
        %v1632 = vunpack.c.h.b16 %v1248
        %v1633 = vpack.c.b16 %v1385, %v1377
        %v1634 = vpack.c.b16 %v1386, %v1378
        %v1635 = vpack.c.b16 %v1387, %v1379
        %v1636 = vpack.c.b16 %v1388, %v1380
        %v1637 = vpack.c.b16 %v1389, %v1381
        %v1638 = vpack.c.b16 %v1390, %v1382
        %v1639 = vpack.c.b16 %v1391, %v1383
        %v1640 = vpack.c.b16 %v1392, %v1384
        %v1641 = vpack.c.b16 %v1401, %v1393
        %v1642 = vpack.c.b16 %v1402, %v1394
        %v1643 = vpack.c.b16 %v1403, %v1395
        %v1644 = vpack.c.b16 %v1404, %v1396
        %v1645 = vpack.c.b16 %v1405, %v1397
        %v1646 = vpack.c.b16 %v1406, %v1398
        %v1647 = vpack.c.b16 %v1407, %v1399
        %v1648 = vpack.c.b16 %v1408, %v1400
        %v1649 = vpack.c.b16 %v1417, %v1409
        %v1650 = vpack.c.b16 %v1418, %v1410
        %v1651 = vpack.c.b16 %v1419, %v1411
        %v1652 = vpack.c.b16 %v1420, %v1412
        %v1653 = vpack.c.b16 %v1421, %v1413
        %v1654 = vpack.c.b16 %v1422, %v1414
        %v1655 = vpack.c.b16 %v1423, %v1415
        %v1656 = vpack.c.b16 %v1424, %v1416
        %v1657 = vpack.c.b16 %v1433, %v1425
        %v1658 = vpack.c.b16 %v1434, %v1426
        %v1659 = vpack.c.b16 %v1435, %v1427
        %v1660 = vpack.c.b16 %v1436, %v1428
        %v1661 = vpack.c.b16 %v1437, %v1429
        %v1662 = vpack.c.b16 %v1438, %v1430
        %v1663 = vpack.c.b16 %v1439, %v1431
        %v1664 = vpack.c.b16 %v1440, %v1432
        %v1665 = vpack.c.b16 %v1449, %v1441
        %v1666 = vpack.c.b16 %v1450, %v1442
        %v1667 = vpack.c.b16 %v1451, %v1443
        %v1668 = vpack.c.b16 %v1452, %v1444
        %v1669 = vpack.c.b16 %v1453, %v1445
        %v1670 = vpack.c.b16 %v1454, %v1446
        %v1671 = vpack.c.b16 %v1455, %v1447
        %v1672 = vpack.c.b16 %v1456, %v1448
        %v1673 = vpack.c.b16 %v1465, %v1457
        %v1674 = vpack.c.b16 %v1466, %v1458
        %v1675 = vpack.c.b16 %v1467, %v1459
        %v1676 = vpack.c.b16 %v1468, %v1460
        %v1677 = vpack.c.b16 %v1469, %v1461
        %v1678 = vpack.c.b16 %v1470, %v1462
        %v1679 = vpack.c.b16 %v1471, %v1463
        %v1680 = vpack.c.b16 %v1472, %v1464
        %v1681 = vpack.c.b16 %v1481, %v1473
        %v1682 = vpack.c.b16 %v1482, %v1474
        %v1683 = vpack.c.b16 %v1483, %v1475
        %v1684 = vpack.c.b16 %v1484, %v1476
        %v1685 = vpack.c.b16 %v1485, %v1477
        %v1686 = vpack.c.b16 %v1486, %v1478
        %v1687 = vpack.c.b16 %v1487, %v1479
        %v1688 = vpack.c.b16 %v1488, %v1480
        %v1689 = vpack.c.b16 %v1497, %v1489
        %v1690 = vpack.c.b16 %v1498, %v1490
        %v1691 = vpack.c.b16 %v1499, %v1491
        %v1692 = vpack.c.b16 %v1500, %v1492
        %v1693 = vpack.c.b16 %v1501, %v1493
        %v1694 = vpack.c.b16 %v1502, %v1494
        %v1695 = vpack.c.b16 %v1503, %v1495
        %v1696 = vpack.c.b16 %v1504, %v1496
        %v1697 = vpack.c.b16 %v1513, %v1505
        %v1698 = vpack.c.b16 %v1514, %v1506
        %v1699 = vpack.c.b16 %v1515, %v1507
        %v1700 = vpack.c.b16 %v1516, %v1508
        %v1701 = vpack.c.b16 %v1517, %v1509
        %v1702 = vpack.c.b16 %v1518, %v1510
        %v1703 = vpack.c.b16 %v1519, %v1511
        %v1704 = vpack.c.b16 %v1520, %v1512
        %v1705 = vpack.c.b16 %v1529, %v1521
        %v1706 = vpack.c.b16 %v1530, %v1522
        %v1707 = vpack.c.b16 %v1531, %v1523
        %v1708 = vpack.c.b16 %v1532, %v1524
        %v1709 = vpack.c.b16 %v1533, %v1525
        %v1710 = vpack.c.b16 %v1534, %v1526
        %v1711 = vpack.c.b16 %v1535, %v1527
        %v1712 = vpack.c.b16 %v1536, %v1528
        %v1713 = vpack.c.b16 %v1545, %v1537
        %v1714 = vpack.c.b16 %v1546, %v1538
        %v1715 = vpack.c.b16 %v1547, %v1539
        %v1716 = vpack.c.b16 %v1548, %v1540
        %v1717 = vpack.c.b16 %v1549, %v1541
        %v1718 = vpack.c.b16 %v1550, %v1542
        %v1719 = vpack.c.b16 %v1551, %v1543
        %v1720 = vpack.c.b16 %v1552, %v1544
        %v1721 = vpack.c.b16 %v1561, %v1553
        %v1722 = vpack.c.b16 %v1562, %v1554
        %v1723 = vpack.c.b16 %v1563, %v1555
        %v1724 = vpack.c.b16 %v1564, %v1556
        %v1725 = vpack.c.b16 %v1565, %v1557
        %v1726 = vpack.c.b16 %v1566, %v1558
        %v1727 = vpack.c.b16 %v1567, %v1559
        %v1728 = vpack.c.b16 %v1568, %v1560
        %v1729 = vpack.c.b16 %v1577, %v1569
        %v1730 = vpack.c.b16 %v1578, %v1570
        %v1731 = vpack.c.b16 %v1579, %v1571
        %v1732 = vpack.c.b16 %v1580, %v1572
        %v1733 = vpack.c.b16 %v1581, %v1573
        %v1734 = vpack.c.b16 %v1582, %v1574
        %v1735 = vpack.c.b16 %v1583, %v1575
        %v1736 = vpack.c.b16 %v1584, %v1576
        %v1737 = vpack.c.b16 %v1593, %v1585
        %v1738 = vpack.c.b16 %v1594, %v1586
        %v1739 = vpack.c.b16 %v1595, %v1587
        %v1740 = vpack.c.b16 %v1596, %v1588
        %v1741 = vpack.c.b16 %v1597, %v1589
        %v1742 = vpack.c.b16 %v1598, %v1590
        %v1743 = vpack.c.b16 %v1599, %v1591
        %v1744 = vpack.c.b16 %v1600, %v1592
        %v1745 = vpack.c.b16 %v1609, %v1601
        %v1746 = vpack.c.b16 %v1610, %v1602
        %v1747 = vpack.c.b16 %v1611, %v1603
        %v1748 = vpack.c.b16 %v1612, %v1604
        %v1749 = vpack.c.b16 %v1613, %v1605
        %v1750 = vpack.c.b16 %v1614, %v1606
        %v1751 = vpack.c.b16 %v1615, %v1607
        %v1752 = vpack.c.b16 %v1616, %v1608
        %v1753 = vpack.c.b16 %v1625, %v1617
        %v1754 = vpack.c.b16 %v1626, %v1618
        %v1755 = vpack.c.b16 %v1627, %v1619
        %v1756 = vpack.c.b16 %v1628, %v1620
        %v1757 = vpack.c.b16 %v1629, %v1621
        %v1758 = vpack.c.b16 %v1630, %v1622
        %v1759 = vpack.c.b16 %v1631, %v1623
        %v1760 = vpack.c.b16 %v1632, %v1624
        %1889 = vmatprep.subr.bf16.mxu0 %v1634
        %1890 = vmatpush1.bf16.msra.mxu0 %v1633
        %1891 = vmatprep.subr.bf16.mxu0 %v1642
        %1892 = vmatpush1.bf16.msra.mxu0 %v1641
        %1893 = vmatprep.subr.bf16.mxu0 %v1650
        %1894 = vmatpush1.bf16.msra.mxu0 %v1649
        %1895 = vmatprep.subr.bf16.mxu0 %v1658
        %1896 = vmatpush1.bf16.msra.mxu0 %v1657
        %1897 = vmatprep.subr.bf16.mxu0 %v1666
        %1898 = vmatpush1.bf16.msra.mxu0 %v1665
        %1899 = vmatprep.subr.bf16.mxu0 %v1674
        %1900 = vmatpush1.bf16.msra.mxu0 %v1673
        %1901 = vmatprep.subr.bf16.mxu0 %v1682
        %1902 = vmatpush1.bf16.msra.mxu0 %v1681
        %1903 = vmatprep.subr.bf16.mxu0 %v1690
        %1904 = vmatpush1.bf16.msra.mxu0 %v1689
        %1905 = vmatprep.subr.bf16.mxu0 %v1698
        %1906 = vmatpush1.bf16.msra.mxu0 %v1697
        %1907 = vmatprep.subr.bf16.mxu0 %v1706
        %1908 = vmatpush1.bf16.msra.mxu0 %v1705
        %1909 = vmatprep.subr.bf16.mxu0 %v1714
        %1910 = vmatpush1.bf16.msra.mxu0 %v1713
        %1911 = vmatprep.subr.bf16.mxu0 %v1722
        %1912 = vmatpush1.bf16.msra.mxu0 %v1721
        %1913 = vmatprep.subr.bf16.mxu0 %v1730
        %1914 = vmatpush1.bf16.msra.mxu0 %v1729
        %1915 = vmatprep.subr.bf16.mxu0 %v1738
        %1916 = vmatpush1.bf16.msra.mxu0 %v1737
        %1917 = vmatprep.subr.bf16.mxu0 %v1746
        %1918 = vmatpush1.bf16.msra.mxu0 %v1745
        %1919 = vmatprep.subr.bf16.mxu0 %v1754
        %1920 = vmatpush1.bf16.msra.mxu0 %v1753
        %1921 = vmatprep.mubr.bf16.mxu0 0
        %1922 = vmatmul.mubr.bf16.gmra.mrb[0].mxu0 0
        %v1923 = vpop.f32.mrb[0].mxu0
        %v1924 = vadd.f32 0.0, %v1923
        %v1925 = vpop.f32.mrb[0].mxu0
        %v1926 = vadd.f32 0.0, %v1925
        %v1927 = vpop.f32.mrb[0].mxu0
        %v1928 = vpop.f32.mrb[0].mxu0
        %1929 = vdwg.mxu0
        %1930 = vmatprep.subr.bf16.mxu0 %v1636
        %1931 = vmatpush1.bf16.msra.mxu0 %v1635
        %1932 = vmatprep.subr.bf16.mxu0 %v1644
        %1933 = vmatpush1.bf16.msra.mxu0 %v1643
        %1934 = vmatprep.subr.bf16.mxu0 %v1652
        %1935 = vmatpush1.bf16.msra.mxu0 %v1651
        %1936 = vmatprep.subr.bf16.mxu0 %v1660
        %1937 = vmatpush1.bf16.msra.mxu0 %v1659
        %1938 = vmatprep.subr.bf16.mxu0 %v1668
        %1939 = vmatpush1.bf16.msra.mxu0 %v1667
        %1940 = vmatprep.subr.bf16.mxu0 %v1676
        %1941 = vmatpush1.bf16.msra.mxu0 %v1675
        %1942 = vmatprep.subr.bf16.mxu0 %v1684
        %1943 = vmatpush1.bf16.msra.mxu0 %v1683
        %1944 = vmatprep.subr.bf16.mxu0 %v1692
        %1945 = vmatpush1.bf16.msra.mxu0 %v1691
        %1946 = vmatprep.subr.bf16.mxu0 %v1700
        %1947 = vmatpush1.bf16.msra.mxu0 %v1699
        %1948 = vmatprep.subr.bf16.mxu0 %v1708
        %1949 = vmatpush1.bf16.msra.mxu0 %v1707
        %1950 = vmatprep.subr.bf16.mxu0 %v1716
        %1951 = vmatpush1.bf16.msra.mxu0 %v1715
        %1952 = vmatprep.subr.bf16.mxu0 %v1724
        %1953 = vmatpush1.bf16.msra.mxu0 %v1723
        %1954 = vmatprep.subr.bf16.mxu0 %v1732
        %1955 = vmatpush1.bf16.msra.mxu0 %v1731
        %1956 = vmatprep.subr.bf16.mxu0 %v1740
        %1957 = vmatpush1.bf16.msra.mxu0 %v1739
        %1958 = vmatprep.subr.bf16.mxu0 %v1748
        %1959 = vmatpush1.bf16.msra.mxu0 %v1747
        %1960 = vmatprep.subr.bf16.mxu0 %v1756
        %1961 = vmatpush1.bf16.msra.mxu0 %v1755
        %1962 = vmatprep.mubr.bf16.mxu0 0
        %1963 = vmatmul.mubr.bf16.gmra.mrb[0].mxu0 0
        %v1964 = vpop.f32.mrb[0].mxu0
        %v1965 = vadd.f32 0.0, %v1964
        %v1966 = vpop.f32.mrb[0].mxu0
        %v1967 = vadd.f32 0.0, %v1966
        %v1968 = vpop.f32.mrb[0].mxu0
        %v1969 = vpop.f32.mrb[0].mxu0
        %1970 = vdwg.mxu0
        %1971 = vmatprep.subr.bf16.mxu0 %v1638
        %1972 = vmatpush1.bf16.msra.mxu0 %v1637
        %1973 = vmatprep.subr.bf16.mxu0 %v1646
        %1974 = vmatpush1.bf16.msra.mxu0 %v1645
        %1975 = vmatprep.subr.bf16.mxu0 %v1654
        %1976 = vmatpush1.bf16.msra.mxu0 %v1653
        %1977 = vmatprep.subr.bf16.mxu0 %v1662
        %1978 = vmatpush1.bf16.msra.mxu0 %v1661
        %1979 = vmatprep.subr.bf16.mxu0 %v1670
        %1980 = vmatpush1.bf16.msra.mxu0 %v1669
        %1981 = vmatprep.subr.bf16.mxu0 %v1678
        %1982 = vmatpush1.bf16.msra.mxu0 %v1677
        %1983 = vmatprep.subr.bf16.mxu0 %v1686
        %1984 = vmatpush1.bf16.msra.mxu0 %v1685
        %1985 = vmatprep.subr.bf16.mxu0 %v1694
        %1986 = vmatpush1.bf16.msra.mxu0 %v1693
        %1987 = vmatprep.subr.bf16.mxu0 %v1702
        %1988 = vmatpush1.bf16.msra.mxu0 %v1701
        %1989 = vmatprep.subr.bf16.mxu0 %v1710
        %1990 = vmatpush1.bf16.msra.mxu0 %v1709
        %1991 = vmatprep.subr.bf16.mxu0 %v1718
        %1992 = vmatpush1.bf16.msra.mxu0 %v1717
        %1993 = vmatprep.subr.bf16.mxu0 %v1726
        %1994 = vmatpush1.bf16.msra.mxu0 %v1725
        %1995 = vmatprep.subr.bf16.mxu0 %v1734
        %1996 = vmatpush1.bf16.msra.mxu0 %v1733
        %1997 = vmatprep.subr.bf16.mxu0 %v1742
        %1998 = vmatpush1.bf16.msra.mxu0 %v1741
        %1999 = vmatprep.subr.bf16.mxu0 %v1750
        %2000 = vmatpush1.bf16.msra.mxu0 %v1749
        %2001 = vmatprep.subr.bf16.mxu0 %v1758
        %2002 = vmatpush1.bf16.msra.mxu0 %v1757
        %2003 = vmatprep.mubr.bf16.mxu0 0
        %2004 = vmatmul.mubr.bf16.gmra.mrb[0].mxu0 0
        %v2005 = vpop.f32.mrb[0].mxu0
        %v2006 = vadd.f32 0.0, %v2005
        %v2007 = vpop.f32.mrb[0].mxu0
        %v2008 = vadd.f32 0.0, %v2007
        %v2009 = vpop.f32.mrb[0].mxu0
        %v2010 = vpop.f32.mrb[0].mxu0
        %2011 = vdwg.mxu0
        %2012 = vmatprep.subr.bf16.mxu0 %v1640
        %2013 = vmatpush1.bf16.msra.mxu0 %v1639
        %2014 = vmatprep.subr.bf16.mxu0 %v1648
        %2015 = vmatpush1.bf16.msra.mxu0 %v1647
        %2016 = vmatprep.subr.bf16.mxu0 %v1656
        %2017 = vmatpush1.bf16.msra.mxu0 %v1655
        %2018 = vmatprep.subr.bf16.mxu0 %v1664
        %2019 = vmatpush1.bf16.msra.mxu0 %v1663
        %2020 = vmatprep.subr.bf16.mxu0 %v1672
        %2021 = vmatpush1.bf16.msra.mxu0 %v1671
        %2022 = vmatprep.subr.bf16.mxu0 %v1680
        %2023 = vmatpush1.bf16.msra.mxu0 %v1679
        %2024 = vmatprep.subr.bf16.mxu0 %v1688
        %2025 = vmatpush1.bf16.msra.mxu0 %v1687
        %2026 = vmatprep.subr.bf16.mxu0 %v1696
        %2027 = vmatpush1.bf16.msra.mxu0 %v1695
        %2028 = vmatprep.subr.bf16.mxu0 %v1704
        %2029 = vmatpush1.bf16.msra.mxu0 %v1703
        %2030 = vmatprep.subr.bf16.mxu0 %v1712
        %2031 = vmatpush1.bf16.msra.mxu0 %v1711
        %2032 = vmatprep.subr.bf16.mxu0 %v1720
        %2033 = vmatpush1.bf16.msra.mxu0 %v1719
        %2034 = vmatprep.subr.bf16.mxu0 %v1728
        %2035 = vmatpush1.bf16.msra.mxu0 %v1727
        %2036 = vmatprep.subr.bf16.mxu0 %v1736
        %2037 = vmatpush1.bf16.msra.mxu0 %v1735
        %2038 = vmatprep.subr.bf16.mxu0 %v1744
        %2039 = vmatpush1.bf16.msra.mxu0 %v1743
        %2040 = vmatprep.subr.bf16.mxu0 %v1752
        %2041 = vmatpush1.bf16.msra.mxu0 %v1751
        %2042 = vmatprep.subr.bf16.mxu0 %v1760
        %2043 = vmatpush1.bf16.msra.mxu0 %v1759
        %2044 = vmatprep.mubr.bf16.mxu0 0
        %2045 = vmatmul.mubr.bf16.gmra.mrb[0].mxu0 0
        %v2046 = vpop.f32.mrb[0].mxu0
        %v2047 = vadd.f32 0.0, %v2046
        %v2048 = vpop.f32.mrb[0].mxu0
        %v2049 = vadd.f32 0.0, %v2048
        %v2050 = vpop.f32.mrb[0].mxu0
        %v2051 = vpop.f32.mrb[0].mxu0
        %2052 = vdwg.mxu0
        %v2053 = vadd.f32 %v1113, %v1924
        %v2054 = vadd.f32 %v1114, %v1926
        %v2055 = vadd.f32 %v1115, %v1965
        %v2056 = vadd.f32 %v1116, %v1967
        %v2057 = vadd.f32 %v1117, %v2006
        %v2058 = vadd.f32 %v1118, %v2008
        %v2059 = vadd.f32 %v1119, %v2047
        %v2060 = vadd.f32 %v1120, %v2049
        %v2061 = vxor.u32 %v2053, 2147483648
        %v2062 = vxor.u32 %v2054, 2147483648
        %v2063 = vmul.f32 %v2061, 1.442695
        %v2064 = vpow.pop %v2063
        %v2065 = vmul.f32 %v2062, 1.442695
        %v2066 = vpow.pop %v2065
        %v2067 = vadd.f32 %v2064, 1.0
        %v2068 = vadd.f32 %v2066, 1.0
        %v2069 = vrcp.pop %v2067
        %v2070 = vmul.f32 1.0, %v2069
        %v2071 = vrcp.pop %v2068
        %v2072 = vmul.f32 1.0, %v2071
        %v2073 = vxor.u32 %v2055, 2147483648
        %v2074 = vxor.u32 %v2056, 2147483648
        %v2075 = vmul.f32 %v2073, 1.442695
        %v2076 = vpow.pop %v2075
        %v2077 = vmul.f32 %v2074, 1.442695
        %v2078 = vpow.pop %v2077
        %v2079 = vadd.f32 %v2076, 1.0
        %v2080 = vadd.f32 %v2078, 1.0
        %v2081 = vrcp.pop %v2079
        %v2082 = vmul.f32 1.0, %v2081
        %v2083 = vrcp.pop %v2080
        %v2084 = vmul.f32 1.0, %v2083
        %v2085 = vtanh.pop %v2057
        %v2086 = vtanh.pop %v2058
        %v2087 = vxor.u32 %v2059, 2147483648
        %v2088 = vxor.u32 %v2060, 2147483648
        %v2089 = vmul.f32 %v2087, 1.442695
        %v2090 = vpow.pop %v2089
        %v2091 = vmul.f32 %v2088, 1.442695
        %v2092 = vpow.pop %v2091
        %v2093 = vadd.f32 %v2090, 1.0
        %v2094 = vadd.f32 %v2092, 1.0
        %v2095 = vrcp.pop %v2093
        %v2096 = vmul.f32 1.0, %v2095
        %v2097 = vrcp.pop %v2094
        %v2098 = vmul.f32 1.0, %v2097
        %v2099 = vmul.f32 %v2082, 0.0
        %v2100 = vmul.f32 %v2084, 0.0
        %v2101 = vmul.f32 %v2070, %v2085
        %v2102 = vmul.f32 %v2072, %v2086
        %v2103 = vadd.f32 %v2099, %v2101
        %v2104 = vadd.f32 %v2100, %v2102
        %v2105 = vtanh.pop %v2103
        %v2106 = vtanh.pop %v2104
        %v2107 = vmul.f32 %v2096, %v2105
        %v2108 = vmul.f32 %v2098, %v2106
        %vm2109 = vcmp.eq.s32.totalorder %v1109, 0
        %v2110 = vsel %vm2109, 1, 0
        %2111 = vset.pattern.permute.xlu0 0
        %2112 = vperm.xlu0 %2111, %v2110
        %v2113 = vpop.permute.xlu0 %2112
        %vm2114 = vcmp.eq.s32.totalorder %v2113, 1
        %v2115 = vsel %vm2114, %v2107, 0.0
        %v2116 = vsel %vm2114, %v2108, 0.0
        %s2117 = smul.u32 1, 8
        %s2118 = smul.addr %s2117, 8
        %s2119 = scalar_lea.vmem [#allocation2], %s2118
        %v2120 = vld [vmem:[%s2119] sm:$0xff]
        %v2121 = vld [vmem:[%s2119 + $0x8] sm:$0xff]
        %v2122 = vld [vmem:[%s2119 + $0x10] sm:$0xff]
        %v2123 = vld [vmem:[%s2119 + $0x18] sm:$0xff]
        %v2124 = vld [vmem:[%s2119 + $0x20] sm:$0xff]
        %v2125 = vld [vmem:[%s2119 + $0x28] sm:$0xff]
        %v2126 = vld [vmem:[%s2119 + $0x30] sm:$0xff]
        %v2127 = vld [vmem:[%s2119 + $0x38] sm:$0xff]
        %v2128 = vpack.c.bf16 %v2107, %v2107
        %v2129 = vpack.c.bf16 %v2108, %v2108
        %2130 = vmatprep.subr.bf16.mxu0 %v1634
        %2131 = vmatpush1.bf16.msra.mxu0 %v1633
        %2132 = vmatprep.subr.bf16.mxu0 %v1642
        %2133 = vmatpush1.bf16.msra.mxu0 %v1641
        %2134 = vmatprep.subr.bf16.mxu0 %v1650
        %2135 = vmatpush1.bf16.msra.mxu0 %v1649
        %2136 = vmatprep.subr.bf16.mxu0 %v1658
        %2137 = vmatpush1.bf16.msra.mxu0 %v1657
        %2138 = vmatprep.subr.bf16.mxu0 %v1666
        %2139 = vmatpush1.bf16.msra.mxu0 %v1665
        %2140 = vmatprep.subr.bf16.mxu0 %v1674
        %2141 = vmatpush1.bf16.msra.mxu0 %v1673
        %2142 = vmatprep.subr.bf16.mxu0 %v1682
        %2143 = vmatpush1.bf16.msra.mxu0 %v1681
        %2144 = vmatprep.subr.bf16.mxu0 %v1690
        %2145 = vmatpush1.bf16.msra.mxu0 %v1689
        %2146 = vmatprep.subr.bf16.mxu0 %v1698
        %2147 = vmatpush1.bf16.msra.mxu0 %v1697
        %2148 = vmatprep.subr.bf16.mxu0 %v1706
        %2149 = vmatpush1.bf16.msra.mxu0 %v1705
        %2150 = vmatprep.subr.bf16.mxu0 %v1714
        %2151 = vmatpush1.bf16.msra.mxu0 %v1713
        %2152 = vmatprep.subr.bf16.mxu0 %v1722
        %2153 = vmatpush1.bf16.msra.mxu0 %v1721
        %2154 = vmatprep.subr.bf16.mxu0 %v1730
        %2155 = vmatpush1.bf16.msra.mxu0 %v1729
        %2156 = vmatprep.subr.bf16.mxu0 %v1738
        %2157 = vmatpush1.bf16.msra.mxu0 %v1737
        %2158 = vmatprep.subr.bf16.mxu0 %v1746
        %2159 = vmatpush1.bf16.msra.mxu0 %v1745
        %2160 = vmatprep.subr.bf16.mxu0 %v1754
        %2161 = vmatpush1.bf16.msra.mxu0 %v1753
        %2162 = vmatprep.mubr.bf16.mxu0 %v2129
        %2163 = vmatmul.mubr.bf16.gmra.mrb[0].mxu0 %v2128
        %v2164 = vpop.f32.mrb[0].mxu0
        %v2165 = vadd.f32 0.0, %v2164
        %v2166 = vpop.f32.mrb[0].mxu0
        %v2167 = vadd.f32 0.0, %v2166
        %v2168 = vpop.f32.mrb[0].mxu0
        %v2169 = vpop.f32.mrb[0].mxu0
        %2170 = vdwg.mxu0
        %2171 = vmatprep.subr.bf16.mxu0 %v1636
        %2172 = vmatpush1.bf16.msra.mxu0 %v1635
        %2173 = vmatprep.subr.bf16.mxu0 %v1644
        %2174 = vmatpush1.bf16.msra.mxu0 %v1643
        %2175 = vmatprep.subr.bf16.mxu0 %v1652
        %2176 = vmatpush1.bf16.msra.mxu0 %v1651
        %2177 = vmatprep.subr.bf16.mxu0 %v1660
        %2178 = vmatpush1.bf16.msra.mxu0 %v1659
        %2179 = vmatprep.subr.bf16.mxu0 %v1668
        %2180 = vmatpush1.bf16.msra.mxu0 %v1667
        %2181 = vmatprep.subr.bf16.mxu0 %v1676
        %2182 = vmatpush1.bf16.msra.mxu0 %v1675
        %2183 = vmatprep.subr.bf16.mxu0 %v1684
        %2184 = vmatpush1.bf16.msra.mxu0 %v1683
        %2185 = vmatprep.subr.bf16.mxu0 %v1692
        %2186 = vmatpush1.bf16.msra.mxu0 %v1691
        %2187 = vmatprep.subr.bf16.mxu0 %v1700
        %2188 = vmatpush1.bf16.msra.mxu0 %v1699
        %2189 = vmatprep.subr.bf16.mxu0 %v1708
        %2190 = vmatpush1.bf16.msra.mxu0 %v1707
        %2191 = vmatprep.subr.bf16.mxu0 %v1716
        %2192 = vmatpush1.bf16.msra.mxu0 %v1715
        %2193 = vmatprep.subr.bf16.mxu0 %v1724
        %2194 = vmatpush1.bf16.msra.mxu0 %v1723
        %2195 = vmatprep.subr.bf16.mxu0 %v1732
        %2196 = vmatpush1.bf16.msra.mxu0 %v1731
        %2197 = vmatprep.subr.bf16.mxu0 %v1740
        %2198 = vmatpush1.bf16.msra.mxu0 %v1739
        %2199 = vmatprep.subr.bf16.mxu0 %v1748
        %2200 = vmatpush1.bf16.msra.mxu0 %v1747
        %2201 = vmatprep.subr.bf16.mxu0 %v1756
        %2202 = vmatpush1.bf16.msra.mxu0 %v1755
        %2203 = vmatprep.mubr.bf16.mxu0 %v2129
        %2204 = vmatmul.mubr.bf16.gmra.mrb[0].mxu0 %v2128
        %v2205 = vpop.f32.mrb[0].mxu0
        %v2206 = vadd.f32 0.0, %v2205
        %v2207 = vpop.f32.mrb[0].mxu0
        %v2208 = vadd.f32 0.0, %v2207
        %v2209 = vpop.f32.mrb[0].mxu0
        %v2210 = vpop.f32.mrb[0].mxu0
        %2211 = vdwg.mxu0
        %2212 = vmatprep.subr.bf16.mxu0 %v1638
        %2213 = vmatpush1.bf16.msra.mxu0 %v1637
        %2214 = vmatprep.subr.bf16.mxu0 %v1646
        %2215 = vmatpush1.bf16.msra.mxu0 %v1645
        %2216 = vmatprep.subr.bf16.mxu0 %v1654
        %2217 = vmatpush1.bf16.msra.mxu0 %v1653
        %2218 = vmatprep.subr.bf16.mxu0 %v1662
        %2219 = vmatpush1.bf16.msra.mxu0 %v1661
        %2220 = vmatprep.subr.bf16.mxu0 %v1670
        %2221 = vmatpush1.bf16.msra.mxu0 %v1669
        %2222 = vmatprep.subr.bf16.mxu0 %v1678
        %2223 = vmatpush1.bf16.msra.mxu0 %v1677
        %2224 = vmatprep.subr.bf16.mxu0 %v1686
        %2225 = vmatpush1.bf16.msra.mxu0 %v1685
        %2226 = vmatprep.subr.bf16.mxu0 %v1694
        %2227 = vmatpush1.bf16.msra.mxu0 %v1693
        %2228 = vmatprep.subr.bf16.mxu0 %v1702
        %2229 = vmatpush1.bf16.msra.mxu0 %v1701
        %2230 = vmatprep.subr.bf16.mxu0 %v1710
        %2231 = vmatpush1.bf16.msra.mxu0 %v1709
        %2232 = vmatprep.subr.bf16.mxu0 %v1718
        %2233 = vmatpush1.bf16.msra.mxu0 %v1717
        %2234 = vmatprep.subr.bf16.mxu0 %v1726
        %2235 = vmatpush1.bf16.msra.mxu0 %v1725
        %2236 = vmatprep.subr.bf16.mxu0 %v1734
        %2237 = vmatpush1.bf16.msra.mxu0 %v1733
        %2238 = vmatprep.subr.bf16.mxu0 %v1742
        %2239 = vmatpush1.bf16.msra.mxu0 %v1741
        %2240 = vmatprep.subr.bf16.mxu0 %v1750
        %2241 = vmatpush1.bf16.msra.mxu0 %v1749
        %2242 = vmatprep.subr.bf16.mxu0 %v1758
        %2243 = vmatpush1.bf16.msra.mxu0 %v1757
        %2244 = vmatprep.mubr.bf16.mxu0 %v2129
        %2245 = vmatmul.mubr.bf16.gmra.mrb[0].mxu0 %v2128
        %v2246 = vpop.f32.mrb[0].mxu0
        %v2247 = vadd.f32 0.0, %v2246
        %v2248 = vpop.f32.mrb[0].mxu0
        %v2249 = vadd.f32 0.0, %v2248
        %v2250 = vpop.f32.mrb[0].mxu0
        %v2251 = vpop.f32.mrb[0].mxu0
        %2252 = vdwg.mxu0
        %2253 = vmatprep.subr.bf16.mxu0 %v1640
        %2254 = vmatpush1.bf16.msra.mxu0 %v1639
        %2255 = vmatprep.subr.bf16.mxu0 %v1648
        %2256 = vmatpush1.bf16.msra.mxu0 %v1647
        %2257 = vmatprep.subr.bf16.mxu0 %v1656
        %2258 = vmatpush1.bf16.msra.mxu0 %v1655
        %2259 = vmatprep.subr.bf16.mxu0 %v1664
        %2260 = vmatpush1.bf16.msra.mxu0 %v1663
        %2261 = vmatprep.subr.bf16.mxu0 %v1672
        %2262 = vmatpush1.bf16.msra.mxu0 %v1671
        %2263 = vmatprep.subr.bf16.mxu0 %v1680
        %2264 = vmatpush1.bf16.msra.mxu0 %v1679
        %2265 = vmatprep.subr.bf16.mxu0 %v1688
        %2266 = vmatpush1.bf16.msra.mxu0 %v1687
        %2267 = vmatprep.subr.bf16.mxu0 %v1696
        %2268 = vmatpush1.bf16.msra.mxu0 %v1695
        %2269 = vmatprep.subr.bf16.mxu0 %v1704
        %2270 = vmatpush1.bf16.msra.mxu0 %v1703
        %2271 = vmatprep.subr.bf16.mxu0 %v1712
        %2272 = vmatpush1.bf16.msra.mxu0 %v1711
        %2273 = vmatprep.subr.bf16.mxu0 %v1720
        %2274 = vmatpush1.bf16.msra.mxu0 %v1719
        %2275 = vmatprep.subr.bf16.mxu0 %v1728
        %2276 = vmatpush1.bf16.msra.mxu0 %v1727
        %2277 = vmatprep.subr.bf16.mxu0 %v1736
        %2278 = vmatpush1.bf16.msra.mxu0 %v1735
        %2279 = vmatprep.subr.bf16.mxu0 %v1744
        %2280 = vmatpush1.bf16.msra.mxu0 %v1743
        %2281 = vmatprep.subr.bf16.mxu0 %v1752
        %2282 = vmatpush1.bf16.msra.mxu0 %v1751
        %2283 = vmatprep.subr.bf16.mxu0 %v1760
        %2284 = vmatpush1.bf16.msra.mxu0 %v1759
        %2285 = vmatprep.mubr.bf16.mxu0 %v2129
        %2286 = vmatmul.mubr.bf16.gmra.mrb[0].mxu0 %v2128
        %v2287 = vpop.f32.mrb[0].mxu0
        %v2288 = vadd.f32 0.0, %v2287
        %v2289 = vpop.f32.mrb[0].mxu0
        %v2290 = vadd.f32 0.0, %v2289
        %v2291 = vpop.f32.mrb[0].mxu0
        %v2292 = vpop.f32.mrb[0].mxu0
        %2293 = vdwg.mxu0
        %v2294 = vadd.f32 %v2120, %v2165
        %v2295 = vadd.f32 %v2121, %v2167
        %v2296 = vadd.f32 %v2122, %v2206
        %v2297 = vadd.f32 %v2123, %v2208
        %v2298 = vadd.f32 %v2124, %v2247
        %v2299 = vadd.f32 %v2125, %v2249
        %v2300 = vadd.f32 %v2126, %v2288
        %v2301 = vadd.f32 %v2127, %v2290
        %v2302 = vxor.u32 %v2294, 2147483648
        %v2303 = vxor.u32 %v2295, 2147483648
        %v2304 = vmul.f32 %v2302, 1.442695
        %v2305 = vpow.pop %v2304
        %v2306 = vmul.f32 %v2303, 1.442695
        %v2307 = vpow.pop %v2306
        %v2308 = vadd.f32 %v2305, 1.0
        %v2309 = vadd.f32 %v2307, 1.0
        %v2310 = vrcp.pop %v2308
        %v2311 = vmul.f32 1.0, %v2310
        %v2312 = vrcp.pop %v2309
        %v2313 = vmul.f32 1.0, %v2312
        %v2314 = vxor.u32 %v2296, 2147483648
        %v2315 = vxor.u32 %v2297, 2147483648
        %v2316 = vmul.f32 %v2314, 1.442695
        %v2317 = vpow.pop %v2316
        %v2318 = vmul.f32 %v2315, 1.442695
        %v2319 = vpow.pop %v2318
        %v2320 = vadd.f32 %v2317, 1.0
        %v2321 = vadd.f32 %v2319, 1.0
        %v2322 = vrcp.pop %v2320
        %v2323 = vmul.f32 1.0, %v2322
        %v2324 = vrcp.pop %v2321
        %v2325 = vmul.f32 1.0, %v2324
        %v2326 = vtanh.pop %v2298
        %v2327 = vtanh.pop %v2299
        %v2328 = vxor.u32 %v2300, 2147483648
        %v2329 = vxor.u32 %v2301, 2147483648
        %v2330 = vmul.f32 %v2328, 1.442695
        %v2331 = vpow.pop %v2330
        %v2332 = vmul.f32 %v2329, 1.442695
        %v2333 = vpow.pop %v2332
        %v2334 = vadd.f32 %v2331, 1.0
        %v2335 = vadd.f32 %v2333, 1.0
        %v2336 = vrcp.pop %v2334
        %v2337 = vmul.f32 1.0, %v2336
        %v2338 = vrcp.pop %v2335
        %v2339 = vmul.f32 1.0, %v2338
        %v2340 = vmul.f32 %v2323, %v2103
        %v2341 = vmul.f32 %v2325, %v2104
        %v2342 = vmul.f32 %v2311, %v2326
        %v2343 = vmul.f32 %v2313, %v2327
        %v2344 = vadd.f32 %v2340, %v2342
        %v2345 = vadd.f32 %v2341, %v2343
        %v2346 = vtanh.pop %v2344
        %v2347 = vtanh.pop %v2345
        %v2348 = vmul.f32 %v2337, %v2346
        %v2349 = vmul.f32 %v2339, %v2347
        %vm2350 = vcmp.eq.s32.totalorder %v1109, 1
        %v2351 = vsel %vm2350, 1, 0
        %2352 = vset.pattern.permute.xlu0 0
        %2353 = vperm.xlu0 %2352, %v2351
        %v2354 = vpop.permute.xlu0 %2353
        %vm2355 = vcmp.eq.s32.totalorder %v2354, 1
        %v2356 = vsel %vm2355, %v2348, %v2115
        %v2357 = vsel %vm2355, %v2349, %v2116
        %s2358 = smul.u32 2, 8
        %s2359 = smul.addr %s2358, 8
        %s2360 = scalar_lea.vmem [#allocation2], %s2359
        %v2361 = vld [vmem:[%s2360] sm:$0xff]
        %v2362 = vld [vmem:[%s2360 + $0x8] sm:$0xff]
        %v2363 = vld [vmem:[%s2360 + $0x10] sm:$0xff]
        %v2364 = vld [vmem:[%s2360 + $0x18] sm:$0xff]
        %v2365 = vld [vmem:[%s2360 + $0x20] sm:$0xff]
        %v2366 = vld [vmem:[%s2360 + $0x28] sm:$0xff]
        %v2367 = vld [vmem:[%s2360 + $0x30] sm:$0xff]
        %v2368 = vld [vmem:[%s2360 + $0x38] sm:$0xff]
        %v2369 = vpack.c.bf16 %v2348, %v2348
        %v2370 = vpack.c.bf16 %v2349, %v2349
        %2371 = vmatprep.subr.bf16.mxu0 %v1634
        %2372 = vmatpush1.bf16.msra.mxu0 %v1633
        %2373 = vmatprep.subr.bf16.mxu0 %v1642
        %2374 = vmatpush1.bf16.msra.mxu0 %v1641
        %2375 = vmatprep.subr.bf16.mxu0 %v1650
        %2376 = vmatpush1.bf16.msra.mxu0 %v1649
        %2377 = vmatprep.subr.bf16.mxu0 %v1658
        %2378 = vmatpush1.bf16.msra.mxu0 %v1657
        %2379 = vmatprep.subr.bf16.mxu0 %v1666
        %2380 = vmatpush1.bf16.msra.mxu0 %v1665
        %2381 = vmatprep.subr.bf16.mxu0 %v1674
        %2382 = vmatpush1.bf16.msra.mxu0 %v1673
        %2383 = vmatprep.subr.bf16.mxu0 %v1682
        %2384 = vmatpush1.bf16.msra.mxu0 %v1681
        %2385 = vmatprep.subr.bf16.mxu0 %v1690
        %2386 = vmatpush1.bf16.msra.mxu0 %v1689
        %2387 = vmatprep.subr.bf16.mxu0 %v1698
        %2388 = vmatpush1.bf16.msra.mxu0 %v1697
        %2389 = vmatprep.subr.bf16.mxu0 %v1706
        %2390 = vmatpush1.bf16.msra.mxu0 %v1705
        %2391 = vmatprep.subr.bf16.mxu0 %v1714
        %2392 = vmatpush1.bf16.msra.mxu0 %v1713
        %2393 = vmatprep.subr.bf16.mxu0 %v1722
        %2394 = vmatpush1.bf16.msra.mxu0 %v1721
        %2395 = vmatprep.subr.bf16.mxu0 %v1730
        %2396 = vmatpush1.bf16.msra.mxu0 %v1729
        %2397 = vmatprep.subr.bf16.mxu0 %v1738
        %2398 = vmatpush1.bf16.msra.mxu0 %v1737
        %2399 = vmatprep.subr.bf16.mxu0 %v1746
        %2400 = vmatpush1.bf16.msra.mxu0 %v1745
        %2401 = vmatprep.subr.bf16.mxu0 %v1754
        %2402 = vmatpush1.bf16.msra.mxu0 %v1753
        %2403 = vmatprep.mubr.bf16.mxu0 %v2370
        %2404 = vmatmul.mubr.bf16.gmra.mrb[0].mxu0 %v2369
        %v2405 = vpop.f32.mrb[0].mxu0
        %v2406 = vadd.f32 0.0, %v2405
        %v2407 = vpop.f32.mrb[0].mxu0
        %v2408 = vadd.f32 0.0, %v2407
        %v2409 = vpop.f32.mrb[0].mxu0
        %v2410 = vpop.f32.mrb[0].mxu0
        %2411 = vdwg.mxu0
        %2412 = vmatprep.subr.bf16.mxu0 %v1636
        %2413 = vmatpush1.bf16.msra.mxu0 %v1635
        %2414 = vmatprep.subr.bf16.mxu0 %v1644
        %2415 = vmatpush1.bf16.msra.mxu0 %v1643
        %2416 = vmatprep.subr.bf16.mxu0 %v1652
        %2417 = vmatpush1.bf16.msra.mxu0 %v1651
        %2418 = vmatprep.subr.bf16.mxu0 %v1660
        %2419 = vmatpush1.bf16.msra.mxu0 %v1659
        %2420 = vmatprep.subr.bf16.mxu0 %v1668
        %2421 = vmatpush1.bf16.msra.mxu0 %v1667
        %2422 = vmatprep.subr.bf16.mxu0 %v1676
        %2423 = vmatpush1.bf16.msra.mxu0 %v1675
        %2424 = vmatprep.subr.bf16.mxu0 %v1684
        %2425 = vmatpush1.bf16.msra.mxu0 %v1683
        %2426 = vmatprep.subr.bf16.mxu0 %v1692
        %2427 = vmatpush1.bf16.msra.mxu0 %v1691
        %2428 = vmatprep.subr.bf16.mxu0 %v1700
        %2429 = vmatpush1.bf16.msra.mxu0 %v1699
        %2430 = vmatprep.subr.bf16.mxu0 %v1708
        %2431 = vmatpush1.bf16.msra.mxu0 %v1707
        %2432 = vmatprep.subr.bf16.mxu0 %v1716
        %2433 = vmatpush1.bf16.msra.mxu0 %v1715
        %2434 = vmatprep.subr.bf16.mxu0 %v1724
        %2435 = vmatpush1.bf16.msra.mxu0 %v1723
        %2436 = vmatprep.subr.bf16.mxu0 %v1732
        %2437 = vmatpush1.bf16.msra.mxu0 %v1731
        %2438 = vmatprep.subr.bf16.mxu0 %v1740
        %2439 = vmatpush1.bf16.msra.mxu0 %v1739
        %2440 = vmatprep.subr.bf16.mxu0 %v1748
        %2441 = vmatpush1.bf16.msra.mxu0 %v1747
        %2442 = vmatprep.subr.bf16.mxu0 %v1756
        %2443 = vmatpush1.bf16.msra.mxu0 %v1755
        %2444 = vmatprep.mubr.bf16.mxu0 %v2370
        %2445 = vmatmul.mubr.bf16.gmra.mrb[0].mxu0 %v2369
        %v2446 = vpop.f32.mrb[0].mxu0
        %v2447 = vadd.f32 0.0, %v2446
        %v2448 = vpop.f32.mrb[0].mxu0
        %v2449 = vadd.f32 0.0, %v2448
        %v2450 = vpop.f32.mrb[0].mxu0
        %v2451 = vpop.f32.mrb[0].mxu0
        %2452 = vdwg.mxu0
        %2453 = vmatprep.subr.bf16.mxu0 %v1638
        %2454 = vmatpush1.bf16.msra.mxu0 %v1637
        %2455 = vmatprep.subr.bf16.mxu0 %v1646
        %2456 = vmatpush1.bf16.msra.mxu0 %v1645
        %2457 = vmatprep.subr.bf16.mxu0 %v1654
        %2458 = vmatpush1.bf16.msra.mxu0 %v1653
        %2459 = vmatprep.subr.bf16.mxu0 %v1662
        %2460 = vmatpush1.bf16.msra.mxu0 %v1661
        %2461 = vmatprep.subr.bf16.mxu0 %v1670
        %2462 = vmatpush1.bf16.msra.mxu0 %v1669
        %2463 = vmatprep.subr.bf16.mxu0 %v1678
        %2464 = vmatpush1.bf16.msra.mxu0 %v1677
        %2465 = vmatprep.subr.bf16.mxu0 %v1686
        %2466 = vmatpush1.bf16.msra.mxu0 %v1685
        %2467 = vmatprep.subr.bf16.mxu0 %v1694
        %2468 = vmatpush1.bf16.msra.mxu0 %v1693
        %2469 = vmatprep.subr.bf16.mxu0 %v1702
        %2470 = vmatpush1.bf16.msra.mxu0 %v1701
        %2471 = vmatprep.subr.bf16.mxu0 %v1710
        %2472 = vmatpush1.bf16.msra.mxu0 %v1709
        %2473 = vmatprep.subr.bf16.mxu0 %v1718
        %2474 = vmatpush1.bf16.msra.mxu0 %v1717
        %2475 = vmatprep.subr.bf16.mxu0 %v1726
        %2476 = vmatpush1.bf16.msra.mxu0 %v1725
        %2477 = vmatprep.subr.bf16.mxu0 %v1734
        %2478 = vmatpush1.bf16.msra.mxu0 %v1733
        %2479 = vmatprep.subr.bf16.mxu0 %v1742
        %2480 = vmatpush1.bf16.msra.mxu0 %v1741
        %2481 = vmatprep.subr.bf16.mxu0 %v1750
        %2482 = vmatpush1.bf16.msra.mxu0 %v1749
        %2483 = vmatprep.subr.bf16.mxu0 %v1758
        %2484 = vmatpush1.bf16.msra.mxu0 %v1757
        %2485 = vmatprep.mubr.bf16.mxu0 %v2370
        %2486 = vmatmul.mubr.bf16.gmra.mrb[0].mxu0 %v2369
        %v2487 = vpop.f32.mrb[0].mxu0
        %v2488 = vadd.f32 0.0, %v2487
        %v2489 = vpop.f32.mrb[0].mxu0
        %v2490 = vadd.f32 0.0, %v2489
        %v2491 = vpop.f32.mrb[0].mxu0
        %v2492 = vpop.f32.mrb[0].mxu0
        %2493 = vdwg.mxu0
        %2494 = vmatprep.subr.bf16.mxu0 %v1640
        %2495 = vmatpush1.bf16.msra.mxu0 %v1639
        %2496 = vmatprep.subr.bf16.mxu0 %v1648
        %2497 = vmatpush1.bf16.msra.mxu0 %v1647
        %2498 = vmatprep.subr.bf16.mxu0 %v1656
        %2499 = vmatpush1.bf16.msra.mxu0 %v1655
        %2500 = vmatprep.subr.bf16.mxu0 %v1664
        %2501 = vmatpush1.bf16.msra.mxu0 %v1663
        %2502 = vmatprep.subr.bf16.mxu0 %v1672
        %2503 = vmatpush1.bf16.msra.mxu0 %v1671
        %2504 = vmatprep.subr.bf16.mxu0 %v1680
        %2505 = vmatpush1.bf16.msra.mxu0 %v1679
        %2506 = vmatprep.subr.bf16.mxu0 %v1688
        %2507 = vmatpush1.bf16.msra.mxu0 %v1687
        %2508 = vmatprep.subr.bf16.mxu0 %v1696
        %2509 = vmatpush1.bf16.msra.mxu0 %v1695
        %2510 = vmatprep.subr.bf16.mxu0 %v1704
        %2511 = vmatpush1.bf16.msra.mxu0 %v1703
        %2512 = vmatprep.subr.bf16.mxu0 %v1712
        %2513 = vmatpush1.bf16.msra.mxu0 %v1711
        %2514 = vmatprep.subr.bf16.mxu0 %v1720
        %2515 = vmatpush1.bf16.msra.mxu0 %v1719
        %2516 = vmatprep.subr.bf16.mxu0 %v1728
        %2517 = vmatpush1.bf16.msra.mxu0 %v1727
        %2518 = vmatprep.subr.bf16.mxu0 %v1736
        %2519 = vmatpush1.bf16.msra.mxu0 %v1735
        %2520 = vmatprep.subr.bf16.mxu0 %v1744
        %2521 = vmatpush1.bf16.msra.mxu0 %v1743
        %2522 = vmatprep.subr.bf16.mxu0 %v1752
        %2523 = vmatpush1.bf16.msra.mxu0 %v1751
        %2524 = vmatprep.subr.bf16.mxu0 %v1760
        %2525 = vmatpush1.bf16.msra.mxu0 %v1759
        %2526 = vmatprep.mubr.bf16.mxu0 %v2370
        %2527 = vmatmul.mubr.bf16.gmra.mrb[0].mxu0 %v2369
        %v2528 = vpop.f32.mrb[0].mxu0
        %v2529 = vadd.f32 0.0, %v2528
        %v2530 = vpop.f32.mrb[0].mxu0
        %v2531 = vadd.f32 0.0, %v2530
        %v2532 = vpop.f32.mrb[0].mxu0
        %v2533 = vpop.f32.mrb[0].mxu0
        %2534 = vdwg.mxu0
        %v2535 = vadd.f32 %v2361, %v2406
        %v2536 = vadd.f32 %v2362, %v2408
        %v2537 = vadd.f32 %v2363, %v2447
        %v2538 = vadd.f32 %v2364, %v2449
        %v2539 = vadd.f32 %v2365, %v2488
        %v2540 = vadd.f32 %v2366, %v2490
        %v2541 = vadd.f32 %v2367, %v2529
        %v2542 = vadd.f32 %v2368, %v2531
        %v2543 = vxor.u32 %v2535, 2147483648
        %v2544 = vxor.u32 %v2536, 2147483648
        %v2545 = vmul.f32 %v2543, 1.442695
        %v2546 = vpow.pop %v2545
        %v2547 = vmul.f32 %v2544, 1.442695
        %v2548 = vpow.pop %v2547
        %v2549 = vadd.f32 %v2546, 1.0
        %v2550 = vadd.f32 %v2548, 1.0
        %v2551 = vrcp.pop %v2549
        %v2552 = vmul.f32 1.0, %v2551
        %v2553 = vrcp.pop %v2550
        %v2554 = vmul.f32 1.0, %v2553
        %v2555 = vxor.u32 %v2537, 2147483648
        %v2556 = vxor.u32 %v2538, 2147483648
        %v2557 = vmul.f32 %v2555, 1.442695
        %v2558 = vpow.pop %v2557
        %v2559 = vmul.f32 %v2556, 1.442695
        %v2560 = vpow.pop %v2559
        %v2561 = vadd.f32 %v2558, 1.0
        %v2562 = vadd.f32 %v2560, 1.0
        %v2563 = vrcp.pop %v2561
        %v2564 = vmul.f32 1.0, %v2563
        %v2565 = vrcp.pop %v2562
        %v2566 = vmul.f32 1.0, %v2565
        %v2567 = vtanh.pop %v2539
        %v2568 = vtanh.pop %v2540
        %v2569 = vxor.u32 %v2541, 2147483648
        %v2570 = vxor.u32 %v2542, 2147483648
        %v2571 = vmul.f32 %v2569, 1.442695
        %v2572 = vpow.pop %v2571
        %v2573 = vmul.f32 %v2570, 1.442695
        %v2574 = vpow.pop %v2573
        %v2575 = vadd.f32 %v2572, 1.0
        %v2576 = vadd.f32 %v2574, 1.0
        %v2577 = vrcp.pop %v2575
        %v2578 = vmul.f32 1.0, %v2577
        %v2579 = vrcp.pop %v2576
        %v2580 = vmul.f32 1.0, %v2579
        %v2581 = vmul.f32 %v2564, %v2344
        %v2582 = vmul.f32 %v2566, %v2345
        %v2583 = vmul.f32 %v2552, %v2567
        %v2584 = vmul.f32 %v2554, %v2568
        %v2585 = vadd.f32 %v2581, %v2583
        %v2586 = vadd.f32 %v2582, %v2584
        %v2587 = vtanh.pop %v2585
        %v2588 = vtanh.pop %v2586
        %v2589 = vmul.f32 %v2578, %v2587
        %v2590 = vmul.f32 %v2580, %v2588
        %vm2591 = vcmp.eq.s32.totalorder %v1109, 2
        %v2592 = vsel %vm2591, 1, 0
        %2593 = vset.pattern.permute.xlu0 0
        %2594 = vperm.xlu0 %2593, %v2592
        %v2595 = vpop.permute.xlu0 %2594
        %vm2596 = vcmp.eq.s32.totalorder %v2595, 1
        %v2597 = vsel %vm2596, %v2589, %v2356
        %v2598 = vsel %vm2596, %v2590, %v2357
        %s2599 = smul.u32 3, 8
        %s2600 = smul.addr %s2599, 8
        %s2601 = scalar_lea.vmem [#allocation2], %s2600
        %v2602 = vld [vmem:[%s2601] sm:$0xff]
        %v2603 = vld [vmem:[%s2601 + $0x8] sm:$0xff]
        %v2604 = vld [vmem:[%s2601 + $0x10] sm:$0xff]
        %v2605 = vld [vmem:[%s2601 + $0x18] sm:$0xff]
        %v2606 = vld [vmem:[%s2601 + $0x20] sm:$0xff]
        %v2607 = vld [vmem:[%s2601 + $0x28] sm:$0xff]
        %v2608 = vld [vmem:[%s2601 + $0x30] sm:$0xff]
        %v2609 = vld [vmem:[%s2601 + $0x38] sm:$0xff]
        %v2610 = vpack.c.bf16 %v2589, %v2589
        %v2611 = vpack.c.bf16 %v2590, %v2590
        %2612 = vmatprep.subr.bf16.mxu0 %v1634
        %2613 = vmatpush1.bf16.msra.mxu0 %v1633
        %2614 = vmatprep.subr.bf16.mxu0 %v1642
        %2615 = vmatpush1.bf16.msra.mxu0 %v1641
        %2616 = vmatprep.subr.bf16.mxu0 %v1650
        %2617 = vmatpush1.bf16.msra.mxu0 %v1649
        %2618 = vmatprep.subr.bf16.mxu0 %v1658
        %2619 = vmatpush1.bf16.msra.mxu0 %v1657
        %2620 = vmatprep.subr.bf16.mxu0 %v1666
        %2621 = vmatpush1.bf16.msra.mxu0 %v1665
        %2622 = vmatprep.subr.bf16.mxu0 %v1674
        %2623 = vmatpush1.bf16.msra.mxu0 %v1673
        %2624 = vmatprep.subr.bf16.mxu0 %v1682
        %2625 = vmatpush1.bf16.msra.mxu0 %v1681
        %2626 = vmatprep.subr.bf16.mxu0 %v1690
        %2627 = vmatpush1.bf16.msra.mxu0 %v1689
        %2628 = vmatprep.subr.bf16.mxu0 %v1698
        %2629 = vmatpush1.bf16.msra.mxu0 %v1697
        %2630 = vmatprep.subr.bf16.mxu0 %v1706
        %2631 = vmatpush1.bf16.msra.mxu0 %v1705
        %2632 = vmatprep.subr.bf16.mxu0 %v1714
        %2633 = vmatpush1.bf16.msra.mxu0 %v1713
        %2634 = vmatprep.subr.bf16.mxu0 %v1722
        %2635 = vmatpush1.bf16.msra.mxu0 %v1721
        %2636 = vmatprep.subr.bf16.mxu0 %v1730
        %2637 = vmatpush1.bf16.msra.mxu0 %v1729
        %2638 = vmatprep.subr.bf16.mxu0 %v1738
        %2639 = vmatpush1.bf16.msra.mxu0 %v1737
        %2640 = vmatprep.subr.bf16.mxu0 %v1746
        %2641 = vmatpush1.bf16.msra.mxu0 %v1745
        %2642 = vmatprep.subr.bf16.mxu0 %v1754
        %2643 = vmatpush1.bf16.msra.mxu0 %v1753
        %2644 = vmatprep.mubr.bf16.mxu0 %v2611
        %2645 = vmatmul.mubr.bf16.gmra.mrb[0].mxu0 %v2610
        %v2646 = vpop.f32.mrb[0].mxu0
        %v2647 = vadd.f32 0.0, %v2646
        %v2648 = vpop.f32.mrb[0].mxu0
        %v2649 = vadd.f32 0.0, %v2648
        %v2650 = vpop.f32.mrb[0].mxu0
        %v2651 = vpop.f32.mrb[0].mxu0
        %2652 = vdwg.mxu0
        %2653 = vmatprep.subr.bf16.mxu0 %v1636
        %2654 = vmatpush1.bf16.msra.mxu0 %v1635
        %2655 = vmatprep.subr.bf16.mxu0 %v1644
        %2656 = vmatpush1.bf16.msra.mxu0 %v1643
        %2657 = vmatprep.subr.bf16.mxu0 %v1652
        %2658 = vmatpush1.bf16.msra.mxu0 %v1651
        %2659 = vmatprep.subr.bf16.mxu0 %v1660
        %2660 = vmatpush1.bf16.msra.mxu0 %v1659
        %2661 = vmatprep.subr.bf16.mxu0 %v1668
        %2662 = vmatpush1.bf16.msra.mxu0 %v1667
        %2663 = vmatprep.subr.bf16.mxu0 %v1676
        %2664 = vmatpush1.bf16.msra.mxu0 %v1675
        %2665 = vmatprep.subr.bf16.mxu0 %v1684
        %2666 = vmatpush1.bf16.msra.mxu0 %v1683
        %2667 = vmatprep.subr.bf16.mxu0 %v1692
        %2668 = vmatpush1.bf16.msra.mxu0 %v1691
        %2669 = vmatprep.subr.bf16.mxu0 %v1700
        %2670 = vmatpush1.bf16.msra.mxu0 %v1699
        %2671 = vmatprep.subr.bf16.mxu0 %v1708
        %2672 = vmatpush1.bf16.msra.mxu0 %v1707
        %2673 = vmatprep.subr.bf16.mxu0 %v1716
        %2674 = vmatpush1.bf16.msra.mxu0 %v1715
        %2675 = vmatprep.subr.bf16.mxu0 %v1724
        %2676 = vmatpush1.bf16.msra.mxu0 %v1723
        %2677 = vmatprep.subr.bf16.mxu0 %v1732
        %2678 = vmatpush1.bf16.msra.mxu0 %v1731
        %2679 = vmatprep.subr.bf16.mxu0 %v1740
        %2680 = vmatpush1.bf16.msra.mxu0 %v1739
        %2681 = vmatprep.subr.bf16.mxu0 %v1748
        %2682 = vmatpush1.bf16.msra.mxu0 %v1747
        %2683 = vmatprep.subr.bf16.mxu0 %v1756
        %2684 = vmatpush1.bf16.msra.mxu0 %v1755
        %2685 = vmatprep.mubr.bf16.mxu0 %v2611
        %2686 = vmatmul.mubr.bf16.gmra.mrb[0].mxu0 %v2610
        %v2687 = vpop.f32.mrb[0].mxu0
        %v2688 = vadd.f32 0.0, %v2687
        %v2689 = vpop.f32.mrb[0].mxu0
        %v2690 = vadd.f32 0.0, %v2689
        %v2691 = vpop.f32.mrb[0].mxu0
        %v2692 = vpop.f32.mrb[0].mxu0
        %2693 = vdwg.mxu0
        %2694 = vmatprep.subr.bf16.mxu0 %v1638
        %2695 = vmatpush1.bf16.msra.mxu0 %v1637
        %2696 = vmatprep.subr.bf16.mxu0 %v1646
        %2697 = vmatpush1.bf16.msra.mxu0 %v1645
        %2698 = vmatprep.subr.bf16.mxu0 %v1654
        %2699 = vmatpush1.bf16.msra.mxu0 %v1653
        %2700 = vmatprep.subr.bf16.mxu0 %v1662
        %2701 = vmatpush1.bf16.msra.mxu0 %v1661
        %2702 = vmatprep.subr.bf16.mxu0 %v1670
        %2703 = vmatpush1.bf16.msra.mxu0 %v1669
        %2704 = vmatprep.subr.bf16.mxu0 %v1678
        %2705 = vmatpush1.bf16.msra.mxu0 %v1677
        %2706 = vmatprep.subr.bf16.mxu0 %v1686
        %2707 = vmatpush1.bf16.msra.mxu0 %v1685
        %2708 = vmatprep.subr.bf16.mxu0 %v1694
        %2709 = vmatpush1.bf16.msra.mxu0 %v1693
        %2710 = vmatprep.subr.bf16.mxu0 %v1702
        %2711 = vmatpush1.bf16.msra.mxu0 %v1701
        %2712 = vmatprep.subr.bf16.mxu0 %v1710
        %2713 = vmatpush1.bf16.msra.mxu0 %v1709
        %2714 = vmatprep.subr.bf16.mxu0 %v1718
        %2715 = vmatpush1.bf16.msra.mxu0 %v1717
        %2716 = vmatprep.subr.bf16.mxu0 %v1726
        %2717 = vmatpush1.bf16.msra.mxu0 %v1725
        %2718 = vmatprep.subr.bf16.mxu0 %v1734
        %2719 = vmatpush1.bf16.msra.mxu0 %v1733
        %2720 = vmatprep.subr.bf16.mxu0 %v1742
        %2721 = vmatpush1.bf16.msra.mxu0 %v1741
        %2722 = vmatprep.subr.bf16.mxu0 %v1750
        %2723 = vmatpush1.bf16.msra.mxu0 %v1749
        %2724 = vmatprep.subr.bf16.mxu0 %v1758
        %2725 = vmatpush1.bf16.msra.mxu0 %v1757
        %2726 = vmatprep.mubr.bf16.mxu0 %v2611
        %2727 = vmatmul.mubr.bf16.gmra.mrb[0].mxu0 %v2610
        %v2728 = vpop.f32.mrb[0].mxu0
        %v2729 = vadd.f32 0.0, %v2728
        %v2730 = vpop.f32.mrb[0].mxu0
        %v2731 = vadd.f32 0.0, %v2730
        %v2732 = vpop.f32.mrb[0].mxu0
        %v2733 = vpop.f32.mrb[0].mxu0
        %2734 = vdwg.mxu0
        %2735 = vmatprep.subr.bf16.mxu0 %v1640
        %2736 = vmatpush1.bf16.msra.mxu0 %v1639
        %2737 = vmatprep.subr.bf16.mxu0 %v1648
        %2738 = vmatpush1.bf16.msra.mxu0 %v1647
        %2739 = vmatprep.subr.bf16.mxu0 %v1656
        %2740 = vmatpush1.bf16.msra.mxu0 %v1655
        %2741 = vmatprep.subr.bf16.mxu0 %v1664
        %2742 = vmatpush1.bf16.msra.mxu0 %v1663
        %2743 = vmatprep.subr.bf16.mxu0 %v1672
        %2744 = vmatpush1.bf16.msra.mxu0 %v1671
        %2745 = vmatprep.subr.bf16.mxu0 %v1680
        %2746 = vmatpush1.bf16.msra.mxu0 %v1679
        %2747 = vmatprep.subr.bf16.mxu0 %v1688
        %2748 = vmatpush1.bf16.msra.mxu0 %v1687
        %2749 = vmatprep.subr.bf16.mxu0 %v1696
        %2750 = vmatpush1.bf16.msra.mxu0 %v1695
        %2751 = vmatprep.subr.bf16.mxu0 %v1704
        %2752 = vmatpush1.bf16.msra.mxu0 %v1703
        %2753 = vmatprep.subr.bf16.mxu0 %v1712
        %2754 = vmatpush1.bf16.msra.mxu0 %v1711
        %2755 = vmatprep.subr.bf16.mxu0 %v1720
        %2756 = vmatpush1.bf16.msra.mxu0 %v1719
        %2757 = vmatprep.subr.bf16.mxu0 %v1728
        %2758 = vmatpush1.bf16.msra.mxu0 %v1727
        %2759 = vmatprep.subr.bf16.mxu0 %v1736
        %2760 = vmatpush1.bf16.msra.mxu0 %v1735
        %2761 = vmatprep.subr.bf16.mxu0 %v1744
        %2762 = vmatpush1.bf16.msra.mxu0 %v1743
        %2763 = vmatprep.subr.bf16.mxu0 %v1752
        %2764 = vmatpush1.bf16.msra.mxu0 %v1751
        %2765 = vmatprep.subr.bf16.mxu0 %v1760
        %2766 = vmatpush1.bf16.msra.mxu0 %v1759
        %2767 = vmatprep.mubr.bf16.mxu0 %v2611
        %2768 = vmatmul.mubr.bf16.gmra.mrb[0].mxu0 %v2610
        %v2769 = vpop.f32.mrb[0].mxu0
        %v2770 = vadd.f32 0.0, %v2769
        %v2771 = vpop.f32.mrb[0].mxu0
        %v2772 = vadd.f32 0.0, %v2771
        %v2773 = vpop.f32.mrb[0].mxu0
        %v2774 = vpop.f32.mrb[0].mxu0
        %2775 = vdwg.mxu0
        %v2776 = vadd.f32 %v2602, %v2647
        %v2777 = vadd.f32 %v2603, %v2649
        %v2778 = vadd.f32 %v2604, %v2688
        %v2779 = vadd.f32 %v2605, %v2690
        %v2780 = vadd.f32 %v2606, %v2729
        %v2781 = vadd.f32 %v2607, %v2731
        %v2782 = vadd.f32 %v2608, %v2770
        %v2783 = vadd.f32 %v2609, %v2772
        %v2784 = vxor.u32 %v2776, 2147483648
        %v2785 = vxor.u32 %v2777, 2147483648
        %v2786 = vmul.f32 %v2784, 1.442695
        %v2787 = vpow.pop %v2786
        %v2788 = vmul.f32 %v2785, 1.442695
        %v2789 = vpow.pop %v2788
        %v2790 = vadd.f32 %v2787, 1.0
        %v2791 = vadd.f32 %v2789, 1.0
        %v2792 = vrcp.pop %v2790
        %v2793 = vmul.f32 1.0, %v2792
        %v2794 = vrcp.pop %v2791
        %v2795 = vmul.f32 1.0, %v2794
        %v2796 = vxor.u32 %v2778, 2147483648
        %v2797 = vxor.u32 %v2779, 2147483648
        %v2798 = vmul.f32 %v2796, 1.442695
        %v2799 = vpow.pop %v2798
        %v2800 = vmul.f32 %v2797, 1.442695
        %v2801 = vpow.pop %v2800
        %v2802 = vadd.f32 %v2799, 1.0
        %v2803 = vadd.f32 %v2801, 1.0
        %v2804 = vrcp.pop %v2802
        %v2805 = vmul.f32 1.0, %v2804
        %v2806 = vrcp.pop %v2803
        %v2807 = vmul.f32 1.0, %v2806
        %v2808 = vtanh.pop %v2780
        %v2809 = vtanh.pop %v2781
        %v2810 = vxor.u32 %v2782, 2147483648
        %v2811 = vxor.u32 %v2783, 2147483648
        %v2812 = vmul.f32 %v2810, 1.442695
        %v2813 = vpow.pop %v2812
        %v2814 = vmul.f32 %v2811, 1.442695
        %v2815 = vpow.pop %v2814
        %v2816 = vadd.f32 %v2813, 1.0
        %v2817 = vadd.f32 %v2815, 1.0
        %v2818 = vrcp.pop %v2816
        %v2819 = vmul.f32 1.0, %v2818
        %v2820 = vrcp.pop %v2817
        %v2821 = vmul.f32 1.0, %v2820
        %v2822 = vmul.f32 %v2805, %v2585
        %v2823 = vmul.f32 %v2807, %v2586
        %v2824 = vmul.f32 %v2793, %v2808
        %v2825 = vmul.f32 %v2795, %v2809
        %v2826 = vadd.f32 %v2822, %v2824
        %v2827 = vadd.f32 %v2823, %v2825
        %v2828 = vtanh.pop %v2826
        %v2829 = vtanh.pop %v2827
        %v2830 = vmul.f32 %v2819, %v2828
        %v2831 = vmul.f32 %v2821, %v2829
        %vm2832 = vcmp.eq.s32.totalorder %v1109, 3
        %v2833 = vsel %vm2832, 1, 0
        %2834 = vset.pattern.permute.xlu0 0
        %2835 = vperm.xlu0 %2834, %v2833
        %v2836 = vpop.permute.xlu0 %2835
        %vm2837 = vcmp.eq.s32.totalorder %v2836, 1
        %v2838 = vsel %vm2837, %v2830, %v2597
        %v2839 = vsel %vm2837, %v2831, %v2598
        %s2840 = smul.u32 4, 8
        %s2841 = smul.addr %s2840, 8
        %s2842 = scalar_lea.vmem [#allocation2], %s2841
        %v2843 = vld [vmem:[%s2842] sm:$0xff]
        %v2844 = vld [vmem:[%s2842 + $0x8] sm:$0xff]
        %v2845 = vld [vmem:[%s2842 + $0x10] sm:$0xff]
        %v2846 = vld [vmem:[%s2842 + $0x18] sm:$0xff]
        %v2847 = vld [vmem:[%s2842 + $0x20] sm:$0xff]
        %v2848 = vld [vmem:[%s2842 + $0x28] sm:$0xff]
        %v2849 = vld [vmem:[%s2842 + $0x30] sm:$0xff]
        %v2850 = vld [vmem:[%s2842 + $0x38] sm:$0xff]
        %v2851 = vpack.c.bf16 %v2830, %v2830
        %v2852 = vpack.c.bf16 %v2831, %v2831
        %2853 = vmatprep.subr.bf16.mxu0 %v1634
        %2854 = vmatpush1.bf16.msra.mxu0 %v1633
        %2855 = vmatprep.subr.bf16.mxu0 %v1642
        %2856 = vmatpush1.bf16.msra.mxu0 %v1641
        %2857 = vmatprep.subr.bf16.mxu0 %v1650
        %2858 = vmatpush1.bf16.msra.mxu0 %v1649
        %2859 = vmatprep.subr.bf16.mxu0 %v1658
        %2860 = vmatpush1.bf16.msra.mxu0 %v1657
        %2861 = vmatprep.subr.bf16.mxu0 %v1666
        %2862 = vmatpush1.bf16.msra.mxu0 %v1665
        %2863 = vmatprep.subr.bf16.mxu0 %v1674
        %2864 = vmatpush1.bf16.msra.mxu0 %v1673
        %2865 = vmatprep.subr.bf16.mxu0 %v1682
        %2866 = vmatpush1.bf16.msra.mxu0 %v1681
        %2867 = vmatprep.subr.bf16.mxu0 %v1690
        %2868 = vmatpush1.bf16.msra.mxu0 %v1689
        %2869 = vmatprep.subr.bf16.mxu0 %v1698
        %2870 = vmatpush1.bf16.msra.mxu0 %v1697
        %2871 = vmatprep.subr.bf16.mxu0 %v1706
        %2872 = vmatpush1.bf16.msra.mxu0 %v1705
        %2873 = vmatprep.subr.bf16.mxu0 %v1714
        %2874 = vmatpush1.bf16.msra.mxu0 %v1713
        %2875 = vmatprep.subr.bf16.mxu0 %v1722
        %2876 = vmatpush1.bf16.msra.mxu0 %v1721
        %2877 = vmatprep.subr.bf16.mxu0 %v1730
        %2878 = vmatpush1.bf16.msra.mxu0 %v1729
        %2879 = vmatprep.subr.bf16.mxu0 %v1738
        %2880 = vmatpush1.bf16.msra.mxu0 %v1737
        %2881 = vmatprep.subr.bf16.mxu0 %v1746
        %2882 = vmatpush1.bf16.msra.mxu0 %v1745
        %2883 = vmatprep.subr.bf16.mxu0 %v1754
        %2884 = vmatpush1.bf16.msra.mxu0 %v1753
        %2885 = vmatprep.mubr.bf16.mxu0 %v2852
        %2886 = vmatmul.mubr.bf16.gmra.mrb[0].mxu0 %v2851
        %v2887 = vpop.f32.mrb[0].mxu0
        %v2888 = vadd.f32 0.0, %v2887
        %v2889 = vpop.f32.mrb[0].mxu0
        %v2890 = vadd.f32 0.0, %v2889
        %v2891 = vpop.f32.mrb[0].mxu0
        %v2892 = vpop.f32.mrb[0].mxu0
        %2893 = vdwg.mxu0
        %2894 = vmatprep.subr.bf16.mxu0 %v1636
        %2895 = vmatpush1.bf16.msra.mxu0 %v1635
        %2896 = vmatprep.subr.bf16.mxu0 %v1644
        %2897 = vmatpush1.bf16.msra.mxu0 %v1643
        %2898 = vmatprep.subr.bf16.mxu0 %v1652
        %2899 = vmatpush1.bf16.msra.mxu0 %v1651
        %2900 = vmatprep.subr.bf16.mxu0 %v1660
        %2901 = vmatpush1.bf16.msra.mxu0 %v1659
        %2902 = vmatprep.subr.bf16.mxu0 %v1668
        %2903 = vmatpush1.bf16.msra.mxu0 %v1667
        %2904 = vmatprep.subr.bf16.mxu0 %v1676
        %2905 = vmatpush1.bf16.msra.mxu0 %v1675
        %2906 = vmatprep.subr.bf16.mxu0 %v1684
        %2907 = vmatpush1.bf16.msra.mxu0 %v1683
        %2908 = vmatprep.subr.bf16.mxu0 %v1692
        %2909 = vmatpush1.bf16.msra.mxu0 %v1691
        %2910 = vmatprep.subr.bf16.mxu0 %v1700
        %2911 = vmatpush1.bf16.msra.mxu0 %v1699
        %2912 = vmatprep.subr.bf16.mxu0 %v1708
        %2913 = vmatpush1.bf16.msra.mxu0 %v1707
        %2914 = vmatprep.subr.bf16.mxu0 %v1716
        %2915 = vmatpush1.bf16.msra.mxu0 %v1715
        %2916 = vmatprep.subr.bf16.mxu0 %v1724
        %2917 = vmatpush1.bf16.msra.mxu0 %v1723
        %2918 = vmatprep.subr.bf16.mxu0 %v1732
        %2919 = vmatpush1.bf16.msra.mxu0 %v1731
        %2920 = vmatprep.subr.bf16.mxu0 %v1740
        %2921 = vmatpush1.bf16.msra.mxu0 %v1739
        %2922 = vmatprep.subr.bf16.mxu0 %v1748
        %2923 = vmatpush1.bf16.msra.mxu0 %v1747
        %2924 = vmatprep.subr.bf16.mxu0 %v1756
        %2925 = vmatpush1.bf16.msra.mxu0 %v1755
        %2926 = vmatprep.mubr.bf16.mxu0 %v2852
        %2927 = vmatmul.mubr.bf16.gmra.mrb[0].mxu0 %v2851
        %v2928 = vpop.f32.mrb[0].mxu0
        %v2929 = vadd.f32 0.0, %v2928
        %v2930 = vpop.f32.mrb[0].mxu0
        %v2931 = vadd.f32 0.0, %v2930
        %v2932 = vpop.f32.mrb[0].mxu0
        %v2933 = vpop.f32.mrb[0].mxu0
        %2934 = vdwg.mxu0
        %2935 = vmatprep.subr.bf16.mxu0 %v1638
        %2936 = vmatpush1.bf16.msra.mxu0 %v1637
        %2937 = vmatprep.subr.bf16.mxu0 %v1646
        %2938 = vmatpush1.bf16.msra.mxu0 %v1645
        %2939 = vmatprep.subr.bf16.mxu0 %v1654
        %2940 = vmatpush1.bf16.msra.mxu0 %v1653
        %2941 = vmatprep.subr.bf16.mxu0 %v1662
        %2942 = vmatpush1.bf16.msra.mxu0 %v1661
        %2943 = vmatprep.subr.bf16.mxu0 %v1670
        %2944 = vmatpush1.bf16.msra.mxu0 %v1669
        %2945 = vmatprep.subr.bf16.mxu0 %v1678
        %2946 = vmatpush1.bf16.msra.mxu0 %v1677
        %2947 = vmatprep.subr.bf16.mxu0 %v1686
        %2948 = vmatpush1.bf16.msra.mxu0 %v1685
        %2949 = vmatprep.subr.bf16.mxu0 %v1694
        %2950 = vmatpush1.bf16.msra.mxu0 %v1693
        %2951 = vmatprep.subr.bf16.mxu0 %v1702
        %2952 = vmatpush1.bf16.msra.mxu0 %v1701
        %2953 = vmatprep.subr.bf16.mxu0 %v1710
        %2954 = vmatpush1.bf16.msra.mxu0 %v1709
        %2955 = vmatprep.subr.bf16.mxu0 %v1718
        %2956 = vmatpush1.bf16.msra.mxu0 %v1717
        %2957 = vmatprep.subr.bf16.mxu0 %v1726
        %2958 = vmatpush1.bf16.msra.mxu0 %v1725
        %2959 = vmatprep.subr.bf16.mxu0 %v1734
        %2960 = vmatpush1.bf16.msra.mxu0 %v1733
        %2961 = vmatprep.subr.bf16.mxu0 %v1742
        %2962 = vmatpush1.bf16.msra.mxu0 %v1741
        %2963 = vmatprep.subr.bf16.mxu0 %v1750
        %2964 = vmatpush1.bf16.msra.mxu0 %v1749
        %2965 = vmatprep.subr.bf16.mxu0 %v1758
        %2966 = vmatpush1.bf16.msra.mxu0 %v1757
        %2967 = vmatprep.mubr.bf16.mxu0 %v2852
        %2968 = vmatmul.mubr.bf16.gmra.mrb[0].mxu0 %v2851
        %v2969 = vpop.f32.mrb[0].mxu0
        %v2970 = vadd.f32 0.0, %v2969
        %v2971 = vpop.f32.mrb[0].mxu0
        %v2972 = vadd.f32 0.0, %v2971
        %v2973 = vpop.f32.mrb[0].mxu0
        %v2974 = vpop.f32.mrb[0].mxu0
        %2975 = vdwg.mxu0
        %2976 = vmatprep.subr.bf16.mxu0 %v1640
        %2977 = vmatpush1.bf16.msra.mxu0 %v1639
        %2978 = vmatprep.subr.bf16.mxu0 %v1648
        %2979 = vmatpush1.bf16.msra.mxu0 %v1647
        %2980 = vmatprep.subr.bf16.mxu0 %v1656
        %2981 = vmatpush1.bf16.msra.mxu0 %v1655
        %2982 = vmatprep.subr.bf16.mxu0 %v1664
        %2983 = vmatpush1.bf16.msra.mxu0 %v1663
        %2984 = vmatprep.subr.bf16.mxu0 %v1672
        %2985 = vmatpush1.bf16.msra.mxu0 %v1671
        %2986 = vmatprep.subr.bf16.mxu0 %v1680
        %2987 = vmatpush1.bf16.msra.mxu0 %v1679
        %2988 = vmatprep.subr.bf16.mxu0 %v1688
        %2989 = vmatpush1.bf16.msra.mxu0 %v1687
        %2990 = vmatprep.subr.bf16.mxu0 %v1696
        %2991 = vmatpush1.bf16.msra.mxu0 %v1695
        %2992 = vmatprep.subr.bf16.mxu0 %v1704
        %2993 = vmatpush1.bf16.msra.mxu0 %v1703
        %2994 = vmatprep.subr.bf16.mxu0 %v1712
        %2995 = vmatpush1.bf16.msra.mxu0 %v1711
        %2996 = vmatprep.subr.bf16.mxu0 %v1720
        %2997 = vmatpush1.bf16.msra.mxu0 %v1719
        %2998 = vmatprep.subr.bf16.mxu0 %v1728
        %2999 = vmatpush1.bf16.msra.mxu0 %v1727
        %3000 = vmatprep.subr.bf16.mxu0 %v1736
        %3001 = vmatpush1.bf16.msra.mxu0 %v1735
        %3002 = vmatprep.subr.bf16.mxu0 %v1744
        %3003 = vmatpush1.bf16.msra.mxu0 %v1743
        %3004 = vmatprep.subr.bf16.mxu0 %v1752
        %3005 = vmatpush1.bf16.msra.mxu0 %v1751
        %3006 = vmatprep.subr.bf16.mxu0 %v1760
        %3007 = vmatpush1.bf16.msra.mxu0 %v1759
        %3008 = vmatprep.mubr.bf16.mxu0 %v2852
        %3009 = vmatmul.mubr.bf16.gmra.mrb[0].mxu0 %v2851
        %v3010 = vpop.f32.mrb[0].mxu0
        %v3011 = vadd.f32 0.0, %v3010
        %v3012 = vpop.f32.mrb[0].mxu0
        %v3013 = vadd.f32 0.0, %v3012
        %v3014 = vpop.f32.mrb[0].mxu0
        %v3015 = vpop.f32.mrb[0].mxu0
        %3016 = vdwg.mxu0
        %v3017 = vadd.f32 %v2843, %v2888
        %v3018 = vadd.f32 %v2844, %v2890
        %v3019 = vadd.f32 %v2845, %v2929
        %v3020 = vadd.f32 %v2846, %v2931
        %v3021 = vadd.f32 %v2847, %v2970
        %v3022 = vadd.f32 %v2848, %v2972
        %v3023 = vadd.f32 %v2849, %v3011
        %v3024 = vadd.f32 %v2850, %v3013
        %v3025 = vxor.u32 %v3017, 2147483648
        %v3026 = vxor.u32 %v3018, 2147483648
        %v3027 = vmul.f32 %v3025, 1.442695
        %v3028 = vpow.pop %v3027
        %v3029 = vmul.f32 %v3026, 1.442695
        %v3030 = vpow.pop %v3029
        %v3031 = vadd.f32 %v3028, 1.0
        %v3032 = vadd.f32 %v3030, 1.0
        %v3033 = vrcp.pop %v3031
        %v3034 = vmul.f32 1.0, %v3033
        %v3035 = vrcp.pop %v3032
        %v3036 = vmul.f32 1.0, %v3035
        %v3037 = vxor.u32 %v3019, 2147483648
        %v3038 = vxor.u32 %v3020, 2147483648
        %v3039 = vmul.f32 %v3037, 1.442695
        %v3040 = vpow.pop %v3039
        %v3041 = vmul.f32 %v3038, 1.442695
        %v3042 = vpow.pop %v3041
        %v3043 = vadd.f32 %v3040, 1.0
        %v3044 = vadd.f32 %v3042, 1.0
        %v3045 = vrcp.pop %v3043
        %v3046 = vmul.f32 1.0, %v3045
        %v3047 = vrcp.pop %v3044
        %v3048 = vmul.f32 1.0, %v3047
        %v3049 = vtanh.pop %v3021
        %v3050 = vtanh.pop %v3022
        %v3051 = vxor.u32 %v3023, 2147483648
        %v3052 = vxor.u32 %v3024, 2147483648
        %v3053 = vmul.f32 %v3051, 1.442695
        %v3054 = vpow.pop %v3053
        %v3055 = vmul.f32 %v3052, 1.442695
        %v3056 = vpow.pop %v3055
        %v3057 = vadd.f32 %v3054, 1.0
        %v3058 = vadd.f32 %v3056, 1.0
        %v3059 = vrcp.pop %v3057
        %v3060 = vmul.f32 1.0, %v3059
        %v3061 = vrcp.pop %v3058
        %v3062 = vmul.f32 1.0, %v3061
        %v3063 = vmul.f32 %v3046, %v2826
        %v3064 = vmul.f32 %v3048, %v2827
        %v3065 = vmul.f32 %v3034, %v3049
        %v3066 = vmul.f32 %v3036, %v3050
        %v3067 = vadd.f32 %v3063, %v3065
        %v3068 = vadd.f32 %v3064, %v3066
        %v3069 = vtanh.pop %v3067
        %v3070 = vtanh.pop %v3068
        %v3071 = vmul.f32 %v3060, %v3069
        %v3072 = vmul.f32 %v3062, %v3070
        %vm3073 = vcmp.eq.s32.totalorder %v1109, 4
        %v3074 = vsel %vm3073, 1, 0
        %3075 = vset.pattern.permute.xlu0 0
        %3076 = vperm.xlu0 %3075, %v3074
        %v3077 = vpop.permute.xlu0 %3076
        %vm3078 = vcmp.eq.s32.totalorder %v3077, 1
        %v3079 = vsel %vm3078, %v3071, %v2838
        %v3080 = vsel %vm3078, %v3072, %v2839
        %s3081 = smul.u32 5, 8
        %s3082 = smul.addr %s3081, 8
        %s3083 = scalar_lea.vmem [#allocation2], %s3082
        %v3084 = vld [vmem:[%s3083] sm:$0xff]
        %v3085 = vld [vmem:[%s3083 + $0x8] sm:$0xff]
        %v3086 = vld [vmem:[%s3083 + $0x10] sm:$0xff]
        %v3087 = vld [vmem:[%s3083 + $0x18] sm:$0xff]
        %v3088 = vld [vmem:[%s3083 + $0x20] sm:$0xff]
        %v3089 = vld [vmem:[%s3083 + $0x28] sm:$0xff]
        %v3090 = vld [vmem:[%s3083 + $0x30] sm:$0xff]
        %v3091 = vld [vmem:[%s3083 + $0x38] sm:$0xff]
        %v3092 = vpack.c.bf16 %v3071, %v3071
        %v3093 = vpack.c.bf16 %v3072, %v3072
        %3094 = vmatprep.subr.bf16.mxu0 %v1634
        %3095 = vmatpush1.bf16.msra.mxu0 %v1633
        %3096 = vmatprep.subr.bf16.mxu0 %v1642
        %3097 = vmatpush1.bf16.msra.mxu0 %v1641
        %3098 = vmatprep.subr.bf16.mxu0 %v1650
        %3099 = vmatpush1.bf16.msra.mxu0 %v1649
        %3100 = vmatprep.subr.bf16.mxu0 %v1658
        %3101 = vmatpush1.bf16.msra.mxu0 %v1657
        %3102 = vmatprep.subr.bf16.mxu0 %v1666
        %3103 = vmatpush1.bf16.msra.mxu0 %v1665
        %3104 = vmatprep.subr.bf16.mxu0 %v1674
        %3105 = vmatpush1.bf16.msra.mxu0 %v1673
        %3106 = vmatprep.subr.bf16.mxu0 %v1682
        %3107 = vmatpush1.bf16.msra.mxu0 %v1681
        %3108 = vmatprep.subr.bf16.mxu0 %v1690
        %3109 = vmatpush1.bf16.msra.mxu0 %v1689
        %3110 = vmatprep.subr.bf16.mxu0 %v1698
        %3111 = vmatpush1.bf16.msra.mxu0 %v1697
        %3112 = vmatprep.subr.bf16.mxu0 %v1706
        %3113 = vmatpush1.bf16.msra.mxu0 %v1705
        %3114 = vmatprep.subr.bf16.mxu0 %v1714
        %3115 = vmatpush1.bf16.msra.mxu0 %v1713
        %3116 = vmatprep.subr.bf16.mxu0 %v1722
        %3117 = vmatpush1.bf16.msra.mxu0 %v1721
        %3118 = vmatprep.subr.bf16.mxu0 %v1730
        %3119 = vmatpush1.bf16.msra.mxu0 %v1729
        %3120 = vmatprep.subr.bf16.mxu0 %v1738
        %3121 = vmatpush1.bf16.msra.mxu0 %v1737
        %3122 = vmatprep.subr.bf16.mxu0 %v1746
        %3123 = vmatpush1.bf16.msra.mxu0 %v1745
        %3124 = vmatprep.subr.bf16.mxu0 %v1754
        %3125 = vmatpush1.bf16.msra.mxu0 %v1753
        %3126 = vmatprep.mubr.bf16.mxu0 %v3093
        %3127 = vmatmul.mubr.bf16.gmra.mrb[0].mxu0 %v3092
        %v3128 = vpop.f32.mrb[0].mxu0
        %v3129 = vadd.f32 0.0, %v3128
        %v3130 = vpop.f32.mrb[0].mxu0
        %v3131 = vadd.f32 0.0, %v3130
        %v3132 = vpop.f32.mrb[0].mxu0
        %v3133 = vpop.f32.mrb[0].mxu0
        %3134 = vdwg.mxu0
        %3135 = vmatprep.subr.bf16.mxu0 %v1636
        %3136 = vmatpush1.bf16.msra.mxu0 %v1635
        %3137 = vmatprep.subr.bf16.mxu0 %v1644
        %3138 = vmatpush1.bf16.msra.mxu0 %v1643
        %3139 = vmatprep.subr.bf16.mxu0 %v1652
        %3140 = vmatpush1.bf16.msra.mxu0 %v1651
        %3141 = vmatprep.subr.bf16.mxu0 %v1660
        %3142 = vmatpush1.bf16.msra.mxu0 %v1659
        %3143 = vmatprep.subr.bf16.mxu0 %v1668
        %3144 = vmatpush1.bf16.msra.mxu0 %v1667
        %3145 = vmatprep.subr.bf16.mxu0 %v1676
        %3146 = vmatpush1.bf16.msra.mxu0 %v1675
        %3147 = vmatprep.subr.bf16.mxu0 %v1684
        %3148 = vmatpush1.bf16.msra.mxu0 %v1683
        %3149 = vmatprep.subr.bf16.mxu0 %v1692
        %3150 = vmatpush1.bf16.msra.mxu0 %v1691
        %3151 = vmatprep.subr.bf16.mxu0 %v1700
        %3152 = vmatpush1.bf16.msra.mxu0 %v1699
        %3153 = vmatprep.subr.bf16.mxu0 %v1708
        %3154 = vmatpush1.bf16.msra.mxu0 %v1707
        %3155 = vmatprep.subr.bf16.mxu0 %v1716
        %3156 = vmatpush1.bf16.msra.mxu0 %v1715
        %3157 = vmatprep.subr.bf16.mxu0 %v1724
        %3158 = vmatpush1.bf16.msra.mxu0 %v1723
        %3159 = vmatprep.subr.bf16.mxu0 %v1732
        %3160 = vmatpush1.bf16.msra.mxu0 %v1731
        %3161 = vmatprep.subr.bf16.mxu0 %v1740
        %3162 = vmatpush1.bf16.msra.mxu0 %v1739
        %3163 = vmatprep.subr.bf16.mxu0 %v1748
        %3164 = vmatpush1.bf16.msra.mxu0 %v1747
        %3165 = vmatprep.subr.bf16.mxu0 %v1756
        %3166 = vmatpush1.bf16.msra.mxu0 %v1755
        %3167 = vmatprep.mubr.bf16.mxu0 %v3093
        %3168 = vmatmul.mubr.bf16.gmra.mrb[0].mxu0 %v3092
        %v3169 = vpop.f32.mrb[0].mxu0
        %v3170 = vadd.f32 0.0, %v3169
        %v3171 = vpop.f32.mrb[0].mxu0
        %v3172 = vadd.f32 0.0, %v3171
        %v3173 = vpop.f32.mrb[0].mxu0
        %v3174 = vpop.f32.mrb[0].mxu0
        %3175 = vdwg.mxu0
        %3176 = vmatprep.subr.bf16.mxu0 %v1638
        %3177 = vmatpush1.bf16.msra.mxu0 %v1637
        %3178 = vmatprep.subr.bf16.mxu0 %v1646
        %3179 = vmatpush1.bf16.msra.mxu0 %v1645
        %3180 = vmatprep.subr.bf16.mxu0 %v1654
        %3181 = vmatpush1.bf16.msra.mxu0 %v1653
        %3182 = vmatprep.subr.bf16.mxu0 %v1662
        %3183 = vmatpush1.bf16.msra.mxu0 %v1661
        %3184 = vmatprep.subr.bf16.mxu0 %v1670
        %3185 = vmatpush1.bf16.msra.mxu0 %v1669
        %3186 = vmatprep.subr.bf16.mxu0 %v1678
        %3187 = vmatpush1.bf16.msra.mxu0 %v1677
        %3188 = vmatprep.subr.bf16.mxu0 %v1686
        %3189 = vmatpush1.bf16.msra.mxu0 %v1685
        %3190 = vmatprep.subr.bf16.mxu0 %v1694
        %3191 = vmatpush1.bf16.msra.mxu0 %v1693
        %3192 = vmatprep.subr.bf16.mxu0 %v1702
        %3193 = vmatpush1.bf16.msra.mxu0 %v1701
        %3194 = vmatprep.subr.bf16.mxu0 %v1710
        %3195 = vmatpush1.bf16.msra.mxu0 %v1709
        %3196 = vmatprep.subr.bf16.mxu0 %v1718
        %3197 = vmatpush1.bf16.msra.mxu0 %v1717
        %3198 = vmatprep.subr.bf16.mxu0 %v1726
        %3199 = vmatpush1.bf16.msra.mxu0 %v1725
        %3200 = vmatprep.subr.bf16.mxu0 %v1734
        %3201 = vmatpush1.bf16.msra.mxu0 %v1733
        %3202 = vmatprep.subr.bf16.mxu0 %v1742
        %3203 = vmatpush1.bf16.msra.mxu0 %v1741
        %3204 = vmatprep.subr.bf16.mxu0 %v1750
        %3205 = vmatpush1.bf16.msra.mxu0 %v1749
        %3206 = vmatprep.subr.bf16.mxu0 %v1758
        %3207 = vmatpush1.bf16.msra.mxu0 %v1757
        %3208 = vmatprep.mubr.bf16.mxu0 %v3093
        %3209 = vmatmul.mubr.bf16.gmra.mrb[0].mxu0 %v3092
        %v3210 = vpop.f32.mrb[0].mxu0
        %v3211 = vadd.f32 0.0, %v3210
        %v3212 = vpop.f32.mrb[0].mxu0
        %v3213 = vadd.f32 0.0, %v3212
        %v3214 = vpop.f32.mrb[0].mxu0
        %v3215 = vpop.f32.mrb[0].mxu0
        %3216 = vdwg.mxu0
        %3217 = vmatprep.subr.bf16.mxu0 %v1640
        %3218 = vmatpush1.bf16.msra.mxu0 %v1639
        %3219 = vmatprep.subr.bf16.mxu0 %v1648
        %3220 = vmatpush1.bf16.msra.mxu0 %v1647
        %3221 = vmatprep.subr.bf16.mxu0 %v1656
        %3222 = vmatpush1.bf16.msra.mxu0 %v1655
        %3223 = vmatprep.subr.bf16.mxu0 %v1664
        %3224 = vmatpush1.bf16.msra.mxu0 %v1663
        %3225 = vmatprep.subr.bf16.mxu0 %v1672
        %3226 = vmatpush1.bf16.msra.mxu0 %v1671
        %3227 = vmatprep.subr.bf16.mxu0 %v1680
        %3228 = vmatpush1.bf16.msra.mxu0 %v1679
        %3229 = vmatprep.subr.bf16.mxu0 %v1688
        %3230 = vmatpush1.bf16.msra.mxu0 %v1687
        %3231 = vmatprep.subr.bf16.mxu0 %v1696
        %3232 = vmatpush1.bf16.msra.mxu0 %v1695
        %3233 = vmatprep.subr.bf16.mxu0 %v1704
        %3234 = vmatpush1.bf16.msra.mxu0 %v1703
        %3235 = vmatprep.subr.bf16.mxu0 %v1712
        %3236 = vmatpush1.bf16.msra.mxu0 %v1711
        %3237 = vmatprep.subr.bf16.mxu0 %v1720
        %3238 = vmatpush1.bf16.msra.mxu0 %v1719
        %3239 = vmatprep.subr.bf16.mxu0 %v1728
        %3240 = vmatpush1.bf16.msra.mxu0 %v1727
        %3241 = vmatprep.subr.bf16.mxu0 %v1736
        %3242 = vmatpush1.bf16.msra.mxu0 %v1735
        %3243 = vmatprep.subr.bf16.mxu0 %v1744
        %3244 = vmatpush1.bf16.msra.mxu0 %v1743
        %3245 = vmatprep.subr.bf16.mxu0 %v1752
        %3246 = vmatpush1.bf16.msra.mxu0 %v1751
        %3247 = vmatprep.subr.bf16.mxu0 %v1760
        %3248 = vmatpush1.bf16.msra.mxu0 %v1759
        %3249 = vmatprep.mubr.bf16.mxu0 %v3093
        %3250 = vmatmul.mubr.bf16.gmra.mrb[0].mxu0 %v3092
        %v3251 = vpop.f32.mrb[0].mxu0
        %v3252 = vadd.f32 0.0, %v3251
        %v3253 = vpop.f32.mrb[0].mxu0
        %v3254 = vadd.f32 0.0, %v3253
        %v3255 = vpop.f32.mrb[0].mxu0
        %v3256 = vpop.f32.mrb[0].mxu0
        %3257 = vdwg.mxu0
        %v3258 = vadd.f32 %v3084, %v3129
        %v3259 = vadd.f32 %v3085, %v3131
        %v3260 = vadd.f32 %v3086, %v3170
        %v3261 = vadd.f32 %v3087, %v3172
        %v3262 = vadd.f32 %v3088, %v3211
        %v3263 = vadd.f32 %v3089, %v3213
        %v3264 = vadd.f32 %v3090, %v3252
        %v3265 = vadd.f32 %v3091, %v3254
        %v3266 = vxor.u32 %v3258, 2147483648
        %v3267 = vxor.u32 %v3259, 2147483648
        %v3268 = vmul.f32 %v3266, 1.442695
        %v3269 = vpow.pop %v3268
        %v3270 = vmul.f32 %v3267, 1.442695
        %v3271 = vpow.pop %v3270
        %v3272 = vadd.f32 %v3269, 1.0
        %v3273 = vadd.f32 %v3271, 1.0
        %v3274 = vrcp.pop %v3272
        %v3275 = vmul.f32 1.0, %v3274
        %v3276 = vrcp.pop %v3273
        %v3277 = vmul.f32 1.0, %v3276
        %v3278 = vxor.u32 %v3260, 2147483648
        %v3279 = vxor.u32 %v3261, 2147483648
        %v3280 = vmul.f32 %v3278, 1.442695
        %v3281 = vpow.pop %v3280
        %v3282 = vmul.f32 %v3279, 1.442695
        %v3283 = vpow.pop %v3282
        %v3284 = vadd.f32 %v3281, 1.0
        %v3285 = vadd.f32 %v3283, 1.0
        %v3286 = vrcp.pop %v3284
        %v3287 = vmul.f32 1.0, %v3286
        %v3288 = vrcp.pop %v3285
        %v3289 = vmul.f32 1.0, %v3288
        %v3290 = vtanh.pop %v3262
        %v3291 = vtanh.pop %v3263
        %v3292 = vxor.u32 %v3264, 2147483648
        %v3293 = vxor.u32 %v3265, 2147483648
        %v3294 = vmul.f32 %v3292, 1.442695
        %v3295 = vpow.pop %v3294
        %v3296 = vmul.f32 %v3293, 1.442695
        %v3297 = vpow.pop %v3296
        %v3298 = vadd.f32 %v3295, 1.0
        %v3299 = vadd.f32 %v3297, 1.0
        %v3300 = vrcp.pop %v3298
        %v3301 = vmul.f32 1.0, %v3300
        %v3302 = vrcp.pop %v3299
        %v3303 = vmul.f32 1.0, %v3302
        %v3304 = vmul.f32 %v3287, %v3067
        %v3305 = vmul.f32 %v3289, %v3068
        %v3306 = vmul.f32 %v3275, %v3290
        %v3307 = vmul.f32 %v3277, %v3291
        %v3308 = vadd.f32 %v3304, %v3306
        %v3309 = vadd.f32 %v3305, %v3307
        %v3310 = vtanh.pop %v3308
        %v3311 = vtanh.pop %v3309
        %v3312 = vmul.f32 %v3301, %v3310
        %v3313 = vmul.f32 %v3303, %v3311
        %vm3314 = vcmp.eq.s32.totalorder %v1109, 5
        %v3315 = vsel %vm3314, 1, 0
        %3316 = vset.pattern.permute.xlu0 0
        %3317 = vperm.xlu0 %3316, %v3315
        %v3318 = vpop.permute.xlu0 %3317
        %vm3319 = vcmp.eq.s32.totalorder %v3318, 1
        %v3320 = vsel %vm3319, %v3312, %v3079
        %v3321 = vsel %vm3319, %v3313, %v3080
        %s3322 = smul.u32 6, 8
        %s3323 = smul.addr %s3322, 8
        %s3324 = scalar_lea.vmem [#allocation2], %s3323
        %v3325 = vld [vmem:[%s3324] sm:$0xff]
        %v3326 = vld [vmem:[%s3324 + $0x8] sm:$0xff]
        %v3327 = vld [vmem:[%s3324 + $0x10] sm:$0xff]
        %v3328 = vld [vmem:[%s3324 + $0x18] sm:$0xff]
        %v3329 = vld [vmem:[%s3324 + $0x20] sm:$0xff]
        %v3330 = vld [vmem:[%s3324 + $0x28] sm:$0xff]
        %v3331 = vld [vmem:[%s3324 + $0x30] sm:$0xff]
        %v3332 = vld [vmem:[%s3324 + $0x38] sm:$0xff]
        %v3333 = vpack.c.bf16 %v3312, %v3312
        %v3334 = vpack.c.bf16 %v3313, %v3313
        %3335 = vmatprep.subr.bf16.mxu0 %v1634
        %3336 = vmatpush1.bf16.msra.mxu0 %v1633
        %3337 = vmatprep.subr.bf16.mxu0 %v1642
        %3338 = vmatpush1.bf16.msra.mxu0 %v1641
        %3339 = vmatprep.subr.bf16.mxu0 %v1650
        %3340 = vmatpush1.bf16.msra.mxu0 %v1649
        %3341 = vmatprep.subr.bf16.mxu0 %v1658
        %3342 = vmatpush1.bf16.msra.mxu0 %v1657
        %3343 = vmatprep.subr.bf16.mxu0 %v1666
        %3344 = vmatpush1.bf16.msra.mxu0 %v1665
        %3345 = vmatprep.subr.bf16.mxu0 %v1674
        %3346 = vmatpush1.bf16.msra.mxu0 %v1673
        %3347 = vmatprep.subr.bf16.mxu0 %v1682
        %3348 = vmatpush1.bf16.msra.mxu0 %v1681
        %3349 = vmatprep.subr.bf16.mxu0 %v1690
        %3350 = vmatpush1.bf16.msra.mxu0 %v1689
        %3351 = vmatprep.subr.bf16.mxu0 %v1698
        %3352 = vmatpush1.bf16.msra.mxu0 %v1697
        %3353 = vmatprep.subr.bf16.mxu0 %v1706
        %3354 = vmatpush1.bf16.msra.mxu0 %v1705
        %3355 = vmatprep.subr.bf16.mxu0 %v1714
        %3356 = vmatpush1.bf16.msra.mxu0 %v1713
        %3357 = vmatprep.subr.bf16.mxu0 %v1722
        %3358 = vmatpush1.bf16.msra.mxu0 %v1721
        %3359 = vmatprep.subr.bf16.mxu0 %v1730
        %3360 = vmatpush1.bf16.msra.mxu0 %v1729
        %3361 = vmatprep.subr.bf16.mxu0 %v1738
        %3362 = vmatpush1.bf16.msra.mxu0 %v1737
        %3363 = vmatprep.subr.bf16.mxu0 %v1746
        %3364 = vmatpush1.bf16.msra.mxu0 %v1745
        %3365 = vmatprep.subr.bf16.mxu0 %v1754
        %3366 = vmatpush1.bf16.msra.mxu0 %v1753
        %3367 = vmatprep.mubr.bf16.mxu0 %v3334
        %3368 = vmatmul.mubr.bf16.gmra.mrb[0].mxu0 %v3333
        %v3369 = vpop.f32.mrb[0].mxu0
        %v3370 = vadd.f32 0.0, %v3369
        %v3371 = vpop.f32.mrb[0].mxu0
        %v3372 = vadd.f32 0.0, %v3371
        %v3373 = vpop.f32.mrb[0].mxu0
        %v3374 = vpop.f32.mrb[0].mxu0
        %3375 = vdwg.mxu0
        %3376 = vmatprep.subr.bf16.mxu0 %v1636
        %3377 = vmatpush1.bf16.msra.mxu0 %v1635
        %3378 = vmatprep.subr.bf16.mxu0 %v1644
        %3379 = vmatpush1.bf16.msra.mxu0 %v1643
        %3380 = vmatprep.subr.bf16.mxu0 %v1652
        %3381 = vmatpush1.bf16.msra.mxu0 %v1651
        %3382 = vmatprep.subr.bf16.mxu0 %v1660
        %3383 = vmatpush1.bf16.msra.mxu0 %v1659
        %3384 = vmatprep.subr.bf16.mxu0 %v1668
        %3385 = vmatpush1.bf16.msra.mxu0 %v1667
        %3386 = vmatprep.subr.bf16.mxu0 %v1676
        %3387 = vmatpush1.bf16.msra.mxu0 %v1675
        %3388 = vmatprep.subr.bf16.mxu0 %v1684
        %3389 = vmatpush1.bf16.msra.mxu0 %v1683
        %3390 = vmatprep.subr.bf16.mxu0 %v1692
        %3391 = vmatpush1.bf16.msra.mxu0 %v1691
        %3392 = vmatprep.subr.bf16.mxu0 %v1700
        %3393 = vmatpush1.bf16.msra.mxu0 %v1699
        %3394 = vmatprep.subr.bf16.mxu0 %v1708
        %3395 = vmatpush1.bf16.msra.mxu0 %v1707
        %3396 = vmatprep.subr.bf16.mxu0 %v1716
        %3397 = vmatpush1.bf16.msra.mxu0 %v1715
        %3398 = vmatprep.subr.bf16.mxu0 %v1724
        %3399 = vmatpush1.bf16.msra.mxu0 %v1723
        %3400 = vmatprep.subr.bf16.mxu0 %v1732
        %3401 = vmatpush1.bf16.msra.mxu0 %v1731
        %3402 = vmatprep.subr.bf16.mxu0 %v1740
        %3403 = vmatpush1.bf16.msra.mxu0 %v1739
        %3404 = vmatprep.subr.bf16.mxu0 %v1748
        %3405 = vmatpush1.bf16.msra.mxu0 %v1747
        %3406 = vmatprep.subr.bf16.mxu0 %v1756
        %3407 = vmatpush1.bf16.msra.mxu0 %v1755
        %3408 = vmatprep.mubr.bf16.mxu0 %v3334
        %3409 = vmatmul.mubr.bf16.gmra.mrb[0].mxu0 %v3333
        %v3410 = vpop.f32.mrb[0].mxu0
        %v3411 = vadd.f32 0.0, %v3410
        %v3412 = vpop.f32.mrb[0].mxu0
        %v3413 = vadd.f32 0.0, %v3412
        %v3414 = vpop.f32.mrb[0].mxu0
        %v3415 = vpop.f32.mrb[0].mxu0
        %3416 = vdwg.mxu0
        %3417 = vmatprep.subr.bf16.mxu0 %v1638
        %3418 = vmatpush1.bf16.msra.mxu0 %v1637
        %3419 = vmatprep.subr.bf16.mxu0 %v1646
        %3420 = vmatpush1.bf16.msra.mxu0 %v1645
        %3421 = vmatprep.subr.bf16.mxu0 %v1654
        %3422 = vmatpush1.bf16.msra.mxu0 %v1653
        %3423 = vmatprep.subr.bf16.mxu0 %v1662
        %3424 = vmatpush1.bf16.msra.mxu0 %v1661
        %3425 = vmatprep.subr.bf16.mxu0 %v1670
        %3426 = vmatpush1.bf16.msra.mxu0 %v1669
        %3427 = vmatprep.subr.bf16.mxu0 %v1678
        %3428 = vmatpush1.bf16.msra.mxu0 %v1677
        %3429 = vmatprep.subr.bf16.mxu0 %v1686
        %3430 = vmatpush1.bf16.msra.mxu0 %v1685
        %3431 = vmatprep.subr.bf16.mxu0 %v1694
        %3432 = vmatpush1.bf16.msra.mxu0 %v1693
        %3433 = vmatprep.subr.bf16.mxu0 %v1702
        %3434 = vmatpush1.bf16.msra.mxu0 %v1701
        %3435 = vmatprep.subr.bf16.mxu0 %v1710
        %3436 = vmatpush1.bf16.msra.mxu0 %v1709
        %3437 = vmatprep.subr.bf16.mxu0 %v1718
        %3438 = vmatpush1.bf16.msra.mxu0 %v1717
        %3439 = vmatprep.subr.bf16.mxu0 %v1726
        %3440 = vmatpush1.bf16.msra.mxu0 %v1725
        %3441 = vmatprep.subr.bf16.mxu0 %v1734
        %3442 = vmatpush1.bf16.msra.mxu0 %v1733
        %3443 = vmatprep.subr.bf16.mxu0 %v1742
        %3444 = vmatpush1.bf16.msra.mxu0 %v1741
        %3445 = vmatprep.subr.bf16.mxu0 %v1750
        %3446 = vmatpush1.bf16.msra.mxu0 %v1749
        %3447 = vmatprep.subr.bf16.mxu0 %v1758
        %3448 = vmatpush1.bf16.msra.mxu0 %v1757
        %3449 = vmatprep.mubr.bf16.mxu0 %v3334
        %3450 = vmatmul.mubr.bf16.gmra.mrb[0].mxu0 %v3333
        %v3451 = vpop.f32.mrb[0].mxu0
        %v3452 = vadd.f32 0.0, %v3451
        %v3453 = vpop.f32.mrb[0].mxu0
        %v3454 = vadd.f32 0.0, %v3453
        %v3455 = vpop.f32.mrb[0].mxu0
        %v3456 = vpop.f32.mrb[0].mxu0
        %3457 = vdwg.mxu0
        %3458 = vmatprep.subr.bf16.mxu0 %v1640
        %3459 = vmatpush1.bf16.msra.mxu0 %v1639
        %3460 = vmatprep.subr.bf16.mxu0 %v1648
        %3461 = vmatpush1.bf16.msra.mxu0 %v1647
        %3462 = vmatprep.subr.bf16.mxu0 %v1656
        %3463 = vmatpush1.bf16.msra.mxu0 %v1655
        %3464 = vmatprep.subr.bf16.mxu0 %v1664
        %3465 = vmatpush1.bf16.msra.mxu0 %v1663
        %3466 = vmatprep.subr.bf16.mxu0 %v1672
        %3467 = vmatpush1.bf16.msra.mxu0 %v1671
        %3468 = vmatprep.subr.bf16.mxu0 %v1680
        %3469 = vmatpush1.bf16.msra.mxu0 %v1679
        %3470 = vmatprep.subr.bf16.mxu0 %v1688
        %3471 = vmatpush1.bf16.msra.mxu0 %v1687
        %3472 = vmatprep.subr.bf16.mxu0 %v1696
        %3473 = vmatpush1.bf16.msra.mxu0 %v1695
        %3474 = vmatprep.subr.bf16.mxu0 %v1704
        %3475 = vmatpush1.bf16.msra.mxu0 %v1703
        %3476 = vmatprep.subr.bf16.mxu0 %v1712
        %3477 = vmatpush1.bf16.msra.mxu0 %v1711
        %3478 = vmatprep.subr.bf16.mxu0 %v1720
        %3479 = vmatpush1.bf16.msra.mxu0 %v1719
        %3480 = vmatprep.subr.bf16.mxu0 %v1728
        %3481 = vmatpush1.bf16.msra.mxu0 %v1727
        %3482 = vmatprep.subr.bf16.mxu0 %v1736
        %3483 = vmatpush1.bf16.msra.mxu0 %v1735
        %3484 = vmatprep.subr.bf16.mxu0 %v1744
        %3485 = vmatpush1.bf16.msra.mxu0 %v1743
        %3486 = vmatprep.subr.bf16.mxu0 %v1752
        %3487 = vmatpush1.bf16.msra.mxu0 %v1751
        %3488 = vmatprep.subr.bf16.mxu0 %v1760
        %3489 = vmatpush1.bf16.msra.mxu0 %v1759
        %3490 = vmatprep.mubr.bf16.mxu0 %v3334
        %3491 = vmatmul.mubr.bf16.gmra.mrb[0].mxu0 %v3333
        %v3492 = vpop.f32.mrb[0].mxu0
        %v3493 = vadd.f32 0.0, %v3492
        %v3494 = vpop.f32.mrb[0].mxu0
        %v3495 = vadd.f32 0.0, %v3494
        %v3496 = vpop.f32.mrb[0].mxu0
        %v3497 = vpop.f32.mrb[0].mxu0
        %3498 = vdwg.mxu0
        %v3499 = vadd.f32 %v3325, %v3370
        %v3500 = vadd.f32 %v3326, %v3372
        %v3501 = vadd.f32 %v3327, %v3411
        %v3502 = vadd.f32 %v3328, %v3413
        %v3503 = vadd.f32 %v3329, %v3452
        %v3504 = vadd.f32 %v3330, %v3454
        %v3505 = vadd.f32 %v3331, %v3493
        %v3506 = vadd.f32 %v3332, %v3495
        %v3507 = vxor.u32 %v3499, 2147483648
        %v3508 = vxor.u32 %v3500, 2147483648
        %v3509 = vmul.f32 %v3507, 1.442695
        %v3510 = vpow.pop %v3509
        %v3511 = vmul.f32 %v3508, 1.442695
        %v3512 = vpow.pop %v3511
        %v3513 = vadd.f32 %v3510, 1.0
        %v3514 = vadd.f32 %v3512, 1.0
        %v3515 = vrcp.pop %v3513
        %v3516 = vmul.f32 1.0, %v3515
        %v3517 = vrcp.pop %v3514
        %v3518 = vmul.f32 1.0, %v3517
        %v3519 = vxor.u32 %v3501, 2147483648
        %v3520 = vxor.u32 %v3502, 2147483648
        %v3521 = vmul.f32 %v3519, 1.442695
        %v3522 = vpow.pop %v3521
        %v3523 = vmul.f32 %v3520, 1.442695
        %v3524 = vpow.pop %v3523
        %v3525 = vadd.f32 %v3522, 1.0
        %v3526 = vadd.f32 %v3524, 1.0
        %v3527 = vrcp.pop %v3525
        %v3528 = vmul.f32 1.0, %v3527
        %v3529 = vrcp.pop %v3526
        %v3530 = vmul.f32 1.0, %v3529
        %v3531 = vtanh.pop %v3503
        %v3532 = vtanh.pop %v3504
        %v3533 = vxor.u32 %v3505, 2147483648
        %v3534 = vxor.u32 %v3506, 2147483648
        %v3535 = vmul.f32 %v3533, 1.442695
        %v3536 = vpow.pop %v3535
        %v3537 = vmul.f32 %v3534, 1.442695
        %v3538 = vpow.pop %v3537
        %v3539 = vadd.f32 %v3536, 1.0
        %v3540 = vadd.f32 %v3538, 1.0
        %v3541 = vrcp.pop %v3539
        %v3542 = vmul.f32 1.0, %v3541
        %v3543 = vrcp.pop %v3540
        %v3544 = vmul.f32 1.0, %v3543
        %v3545 = vmul.f32 %v3528, %v3308
        %v3546 = vmul.f32 %v3530, %v3309
        %v3547 = vmul.f32 %v3516, %v3531
        %v3548 = vmul.f32 %v3518, %v3532
        %v3549 = vadd.f32 %v3545, %v3547
        %v3550 = vadd.f32 %v3546, %v3548
        %v3551 = vtanh.pop %v3549
        %v3552 = vtanh.pop %v3550
        %v3553 = vmul.f32 %v3542, %v3551
        %v3554 = vmul.f32 %v3544, %v3552
        %vm3555 = vcmp.eq.s32.totalorder %v1109, 6
        %v3556 = vsel %vm3555, 1, 0
        %3557 = vset.pattern.permute.xlu0 0
        %3558 = vperm.xlu0 %3557, %v3556
        %v3559 = vpop.permute.xlu0 %3558
        %vm3560 = vcmp.eq.s32.totalorder %v3559, 1
        %v3561 = vsel %vm3560, %v3553, %v3320
        %v3562 = vsel %vm3560, %v3554, %v3321
        %s3563 = smul.u32 7, 8
        %s3564 = smul.addr %s3563, 8
        %s3565 = scalar_lea.vmem [#allocation2], %s3564
        %v3566 = vld [vmem:[%s3565] sm:$0xff]
        %v3567 = vld [vmem:[%s3565 + $0x8] sm:$0xff]
        %v3568 = vld [vmem:[%s3565 + $0x10] sm:$0xff]
        %v3569 = vld [vmem:[%s3565 + $0x18] sm:$0xff]
        %v3570 = vld [vmem:[%s3565 + $0x20] sm:$0xff]
        %v3571 = vld [vmem:[%s3565 + $0x28] sm:$0xff]
        %v3572 = vld [vmem:[%s3565 + $0x30] sm:$0xff]
        %v3573 = vld [vmem:[%s3565 + $0x38] sm:$0xff]
        %v3574 = vpack.c.bf16 %v3553, %v3553
        %v3575 = vpack.c.bf16 %v3554, %v3554
        %3576 = vmatprep.subr.bf16.mxu0 %v1634
        %3577 = vmatpush1.bf16.msra.mxu0 %v1633
        %3578 = vmatprep.subr.bf16.mxu0 %v1642
        %3579 = vmatpush1.bf16.msra.mxu0 %v1641
        %3580 = vmatprep.subr.bf16.mxu0 %v1650
        %3581 = vmatpush1.bf16.msra.mxu0 %v1649
        %3582 = vmatprep.subr.bf16.mxu0 %v1658
        %3583 = vmatpush1.bf16.msra.mxu0 %v1657
        %3584 = vmatprep.subr.bf16.mxu0 %v1666
        %3585 = vmatpush1.bf16.msra.mxu0 %v1665
        %3586 = vmatprep.subr.bf16.mxu0 %v1674
        %3587 = vmatpush1.bf16.msra.mxu0 %v1673
        %3588 = vmatprep.subr.bf16.mxu0 %v1682
        %3589 = vmatpush1.bf16.msra.mxu0 %v1681
        %3590 = vmatprep.subr.bf16.mxu0 %v1690
        %3591 = vmatpush1.bf16.msra.mxu0 %v1689
        %3592 = vmatprep.subr.bf16.mxu0 %v1698
        %3593 = vmatpush1.bf16.msra.mxu0 %v1697
        %3594 = vmatprep.subr.bf16.mxu0 %v1706
        %3595 = vmatpush1.bf16.msra.mxu0 %v1705
        %3596 = vmatprep.subr.bf16.mxu0 %v1714
        %3597 = vmatpush1.bf16.msra.mxu0 %v1713
        %3598 = vmatprep.subr.bf16.mxu0 %v1722
        %3599 = vmatpush1.bf16.msra.mxu0 %v1721
        %3600 = vmatprep.subr.bf16.mxu0 %v1730
        %3601 = vmatpush1.bf16.msra.mxu0 %v1729
        %3602 = vmatprep.subr.bf16.mxu0 %v1738
        %3603 = vmatpush1.bf16.msra.mxu0 %v1737
        %3604 = vmatprep.subr.bf16.mxu0 %v1746
        %3605 = vmatpush1.bf16.msra.mxu0 %v1745
        %3606 = vmatprep.subr.bf16.mxu0 %v1754
        %3607 = vmatpush1.bf16.msra.mxu0 %v1753
        %3608 = vmatprep.mubr.bf16.mxu0 %v3575
        %3609 = vmatmul.mubr.bf16.gmra.mrb[0].mxu0 %v3574
        %v3610 = vpop.f32.mrb[0].mxu0
        %v3611 = vadd.f32 0.0, %v3610
        %v3612 = vpop.f32.mrb[0].mxu0
        %v3613 = vadd.f32 0.0, %v3612
        %v3614 = vpop.f32.mrb[0].mxu0
        %v3615 = vpop.f32.mrb[0].mxu0
        %3616 = vdwg.mxu0
        %3617 = vmatprep.subr.bf16.mxu0 %v1636
        %3618 = vmatpush1.bf16.msra.mxu0 %v1635
        %3619 = vmatprep.subr.bf16.mxu0 %v1644
        %3620 = vmatpush1.bf16.msra.mxu0 %v1643
        %3621 = vmatprep.subr.bf16.mxu0 %v1652
        %3622 = vmatpush1.bf16.msra.mxu0 %v1651
        %3623 = vmatprep.subr.bf16.mxu0 %v1660
        %3624 = vmatpush1.bf16.msra.mxu0 %v1659
        %3625 = vmatprep.subr.bf16.mxu0 %v1668
        %3626 = vmatpush1.bf16.msra.mxu0 %v1667
        %3627 = vmatprep.subr.bf16.mxu0 %v1676
        %3628 = vmatpush1.bf16.msra.mxu0 %v1675
        %3629 = vmatprep.subr.bf16.mxu0 %v1684
        %3630 = vmatpush1.bf16.msra.mxu0 %v1683
        %3631 = vmatprep.subr.bf16.mxu0 %v1692
        %3632 = vmatpush1.bf16.msra.mxu0 %v1691
        %3633 = vmatprep.subr.bf16.mxu0 %v1700
        %3634 = vmatpush1.bf16.msra.mxu0 %v1699
        %3635 = vmatprep.subr.bf16.mxu0 %v1708
        %3636 = vmatpush1.bf16.msra.mxu0 %v1707
        %3637 = vmatprep.subr.bf16.mxu0 %v1716
        %3638 = vmatpush1.bf16.msra.mxu0 %v1715
        %3639 = vmatprep.subr.bf16.mxu0 %v1724
        %3640 = vmatpush1.bf16.msra.mxu0 %v1723
        %3641 = vmatprep.subr.bf16.mxu0 %v1732
        %3642 = vmatpush1.bf16.msra.mxu0 %v1731
        %3643 = vmatprep.subr.bf16.mxu0 %v1740
        %3644 = vmatpush1.bf16.msra.mxu0 %v1739
        %3645 = vmatprep.subr.bf16.mxu0 %v1748
        %3646 = vmatpush1.bf16.msra.mxu0 %v1747
        %3647 = vmatprep.subr.bf16.mxu0 %v1756
        %3648 = vmatpush1.bf16.msra.mxu0 %v1755
        %3649 = vmatprep.mubr.bf16.mxu0 %v3575
        %3650 = vmatmul.mubr.bf16.gmra.mrb[0].mxu0 %v3574
        %v3651 = vpop.f32.mrb[0].mxu0
        %v3652 = vadd.f32 0.0, %v3651
        %v3653 = vpop.f32.mrb[0].mxu0
        %v3654 = vadd.f32 0.0, %v3653
        %v3655 = vpop.f32.mrb[0].mxu0
        %v3656 = vpop.f32.mrb[0].mxu0
        %3657 = vdwg.mxu0
        %3658 = vmatprep.subr.bf16.mxu0 %v1638
        %3659 = vmatpush1.bf16.msra.mxu0 %v1637
        %3660 = vmatprep.subr.bf16.mxu0 %v1646
        %3661 = vmatpush1.bf16.msra.mxu0 %v1645
        %3662 = vmatprep.subr.bf16.mxu0 %v1654
        %3663 = vmatpush1.bf16.msra.mxu0 %v1653
        %3664 = vmatprep.subr.bf16.mxu0 %v1662
        %3665 = vmatpush1.bf16.msra.mxu0 %v1661
        %3666 = vmatprep.subr.bf16.mxu0 %v1670
        %3667 = vmatpush1.bf16.msra.mxu0 %v1669
        %3668 = vmatprep.subr.bf16.mxu0 %v1678
        %3669 = vmatpush1.bf16.msra.mxu0 %v1677
        %3670 = vmatprep.subr.bf16.mxu0 %v1686
        %3671 = vmatpush1.bf16.msra.mxu0 %v1685
        %3672 = vmatprep.subr.bf16.mxu0 %v1694
        %3673 = vmatpush1.bf16.msra.mxu0 %v1693
        %3674 = vmatprep.subr.bf16.mxu0 %v1702
        %3675 = vmatpush1.bf16.msra.mxu0 %v1701
        %3676 = vmatprep.subr.bf16.mxu0 %v1710
        %3677 = vmatpush1.bf16.msra.mxu0 %v1709
        %3678 = vmatprep.subr.bf16.mxu0 %v1718
        %3679 = vmatpush1.bf16.msra.mxu0 %v1717
        %3680 = vmatprep.subr.bf16.mxu0 %v1726
        %3681 = vmatpush1.bf16.msra.mxu0 %v1725
        %3682 = vmatprep.subr.bf16.mxu0 %v1734
        %3683 = vmatpush1.bf16.msra.mxu0 %v1733
        %3684 = vmatprep.subr.bf16.mxu0 %v1742
        %3685 = vmatpush1.bf16.msra.mxu0 %v1741
        %3686 = vmatprep.subr.bf16.mxu0 %v1750
        %3687 = vmatpush1.bf16.msra.mxu0 %v1749
        %3688 = vmatprep.subr.bf16.mxu0 %v1758
        %3689 = vmatpush1.bf16.msra.mxu0 %v1757
        %3690 = vmatprep.mubr.bf16.mxu0 %v3575
        %3691 = vmatmul.mubr.bf16.gmra.mrb[0].mxu0 %v3574
        %v3692 = vpop.f32.mrb[0].mxu0
        %v3693 = vadd.f32 0.0, %v3692
        %v3694 = vpop.f32.mrb[0].mxu0
        %v3695 = vadd.f32 0.0, %v3694
        %v3696 = vpop.f32.mrb[0].mxu0
        %v3697 = vpop.f32.mrb[0].mxu0
        %3698 = vdwg.mxu0
        %3699 = vmatprep.subr.bf16.mxu0 %v1640
        %3700 = vmatpush1.bf16.msra.mxu0 %v1639
        %3701 = vmatprep.subr.bf16.mxu0 %v1648
        %3702 = vmatpush1.bf16.msra.mxu0 %v1647
        %3703 = vmatprep.subr.bf16.mxu0 %v1656
        %3704 = vmatpush1.bf16.msra.mxu0 %v1655
        %3705 = vmatprep.subr.bf16.mxu0 %v1664
        %3706 = vmatpush1.bf16.msra.mxu0 %v1663
        %3707 = vmatprep.subr.bf16.mxu0 %v1672
        %3708 = vmatpush1.bf16.msra.mxu0 %v1671
        %3709 = vmatprep.subr.bf16.mxu0 %v1680
        %3710 = vmatpush1.bf16.msra.mxu0 %v1679
        %3711 = vmatprep.subr.bf16.mxu0 %v1688
        %3712 = vmatpush1.bf16.msra.mxu0 %v1687
        %3713 = vmatprep.subr.bf16.mxu0 %v1696
        %3714 = vmatpush1.bf16.msra.mxu0 %v1695
        %3715 = vmatprep.subr.bf16.mxu0 %v1704
        %3716 = vmatpush1.bf16.msra.mxu0 %v1703
        %3717 = vmatprep.subr.bf16.mxu0 %v1712
        %3718 = vmatpush1.bf16.msra.mxu0 %v1711
        %3719 = vmatprep.subr.bf16.mxu0 %v1720
        %3720 = vmatpush1.bf16.msra.mxu0 %v1719
        %3721 = vmatprep.subr.bf16.mxu0 %v1728
        %3722 = vmatpush1.bf16.msra.mxu0 %v1727
        %3723 = vmatprep.subr.bf16.mxu0 %v1736
        %3724 = vmatpush1.bf16.msra.mxu0 %v1735
        %3725 = vmatprep.subr.bf16.mxu0 %v1744
        %3726 = vmatpush1.bf16.msra.mxu0 %v1743
        %3727 = vmatprep.subr.bf16.mxu0 %v1752
        %3728 = vmatpush1.bf16.msra.mxu0 %v1751
        %3729 = vmatprep.subr.bf16.mxu0 %v1760
        %3730 = vmatpush1.bf16.msra.mxu0 %v1759
        %3731 = vmatprep.mubr.bf16.mxu0 %v3575
        %3732 = vmatmul.mubr.bf16.gmra.mrb[0].mxu0 %v3574
        %v3733 = vpop.f32.mrb[0].mxu0
        %v3734 = vadd.f32 0.0, %v3733
        %v3735 = vpop.f32.mrb[0].mxu0
        %v3736 = vadd.f32 0.0, %v3735
        %v3737 = vpop.f32.mrb[0].mxu0
        %v3738 = vpop.f32.mrb[0].mxu0
        %3739 = vdwg.mxu0
        %v3740 = vadd.f32 %v3566, %v3611
        %v3741 = vadd.f32 %v3567, %v3613
        %v3742 = vadd.f32 %v3568, %v3652
        %v3743 = vadd.f32 %v3569, %v3654
        %v3744 = vadd.f32 %v3570, %v3693
        %v3745 = vadd.f32 %v3571, %v3695
        %v3746 = vadd.f32 %v3572, %v3734
        %v3747 = vadd.f32 %v3573, %v3736
        %v3748 = vxor.u32 %v3740, 2147483648
        %v3749 = vxor.u32 %v3741, 2147483648
        %v3750 = vmul.f32 %v3748, 1.442695
        %v3751 = vpow.pop %v3750
        %v3752 = vmul.f32 %v3749, 1.442695
        %v3753 = vpow.pop %v3752
        %v3754 = vadd.f32 %v3751, 1.0
        %v3755 = vadd.f32 %v3753, 1.0
        %v3756 = vrcp.pop %v3754
        %v3757 = vmul.f32 1.0, %v3756
        %v3758 = vrcp.pop %v3755
        %v3759 = vmul.f32 1.0, %v3758
        %v3760 = vxor.u32 %v3742, 2147483648
        %v3761 = vxor.u32 %v3743, 2147483648
        %v3762 = vmul.f32 %v3760, 1.442695
        %v3763 = vpow.pop %v3762
        %v3764 = vmul.f32 %v3761, 1.442695
        %v3765 = vpow.pop %v3764
        %v3766 = vadd.f32 %v3763, 1.0
        %v3767 = vadd.f32 %v3765, 1.0
        %v3768 = vrcp.pop %v3766
        %v3769 = vmul.f32 1.0, %v3768
        %v3770 = vrcp.pop %v3767
        %v3771 = vmul.f32 1.0, %v3770
        %v3772 = vtanh.pop %v3744
        %v3773 = vtanh.pop %v3745
        %v3774 = vxor.u32 %v3746, 2147483648
        %v3775 = vxor.u32 %v3747, 2147483648
        %v3776 = vmul.f32 %v3774, 1.442695
        %v3777 = vpow.pop %v3776
        %v3778 = vmul.f32 %v3775, 1.442695
        %v3779 = vpow.pop %v3778
        %v3780 = vadd.f32 %v3777, 1.0
        %v3781 = vadd.f32 %v3779, 1.0
        %v3782 = vrcp.pop %v3780
        %v3783 = vmul.f32 1.0, %v3782
        %v3784 = vrcp.pop %v3781
        %v3785 = vmul.f32 1.0, %v3784
        %v3786 = vmul.f32 %v3769, %v3549
        %v3787 = vmul.f32 %v3771, %v3550
        %v3788 = vmul.f32 %v3757, %v3772
        %v3789 = vmul.f32 %v3759, %v3773
        %v3790 = vadd.f32 %v3786, %v3788
        %v3791 = vadd.f32 %v3787, %v3789
        %v3792 = vtanh.pop %v3790
        %v3793 = vtanh.pop %v3791
        %v3794 = vmul.f32 %v3783, %v3792
        %v3795 = vmul.f32 %v3785, %v3793
        %vm3796 = vcmp.eq.s32.totalorder %v1109, 7
        %v3797 = vsel %vm3796, 1, 0
        %3798 = vset.pattern.permute.xlu0 0
        %3799 = vperm.xlu0 %3798, %v3797
        %v3800 = vpop.permute.xlu0 %3799
        %vm3801 = vcmp.eq.s32.totalorder %v3800, 1
        %v3802 = vsel %vm3801, %v3794, %v3561
        %v3803 = vsel %vm3801, %v3795, %v3562
        %v3804 = vpack.c.bf16 %v3802, %v3802
        %v3805 = vpack.c.bf16 %v3803, %v3803
        %v3806 = vld [vmem:[%s5] sm:$0xff]
        %v3807 = vld [vmem:[%s5 + $0x8] sm:$0xff]
        %v3808 = vld [vmem:[%s5 + $0x10] sm:$0xff]
        %v3809 = vld [vmem:[%s5 + $0x18] sm:$0xff]
        %v3810 = vld [vmem:[%s5 + $0x20] sm:$0xff]
        %v3811 = vld [vmem:[%s5 + $0x28] sm:$0xff]
        %v3812 = vld [vmem:[%s5 + $0x30] sm:$0xff]
        %v3813 = vld [vmem:[%s5 + $0x38] sm:$0xff]
        %v3814 = vld [vmem:[%s5 + $0x40] sm:$0xff]
        %v3815 = vld [vmem:[%s5 + $0x48] sm:$0xff]
        %v3816 = vld [vmem:[%s5 + $0x50] sm:$0xff]
        %v3817 = vld [vmem:[%s5 + $0x58] sm:$0xff]
        %v3818 = vld [vmem:[%s5 + $0x60] sm:$0xff]
        %v3819 = vld [vmem:[%s5 + $0x68] sm:$0xff]
        %v3820 = vld [vmem:[%s5 + $0x70] sm:$0xff]
        %v3821 = vld [vmem:[%s5 + $0x78] sm:$0xff]
        %v3822 = vld [vmem:[%s5 + $0x80] sm:$0xff]
        %v3823 = vld [vmem:[%s5 + $0x88] sm:$0xff]
        %v3824 = vld [vmem:[%s5 + $0x90] sm:$0xff]
        %v3825 = vld [vmem:[%s5 + $0x98] sm:$0xff]
        %v3826 = vld [vmem:[%s5 + $0xa0] sm:$0xff]
        %v3827 = vld [vmem:[%s5 + $0xa8] sm:$0xff]
        %v3828 = vld [vmem:[%s5 + $0xb0] sm:$0xff]
        %v3829 = vld [vmem:[%s5 + $0xb8] sm:$0xff]
        %v3830 = vld [vmem:[%s5 + $0xc0] sm:$0xff]
        %v3831 = vld [vmem:[%s5 + $0xc8] sm:$0xff]
        %v3832 = vld [vmem:[%s5 + $0xd0] sm:$0xff]
        %v3833 = vld [vmem:[%s5 + $0xd8] sm:$0xff]
        %v3834 = vld [vmem:[%s5 + $0xe0] sm:$0xff]
        %v3835 = vld [vmem:[%s5 + $0xe8] sm:$0xff]
        %v3836 = vld [vmem:[%s5 + $0xf0] sm:$0xff]
        %v3837 = vld [vmem:[%s5 + $0xf8] sm:$0xff]
        %v3838 = vld [vmem:[%s6] sm:$0x3]
        %v3840 = vlaneseq
        %v3841 = vshrl.u32 %v3840, 7
        %v3842 = vsub.s32 0, %v3841
        %v3843 = vrot.slane %v3838, %v3842
        %v3844 = vlaneseq
        %v3845 = vshrl.u32 %v3844, 7
        %v3846 = vsub.s32 1, %v3845
        %v3847 = vrot.slane %v3838, %v3846
        %v3882 = vunpack.c.l.b16 %v3806
        %v3883 = vunpack.c.h.b16 %v3806
        %v3884 = vunpack.c.l.b16 %v3807
        %v3885 = vunpack.c.h.b16 %v3807
        %v3886 = vunpack.c.l.b16 %v3808
        %v3887 = vunpack.c.h.b16 %v3808
        %v3888 = vunpack.c.l.b16 %v3809
        %v3889 = vunpack.c.h.b16 %v3809
        %v3890 = vunpack.c.l.b16 %v3810
        %v3891 = vunpack.c.h.b16 %v3810
        %v3892 = vunpack.c.l.b16 %v3811
        %v3893 = vunpack.c.h.b16 %v3811
        %v3894 = vunpack.c.l.b16 %v3812
        %v3895 = vunpack.c.h.b16 %v3812
        %v3896 = vunpack.c.l.b16 %v3813
        %v3897 = vunpack.c.h.b16 %v3813
        %v3898 = vunpack.c.l.b16 %v3814
        %v3899 = vunpack.c.h.b16 %v3814
        %v3900 = vunpack.c.l.b16 %v3815
        %v3901 = vunpack.c.h.b16 %v3815
        %v3902 = vunpack.c.l.b16 %v3816
        %v3903 = vunpack.c.h.b16 %v3816
        %v3904 = vunpack.c.l.b16 %v3817
        %v3905 = vunpack.c.h.b16 %v3817
        %v3906 = vunpack.c.l.b16 %v3818
        %v3907 = vunpack.c.h.b16 %v3818
        %v3908 = vunpack.c.l.b16 %v3819
        %v3909 = vunpack.c.h.b16 %v3819
        %v3910 = vunpack.c.l.b16 %v3820
        %v3911 = vunpack.c.h.b16 %v3820
        %v3912 = vunpack.c.l.b16 %v3821
        %v3913 = vunpack.c.h.b16 %v3821
        %v3914 = vunpack.c.l.b16 %v3822
        %v3915 = vunpack.c.h.b16 %v3822
        %v3916 = vunpack.c.l.b16 %v3823
        %v3917 = vunpack.c.h.b16 %v3823
        %v3918 = vunpack.c.l.b16 %v3824
        %v3919 = vunpack.c.h.b16 %v3824
        %v3920 = vunpack.c.l.b16 %v3825
        %v3921 = vunpack.c.h.b16 %v3825
        %v3922 = vunpack.c.l.b16 %v3826
        %v3923 = vunpack.c.h.b16 %v3826
        %v3924 = vunpack.c.l.b16 %v3827
        %v3925 = vunpack.c.h.b16 %v3827
        %v3926 = vunpack.c.l.b16 %v3828
        %v3927 = vunpack.c.h.b16 %v3828
        %v3928 = vunpack.c.l.b16 %v3829
        %v3929 = vunpack.c.h.b16 %v3829
        %v3930 = vunpack.c.l.b16 %v3830
        %v3931 = vunpack.c.h.b16 %v3830
        %v3932 = vunpack.c.l.b16 %v3831
        %v3933 = vunpack.c.h.b16 %v3831
        %v3934 = vunpack.c.l.b16 %v3832
        %v3935 = vunpack.c.h.b16 %v3832
        %v3936 = vunpack.c.l.b16 %v3833
        %v3937 = vunpack.c.h.b16 %v3833
        %v3938 = vunpack.c.l.b16 %v3834
        %v3939 = vunpack.c.h.b16 %v3834
        %v3940 = vunpack.c.l.b16 %v3835
        %v3941 = vunpack.c.h.b16 %v3835
        %v3942 = vunpack.c.l.b16 %v3836
        %v3943 = vunpack.c.h.b16 %v3836
        %v3944 = vunpack.c.l.b16 %v3837
        %v3945 = vunpack.c.h.b16 %v3837
        %v3946 = vpack.c.b16 %v3884, %v3882
        %v3947 = vpack.c.b16 %v3885, %v3883
        %v3948 = vpack.c.b16 %v3888, %v3886
        %v3949 = vpack.c.b16 %v3889, %v3887
        %v3950 = vpack.c.b16 %v3892, %v3890
        %v3951 = vpack.c.b16 %v3893, %v3891
        %v3952 = vpack.c.b16 %v3896, %v3894
        %v3953 = vpack.c.b16 %v3897, %v3895
        %v3954 = vpack.c.b16 %v3900, %v3898
        %v3955 = vpack.c.b16 %v3901, %v3899
        %v3956 = vpack.c.b16 %v3904, %v3902
        %v3957 = vpack.c.b16 %v3905, %v3903
        %v3958 = vpack.c.b16 %v3908, %v3906
        %v3959 = vpack.c.b16 %v3909, %v3907
        %v3960 = vpack.c.b16 %v3912, %v3910
        %v3961 = vpack.c.b16 %v3913, %v3911
        %v3962 = vpack.c.b16 %v3916, %v3914
        %v3963 = vpack.c.b16 %v3917, %v3915
        %v3964 = vpack.c.b16 %v3920, %v3918
        %v3965 = vpack.c.b16 %v3921, %v3919
        %v3966 = vpack.c.b16 %v3924, %v3922
        %v3967 = vpack.c.b16 %v3925, %v3923
        %v3968 = vpack.c.b16 %v3928, %v3926
        %v3969 = vpack.c.b16 %v3929, %v3927
        %v3970 = vpack.c.b16 %v3932, %v3930
        %v3971 = vpack.c.b16 %v3933, %v3931
        %v3972 = vpack.c.b16 %v3936, %v3934
        %v3973 = vpack.c.b16 %v3937, %v3935
        %v3974 = vpack.c.b16 %v3940, %v3938
        %v3975 = vpack.c.b16 %v3941, %v3939
        %v3976 = vpack.c.b16 %v3944, %v3942
        %v3977 = vpack.c.b16 %v3945, %v3943
        %4010 = vmatprep.subr.bf16.mxu0 %v3947
        %4011 = vmatpush1.bf16.msra.mxu0 %v3946
        %4012 = vmatprep.subr.bf16.mxu0 %v3949
        %4013 = vmatpush1.bf16.msra.mxu0 %v3948
        %4014 = vmatprep.subr.bf16.mxu0 %v3951
        %4015 = vmatpush1.bf16.msra.mxu0 %v3950
        %4016 = vmatprep.subr.bf16.mxu0 %v3953
        %4017 = vmatpush1.bf16.msra.mxu0 %v3952
        %4018 = vmatprep.subr.bf16.mxu0 %v3955
        %4019 = vmatpush1.bf16.msra.mxu0 %v3954
        %4020 = vmatprep.subr.bf16.mxu0 %v3957
        %4021 = vmatpush1.bf16.msra.mxu0 %v3956
        %4022 = vmatprep.subr.bf16.mxu0 %v3959
        %4023 = vmatpush1.bf16.msra.mxu0 %v3958
        %4024 = vmatprep.subr.bf16.mxu0 %v3961
        %4025 = vmatpush1.bf16.msra.mxu0 %v3960
        %4026 = vmatprep.subr.bf16.mxu0 %v3963
        %4027 = vmatpush1.bf16.msra.mxu0 %v3962
        %4028 = vmatprep.subr.bf16.mxu0 %v3965
        %4029 = vmatpush1.bf16.msra.mxu0 %v3964
        %4030 = vmatprep.subr.bf16.mxu0 %v3967
        %4031 = vmatpush1.bf16.msra.mxu0 %v3966
        %4032 = vmatprep.subr.bf16.mxu0 %v3969
        %4033 = vmatpush1.bf16.msra.mxu0 %v3968
        %4034 = vmatprep.subr.bf16.mxu0 %v3971
        %4035 = vmatpush1.bf16.msra.mxu0 %v3970
        %4036 = vmatprep.subr.bf16.mxu0 %v3973
        %4037 = vmatpush1.bf16.msra.mxu0 %v3972
        %4038 = vmatprep.subr.bf16.mxu0 %v3975
        %4039 = vmatpush1.bf16.msra.mxu0 %v3974
        %4040 = vmatprep.subr.bf16.mxu0 %v3977
        %4041 = vmatpush1.bf16.msra.mxu0 %v3976
        %4042 = vmatprep.mubr.bf16.mxu0 %v3805
        %4043 = vmatmul.mubr.bf16.gmra.mrb[0].mxu0 %v3804
        %v4044 = vpop.f32.mrb[0].mxu0
        %v4045 = vadd.f32 %v3843, %v4044
        %v4046 = vpop.f32.mrb[0].mxu0
        %v4047 = vadd.f32 %v3847, %v4046
        %v4048 = vpop.f32.mrb[0].mxu0
        %v4049 = vpop.f32.mrb[0].mxu0
        %4050 = vdwg.mxu0
        %4051 = vst [vmem:[%s284] sm:$0xff] %v4045
        %4052 = vst [vmem:[%s284 + $0x8] sm:$0xff] %v4047
        %s4053 = sand.u32 %s186, 1
        %s4054 = scalar_lea.sflag [#allocation4], %s4053
        %s4055 = sand.u32 %s186, 1
        %s4056 = smul.addr %s4055, 16
        %s4057 = scalar_lea.vmem [#allocation3], %s4056
        // Predicated region
        $region49: #{lstm_predictor_forward.1} parent=47 // pred_check
          %p4058 = pneg %p196
        $region50: #{lstm_predictor_forward.1} parent=47 // pred_check_branch
          %4060 = sbr.rel (%p4058) target = $region52
        $region51: #{lstm_predictor_forward.1} parent=47 // pred_region
          %s4062 = ssub.s32 256, 256
          %4063 = vsyncadd %s4054, %s4062
          %s4064 = smul.addr %s21, 2
          %s4065 = smul.addr %s4064, 128
          %s4066 = scalar_lea.hbm %s7, %s4065
          %s4068 = sshll.u32 %s4057, 4
          %s4069 = int_to_ptr.vmem [resolvable:$true] %s4068
          %4071 = dma.vmem_to_hbm [thread:$0]  %s4069, 256, %s4066, %s4054
        $region52: #{lstm_predictor_forward.1} parent=47 // pred_fallthru
          _
      $region48: #{lstm_predictor_forward.1} parent=5 // pred_fallthru
        _
      %p4072 = scmp.le.s32.totalorder 2, %s16
      // Predicated region
      $region53: #{lstm_predictor_forward.1} parent=5 // pred_check
        %p4073 = pneg %p4072
      $region54: #{lstm_predictor_forward.1} parent=5 // pred_check_branch
        %4075 = sbr.rel (%p4073) target = $region56
      $region55: #{lstm_predictor_forward.1} parent=5 // pred_region
        %s4076 = ssub.s32 %s16, 2
        // Predicated region
        $region57: #{lstm_predictor_forward.1} parent=55 // pred_check
          %p4077 = pneg %p202
        $region58: #{lstm_predictor_forward.1} parent=55 // pred_check_branch
          %4079 = sbr.rel (%p4077) target = $region60
        $region59: #{lstm_predictor_forward.1} parent=55 // pred_region
          %s4080 = sand.u32 %s187, 1
          %s4081 = scalar_lea.sflag [#allocation4], %s4080
          %s4082 = sand.u32 %s187, 1
          %s4083 = smul.addr %s4082, 16
          %s4084 = scalar_lea.vmem [#allocation3], %s4083
          %4085 = dma.done %s4081, 256
        $region60: #{lstm_predictor_forward.1} parent=55 // pred_fallthru
          _
      $region56: #{lstm_predictor_forward.1} parent=5 // pred_fallthru
        _
    $region6: #{lstm_predictor_forward.1} parent=1 // loop_footer
      %s20 = sadd.s32 1, %s16
    $region7: #{lstm_predictor_forward.1} parent=1 // loop_footer_branch
      %15 = sbr.rel target = $region3
    $region8: #{lstm_predictor_forward.1} parent=1 // loop_exit
      _
    %4086 = vsyncpa [#allocation4], 1
    %s4087 = scalar_lea.sflag [#allocation4], 1
    %4088 = vsyncpa %s4087, 1

</llo_original>
